<compile_context>
chip_gen: v6e
topology: v6e:2x2x1
jax: 0.10.0
libtpu: 0.0.40
codegen_flags: <defaults>
</compile_context>

<pallas_src>
import functools
import math

import jax
import jax.numpy as jnp
from jax.experimental import pallas as pl
from jax.experimental.pallas import tpu as pltpu


# ------------------------------ tiling helpers ----------------------------------

def _row_tile(m, cap=256):
    """Largest row tile <= cap that divides m and is 8-aligned; else the whole slab."""
    if m <= cap:
        return m
    for t in range(cap, 7, -8):
        if m % t == 0:
            return t
    return m


# ------------------------------ Pallas kernels -----------------------------------

def _linear_kernel(x_ref, w_ref, b_ref, o_ref, *, activation):
    acc = jnp.dot(x_ref[...], w_ref[...], preferred_element_type=jnp.float32)
    acc = acc + b_ref[...].astype(jnp.float32)
    if activation == "relu":
        acc = jnp.maximum(acc, 0.0)
    o_ref[...] = acc.astype(o_ref.dtype)


def linear(x2d, w, b, activation=None, tn_cap=512):
    """y = x2d @ w + b ; tiles rows (and N when large & 512-divisible, e.g. vocab proj)."""
    M, K = x2d.shape
    N = w.shape[1]
    tm = _row_tile(M)
    tn = tn_cap if (N > tn_cap and N % tn_cap == 0) else N
    return pl.pallas_call(
        functools.partial(_linear_kernel, activation=activation),
        out_shape=jax.ShapeDtypeStruct((M, N), x2d.dtype),
        grid=(M // tm, N // tn),
        in_specs=[
            pl.BlockSpec((tm, K), lambda i, j: (i, 0)),
            pl.BlockSpec((K, tn), lambda i, j: (0, j)),
            pl.BlockSpec((1, tn), lambda i, j: (0, j)),
        ],
        out_specs=pl.BlockSpec((tm, tn), lambda i, j: (i, j)),
        compiler_params=pltpu.CompilerParams(
            dimension_semantics=("parallel", "parallel")),
    )(x2d, w, b.reshape(1, N))


def _proj_split_kernel(x_ref, w_ref, b_ref, *o_refs):
    """One fused matmul (x @ [w_a|w_b|...] + b) split into multiple outputs."""
    acc = jnp.dot(x_ref[...], w_ref[...], preferred_element_type=jnp.float32)
    acc = acc + b_ref[...].astype(jnp.float32)
    n = acc.shape[-1] // len(o_refs)
    for idx, o in enumerate(o_refs):
        o[...] = acc[:, idx * n:(idx + 1) * n].astype(o.dtype)


def proj_split(x2d, w, b, num_out):
    """Fused projection: x2d @ w + b, returning `num_out` equal column splits."""
    M, K = x2d.shape
    N = w.shape[1]
    n = N // num_out
    tm = _row_tile(M)
    out_shapes = tuple(jax.ShapeDtypeStruct((M, n), x2d.dtype) for _ in range(num_out))
    out_specs = tuple(pl.BlockSpec((tm, n), lambda i: (i, 0)) for _ in range(num_out))
    return pl.pallas_call(
        _proj_split_kernel,
        out_shape=out_shapes,
        grid=(M // tm,),
        in_specs=[
            pl.BlockSpec((tm, K), lambda i: (i, 0)),
            pl.BlockSpec((K, N), lambda i: (0, 0)),
            pl.BlockSpec((1, N), lambda i: (0, 0)),
        ],
        out_specs=out_specs,
        compiler_params=pltpu.CompilerParams(dimension_semantics=("parallel",)),
    )(x2d, w, b.reshape(1, N))


def _ln_kernel(x_ref, g_ref, b_ref, o_ref, *, eps):
    x = x_ref[...].astype(jnp.float32)
    mu = jnp.mean(x, axis=-1, keepdims=True)
    var = jnp.mean(jnp.square(x - mu), axis=-1, keepdims=True)
    y = (x - mu) * jax.lax.rsqrt(var + eps)
    o_ref[...] = (y * g_ref[...].astype(jnp.float32)
                  + b_ref[...].astype(jnp.float32)).astype(o_ref.dtype)


def layernorm(x2d, gamma, beta, eps=1e-5):
    M, D = x2d.shape
    tm = _row_tile(M)
    return pl.pallas_call(
        functools.partial(_ln_kernel, eps=eps),
        out_shape=jax.ShapeDtypeStruct((M, D), x2d.dtype),
        grid=(M // tm,),
        in_specs=[
            pl.BlockSpec((tm, D), lambda i: (i, 0)),
            pl.BlockSpec((1, D), lambda i: (0, 0)),
            pl.BlockSpec((1, D), lambda i: (0, 0)),
        ],
        out_specs=pl.BlockSpec((tm, D), lambda i: (i, 0)),
        compiler_params=pltpu.CompilerParams(dimension_semantics=("parallel",)),
    )(x2d, gamma.reshape(1, D), beta.reshape(1, D))


def _linear_add_ln_kernel(x_ref, w_ref, b_ref, r_ref, g_ref, be_ref, o_ref, *, eps):
    y = jnp.dot(x_ref[...], w_ref[...], preferred_element_type=jnp.float32)
    y = y + b_ref[...].astype(jnp.float32) + r_ref[...].astype(jnp.float32)
    mu = jnp.mean(y, axis=-1, keepdims=True)
    var = jnp.mean(jnp.square(y - mu), axis=-1, keepdims=True)
    yn = (y - mu) * jax.lax.rsqrt(var + eps)
    o_ref[...] = (yn * g_ref[...].astype(jnp.float32)
                  + be_ref[...].astype(jnp.float32)).astype(o_ref.dtype)


def linear_add_ln(x2d, w, b, res2d, gamma, beta, eps=1e-5):
    """LayerNorm(residual + x2d @ w + b) -- fused out-projection epilogue."""
    M, K = x2d.shape
    N = w.shape[1]
    tm = _row_tile(M)
    return pl.pallas_call(
        functools.partial(_linear_add_ln_kernel, eps=eps),
        out_shape=jax.ShapeDtypeStruct((M, N), x2d.dtype),
        grid=(M // tm,),
        in_specs=[
            pl.BlockSpec((tm, K), lambda i: (i, 0)),
            pl.BlockSpec((K, N), lambda i: (0, 0)),
            pl.BlockSpec((1, N), lambda i: (0, 0)),
            pl.BlockSpec((tm, N), lambda i: (i, 0)),
            pl.BlockSpec((1, N), lambda i: (0, 0)),
            pl.BlockSpec((1, N), lambda i: (0, 0)),
        ],
        out_specs=pl.BlockSpec((tm, N), lambda i: (i, 0)),
        compiler_params=pltpu.CompilerParams(dimension_semantics=("parallel",)),
    )(x2d, w, b.reshape(1, N), res2d, gamma.reshape(1, N), beta.reshape(1, N))


def _ffn_ln_kernel(x_ref, w1_ref, b1_ref, w2_ref, b2_ref, g_ref, be_ref, o_ref, *, eps):
    x = x_ref[...].astype(jnp.float32)
    h = jnp.dot(x, w1_ref[...].astype(jnp.float32), preferred_element_type=jnp.float32)
    h = jnp.maximum(h + b1_ref[...].astype(jnp.float32), 0.0)
    y = jnp.dot(h, w2_ref[...].astype(jnp.float32), preferred_element_type=jnp.float32)
    y = y + b2_ref[...].astype(jnp.float32) + x      # residual
    mu = jnp.mean(y, axis=-1, keepdims=True)
    var = jnp.mean(jnp.square(y - mu), axis=-1, keepdims=True)
    yn = (y - mu) * jax.lax.rsqrt(var + eps)
    o_ref[...] = (yn * g_ref[...].astype(jnp.float32)
                  + be_ref[...].astype(jnp.float32)).astype(o_ref.dtype)


def ffn_ln(x2d, w1, b1, w2, b2, gamma, beta, eps=1e-5):
    """LayerNorm(x + relu(x @ w1 + b1) @ w2 + b2) -- whole FFN sublayer in one kernel."""
    M, E = x2d.shape
    F = w1.shape[1]
    tm = _row_tile(M)
    return pl.pallas_call(
        functools.partial(_ffn_ln_kernel, eps=eps),
        out_shape=jax.ShapeDtypeStruct((M, E), x2d.dtype),
        grid=(M // tm,),
        in_specs=[
            pl.BlockSpec((tm, E), lambda i: (i, 0)),
            pl.BlockSpec((E, F), lambda i: (0, 0)),
            pl.BlockSpec((1, F), lambda i: (0, 0)),
            pl.BlockSpec((F, E), lambda i: (0, 0)),
            pl.BlockSpec((1, E), lambda i: (0, 0)),
            pl.BlockSpec((1, E), lambda i: (0, 0)),
            pl.BlockSpec((1, E), lambda i: (0, 0)),
        ],
        out_specs=pl.BlockSpec((tm, E), lambda i: (i, 0)),
        compiler_params=pltpu.CompilerParams(dimension_semantics=("parallel",)),
    )(x2d, w1, b1.reshape(1, F), w2, b2.reshape(1, E),
      gamma.reshape(1, E), beta.reshape(1, E))


def _attn_kernel(q_ref, k_ref, v_ref, o_ref, *, num_heads, scale):
    q = q_ref[0].astype(jnp.float32)          # (Sq, E)
    k = k_ref[0].astype(jnp.float32)          # (Sk, E)
    v = v_ref[0].astype(jnp.float32)          # (Sk, E)
    E = q.shape[-1]
    dh = E // num_heads
    outs = []
    for h in range(num_heads):                # static loop over heads, all in one grid step
        qh = q[:, h * dh:(h + 1) * dh]
        kh = k[:, h * dh:(h + 1) * dh]
        vh = v[:, h * dh:(h + 1) * dh]
        s = jax.lax.dot_general(qh, kh, (((1,), (1,)), ((), ())),
                                preferred_element_type=jnp.float32) * scale
        s = s - jnp.max(s, axis=-1, keepdims=True)
        p = jnp.exp(s)
        p = p * pl.reciprocal(jnp.sum(p, axis=-1, keepdims=True), approx=True)
        outs.append(jnp.dot(p, vh, preferred_element_type=jnp.float32))
    o_ref[0] = jnp.concatenate(outs, axis=-1).astype(o_ref.dtype)


def attention(q, k, v, num_heads):
    """q: (B, Sq, E), k/v: (B, Sk, E) -> (B, Sq, E); all heads of one batch per grid step."""
    B, Sq, E = q.shape
    Sk = k.shape[1]
    scale = 1.0 / math.sqrt(E // num_heads)
    return pl.pallas_call(
        functools.partial(_attn_kernel, num_heads=num_heads, scale=scale),
        out_shape=jax.ShapeDtypeStruct((B, Sq, E), q.dtype),
        grid=(B,),
        in_specs=[
            pl.BlockSpec((1, Sq, E), lambda b: (b, 0, 0)),
            pl.BlockSpec((1, Sk, E), lambda b: (b, 0, 0)),
            pl.BlockSpec((1, Sk, E), lambda b: (b, 0, 0)),
        ],
        out_specs=pl.BlockSpec((1, Sq, E), lambda b: (b, 0, 0)),
        compiler_params=pltpu.CompilerParams(dimension_semantics=("parallel",)),
    )(q, k, v)


# ------------------------------ model building blocks -----------------------------

def encoder_layer(x, p, num_heads):
    B, S, E = x.shape
    x2 = x.reshape(B * S, E)
    sa = p["self_attn"]
    q, k, v = proj_split(x2, sa["wqkv"], sa["bqkv"], 3)              # fused QKV matmul
    attn = attention(q.reshape(B, S, E), k.reshape(B, S, E), v.reshape(B, S, E), num_heads)
    x2 = linear_add_ln(attn.reshape(B * S, E), sa["wo"], sa["bo"],
                       x2, p["norm1_g"], p["norm1_b"])
    x2 = ffn_ln(x2, p["w1"], p["b1"], p["w2"], p["b2"], p["norm2_g"], p["norm2_b"])
    return x2.reshape(B, S, E)


def decoder_layer(y, memory, p, num_heads):
    B, St, E = y.shape
    Ss = memory.shape[1]
    y2 = y.reshape(B * St, E)
    mem2 = memory.reshape(B * Ss, E)

    # self-attention sublayer
    sa = p["self_attn"]
    q, k, v = proj_split(y2, sa["wqkv"], sa["bqkv"], 3)
    attn = attention(q.reshape(B, St, E), k.reshape(B, St, E), v.reshape(B, St, E), num_heads)
    y2 = linear_add_ln(attn.reshape(B * St, E), sa["wo"], sa["bo"],
                       y2, p["norm1_g"], p["norm1_b"])

    # cross-attention sublayer
    ca = p["cross_attn"]
    qc = linear(y2, ca["wq"], ca["bq"]).reshape(B, St, E)
    kc, vc = proj_split(mem2, ca["wkv"], ca["bkv"], 2)               # fused KV matmul
    attn = attention(qc, kc.reshape(B, Ss, E), vc.reshape(B, Ss, E), num_heads)
    y2 = linear_add_ln(attn.reshape(B * St, E), ca["wo"], ca["bo"],
                       y2, p["norm2_g"], p["norm2_b"])

    # feed-forward sublayer
    y2 = ffn_ln(y2, p["w1"], p["b1"], p["w2"], p["b2"], p["norm3_g"], p["norm3_b"])
    return y2.reshape(B, St, E)


def sinusoidal_pe(max_len, d_model):
    pos = jnp.arange(max_len, dtype=jnp.float32)[:, None]
    div = jnp.exp(jnp.arange(0, d_model, 2, dtype=jnp.float32) *
                  (-math.log(10000.0) / d_model))
    pe = jnp.zeros((max_len, d_model), jnp.float32)
    pe = pe.at[:, 0::2].set(jnp.sin(pos * div))
    pe = pe.at[:, 1::2].set(jnp.cos(pos * div))
    return pe


def transformer_encoder_decoder(params, src, tgt, *, num_heads, vocab_size, hidden_size):
    """Forward pass (eval mode, no masks, dropout == identity)."""
    B, Ss = src.shape
    St = tgt.shape[1]
    E = hidden_size
    emb = params["embedding"]
    pe = params["pe"]

    # Embedding gather + positional encoding add (plain-JAX glue).
    src_x = jnp.take(emb, src, axis=0) + pe[:Ss][None, :, :]
    tgt_x = jnp.take(emb, tgt, axis=0) + pe[:St][None, :, :]

    # Encoder stack + final norm (nn.Transformer applies encoder_norm).
    mem = src_x
    for lp in params["enc_layers"]:
        mem = encoder_layer(mem, lp, num_heads)
    mem = layernorm(mem.reshape(B * Ss, E),
                    params["enc_norm_g"], params["enc_norm_b"]).reshape(B, Ss, E)

    # Decoder stack + final norm.
    y = tgt_x
    for lp in params["dec_layers"]:
        y = decoder_layer(y, mem, lp, num_heads)
    y2 = layernorm(y.reshape(B * St, E), params["dec_norm_g"], params["dec_norm_b"])

    # Final vocabulary projection (N-tiled when vocab is large).
    out = linear(y2, params["fc_w"], params["fc_b"])
    return out.reshape(B, St, vocab_size)


# ------------------------------ parameter init -------------------------------------

def init_params(key, *, vocab_size, hidden_size, num_heads, num_layers, ff_dim,
                max_seq_length, pad_idx=0):
    E, F = hidden_size, ff_dim
    keys = iter(jax.random.split(key, 4096))

    def nrm(shape, scale=0.02):
        return (scale * jax.random.normal(next(keys), shape)).astype(jnp.float32)

    def mha_self():
        return dict(wqkv=nrm((E, 3 * E)), bqkv=nrm((3 * E,)),
                    wo=nrm((E, E)), bo=nrm((E,)))

    def mha_cross():
        return dict(wq=nrm((E, E)), bq=nrm((E,)),
                    wkv=nrm((E, 2 * E)), bkv=nrm((2 * E,)),
                    wo=nrm((E, E)), bo=nrm((E,)))

    def enc_layer():
        return dict(self_attn=mha_self(),
                    w1=nrm((E, F)), b1=nrm((F,)), w2=nrm((F, E)), b2=nrm((E,)),
                    norm1_g=jnp.ones((E,), jnp.float32), norm1_b=jnp.zeros((E,), jnp.float32),
                    norm2_g=jnp.ones((E,), jnp.float32), norm2_b=jnp.zeros((E,), jnp.float32))

    def dec_layer():
        return dict(self_attn=mha_self(), cross_attn=mha_cross(),
                    w1=nrm((E, F)), b1=nrm((F,)), w2=nrm((F, E)), b2=nrm((E,)),
                    norm1_g=jnp.ones((E,), jnp.float32), norm1_b=jnp.zeros((E,), jnp.float32),
                    norm2_g=jnp.ones((E,), jnp.float32), norm2_b=jnp.zeros((E,), jnp.float32),
                    norm3_g=jnp.ones((E,), jnp.float32), norm3_b=jnp.zeros((E,), jnp.float32))

    embedding = nrm((vocab_size, E), scale=1.0)
    embedding = embedding.at[pad_idx].set(0.0)   # nn.Embedding padding_idx row

    return dict(
        embedding=embedding,
        pe=sinusoidal_pe(max_seq_length, E),
        enc_layers=[enc_layer() for _ in range(num_layers)],
        dec_layers=[dec_layer() for _ in range(num_layers)],
        enc_norm_g=jnp.ones((E,), jnp.float32), enc_norm_b=jnp.zeros((E,), jnp.float32),
        dec_norm_g=jnp.ones((E,), jnp.float32), dec_norm_b=jnp.zeros((E,), jnp.float32),
        fc_w=nrm((E, vocab_size)), fc_b=nrm((vocab_size,)),
    )


# ------------------------------ main ------------------------------------------------

if __name__ == "__main__":
    config = dict(vocab_size=50, hidden_size=32, num_heads=4, num_layers=2,
                  ff_dim=64, max_seq_length=16)
    B, S = 2, 8

    key = jax.random.PRNGKey(0)
    kp, ks, kt = jax.random.split(key, 3)
    params = init_params(kp, pad_idx=0, **config)

    src = jax.random.randint(ks, (B, S), 0, config["vocab_size"], dtype=jnp.int32)
    tgt = jax.random.randint(kt, (B, S), 0, config["vocab_size"], dtype=jnp.int32)

    fwd = jax.jit(functools.partial(
        transformer_encoder_decoder,
        num_heads=config["num_heads"],
        vocab_size=config["vocab_size"],
        hidden_size=config["hidden_size"],
    ))

    out = fwd(params, src, tgt)          # (B, S, vocab_size)
    jax.block_until_ready(out)
    assert out.shape == (B, S, config["vocab_size"])
    # TODO(synk): dropout layers are identity here (eval-mode semantics); training-mode
    # dropout would need pltpu.prng_* inside the kernels.
    print("KERNEL_OK")
</pallas_src>

<mosaic_0001>
module attributes {stable_mosaic.version = 11 : i64} {
  func.func @_proj_split_kernel(%arg0: i32, %arg1: memref<16x32xf32, #tpu.memory_space<vmem>>, %arg2: memref<32x96xf32, #tpu.memory_space<vmem>>, %arg3: memref<1x96xf32, #tpu.memory_space<vmem>>, %arg4: memref<16x32xf32, #tpu.memory_space<vmem>>, %arg5: memref<16x32xf32, #tpu.memory_space<vmem>>, %arg6: memref<16x32xf32, #tpu.memory_space<vmem>>) attributes {dimension_semantics = [#tpu.dimension_semantics<parallel>], iteration_bounds = array<i64: 1>, scalar_prefetch = 0 : i64, scratch_operands = 0 : i64, tpu.core_type = #tpu.core_type<tc>, window_params = [{transform_indices = @transform_0, window_bounds = array<i64: 16, 32>}, {pipeline_mode = #tpu.pipeline_mode<synchronous>, transform_indices = @transform_1, window_bounds = array<i64: 32, 96>}, {pipeline_mode = #tpu.pipeline_mode<synchronous>, transform_indices = @transform_2, window_bounds = array<i64: 1, 96>}, {transform_indices = @transform_3, window_bounds = array<i64: 16, 32>}, {transform_indices = @transform_4, window_bounds = array<i64: 16, 32>}, {transform_indices = @transform_5, window_bounds = array<i64: 16, 32>}]} {
    %c0 = arith.constant 0 : index
    %c0_0 = arith.constant 0 : index
    %0 = vector.load %arg1[%c0, %c0_0] : memref<16x32xf32, #tpu.memory_space<vmem>>, vector<16x32xf32>
    %c0_1 = arith.constant 0 : index
    %c0_2 = arith.constant 0 : index
    %1 = vector.load %arg2[%c0_1, %c0_2] : memref<32x96xf32, #tpu.memory_space<vmem>>, vector<32x96xf32>
    %cst = arith.constant dense<0.000000e+00> : vector<16x96xf32>
    %2 = tpu.matmul %0, %1, %cst {dimension_numbers = #tpu.dot_dimension_numbers<[1], [0], [0], [1], [0, 0, 1, 1], [], []>} : vector<16x32xf32>, vector<32x96xf32>, vector<16x96xf32> -> vector<16x96xf32>
    %c0_3 = arith.constant 0 : index
    %c0_4 = arith.constant 0 : index
    %3 = vector.load %arg3[%c0_3, %c0_4] : memref<1x96xf32, #tpu.memory_space<vmem>>, vector<1x96xf32>
    %4 = vector.broadcast %3 : vector<1x96xf32> to vector<16x96xf32>
    %5 = arith.addf %2, %4 : vector<16x96xf32>
    %6 = vector.extract_strided_slice %5 {offsets = [0, 0], sizes = [16, 32], strides = [1, 1]} : vector<16x96xf32> to vector<16x32xf32>
    %c0_5 = arith.constant 0 : index
    %c0_6 = arith.constant 0 : index
    %7 = vector.load %arg4[%c0_5, %c0_6] : memref<16x32xf32, #tpu.memory_space<vmem>>, vector<16x32xf32>
    tpu.vector_store %arg4[%c0_5, %c0_6], %6 {strides = array<i32>} : memref<16x32xf32, #tpu.memory_space<vmem>>, vector<16x32xf32>,
    %8 = vector.extract_strided_slice %5 {offsets = [0, 32], sizes = [16, 32], strides = [1, 1]} : vector<16x96xf32> to vector<16x32xf32>
    %c0_7 = arith.constant 0 : index
    %c0_8 = arith.constant 0 : index
    %9 = vector.load %arg5[%c0_7, %c0_8] : memref<16x32xf32, #tpu.memory_space<vmem>>, vector<16x32xf32>
    tpu.vector_store %arg5[%c0_7, %c0_8], %8 {strides = array<i32>} : memref<16x32xf32, #tpu.memory_space<vmem>>, vector<16x32xf32>,
    %10 = vector.extract_strided_slice %5 {offsets = [0, 64], sizes = [16, 32], strides = [1, 1]} : vector<16x96xf32> to vector<16x32xf32>
    %c0_9 = arith.constant 0 : index
    %c0_10 = arith.constant 0 : index
    %11 = vector.load %arg6[%c0_9, %c0_10] : memref<16x32xf32, #tpu.memory_space<vmem>>, vector<16x32xf32>
    tpu.vector_store %arg6[%c0_9, %c0_10], %10 {strides = array<i32>} : memref<16x32xf32, #tpu.memory_space<vmem>>, vector<16x32xf32>,
    return
  }
  func.func @transform_0(%arg0: i32) -> (i32, i32) {
    %c0_i32 = arith.constant 0 : i32
    %c0_i32_0 = arith.constant 0 : i32
    return %arg0, %c0_i32 : i32, i32
  }
  func.func @transform_1(%arg0: i32) -> (i32, i32) {
    %c0_i32 = arith.constant 0 : i32
    %c0_i32_0 = arith.constant 0 : i32
    %c0_i32_1 = arith.constant 0 : i32
    return %c0_i32, %c0_i32_0 : i32, i32
  }
  func.func @transform_2(%arg0: i32) -> (i32, i32) {
    %c0_i32 = arith.constant 0 : i32
    %c0_i32_0 = arith.constant 0 : i32
    %c0_i32_1 = arith.constant 0 : i32
    return %c0_i32, %c0_i32_0 : i32, i32
  }
  func.func @transform_3(%arg0: i32) -> (i32, i32) {
    %c0_i32 = arith.constant 0 : i32
    %c0_i32_0 = arith.constant 0 : i32
    return %arg0, %c0_i32 : i32, i32
  }
  func.func @transform_4(%arg0: i32) -> (i32, i32) {
    %c0_i32 = arith.constant 0 : i32
    %c0_i32_0 = arith.constant 0 : i32
    return %arg0, %c0_i32 : i32, i32
  }
  func.func @transform_5(%arg0: i32) -> (i32, i32) {
    %c0_i32 = arith.constant 0 : i32
    %c0_i32_0 = arith.constant 0 : i32
    return %arg0, %c0_i32 : i32, i32
  }
}

module attributes {stable_mosaic.version = 11 : i64} {
  func.func @_attn_kernel(%arg0: i32, %arg1: memref<1x8x32xf32, #tpu.memory_space<vmem>>, %arg2: memref<1x8x32xf32, #tpu.memory_space<vmem>>, %arg3: memref<1x8x32xf32, #tpu.memory_space<vmem>>, %arg4: memref<1x8x32xf32, #tpu.memory_space<vmem>>) attributes {dimension_semantics = [#tpu.dimension_semantics<parallel>], iteration_bounds = array<i64: 2>, scalar_prefetch = 0 : i64, scratch_operands = 0 : i64, tpu.core_type = #tpu.core_type<tc>, window_params = [{transform_indices = @transform_0, window_bounds = array<i64: 1, 8, 32>}, {transform_indices = @transform_1, window_bounds = array<i64: 1, 8, 32>}, {transform_indices = @transform_2, window_bounds = array<i64: 1, 8, 32>}, {transform_indices = @transform_3, window_bounds = array<i64: 1, 8, 32>}]} {
    %c0 = arith.constant 0 : index
    %c0_0 = arith.constant 0 : index
    %c0_1 = arith.constant 0 : index
    %0 = vector.load %arg1[%c0, %c0_0, %c0_1] : memref<1x8x32xf32, #tpu.memory_space<vmem>>, vector<1x8x32xf32>
    %1 = vector.shape_cast %0 : vector<1x8x32xf32> to vector<8x32xf32>
    %c0_2 = arith.constant 0 : index
    %c0_3 = arith.constant 0 : index
    %c0_4 = arith.constant 0 : index
    %2 = vector.load %arg2[%c0_2, %c0_3, %c0_4] : memref<1x8x32xf32, #tpu.memory_space<vmem>>, vector<1x8x32xf32>
    %3 = vector.shape_cast %2 : vector<1x8x32xf32> to vector<8x32xf32>
    %c0_5 = arith.constant 0 : index
    %c0_6 = arith.constant 0 : index
    %c0_7 = arith.constant 0 : index
    %4 = vector.load %arg3[%c0_5, %c0_6, %c0_7] : memref<1x8x32xf32, #tpu.memory_space<vmem>>, vector<1x8x32xf32>
    %5 = vector.shape_cast %4 : vector<1x8x32xf32> to vector<8x32xf32>
    %6 = vector.extract_strided_slice %1 {offsets = [0, 0], sizes = [8, 8], strides = [1, 1]} : vector<8x32xf32> to vector<8x8xf32>
    %7 = vector.extract_strided_slice %3 {offsets = [0, 0], sizes = [8, 8], strides = [1, 1]} : vector<8x32xf32> to vector<8x8xf32>
    %8 = vector.extract_strided_slice %5 {offsets = [0, 0], sizes = [8, 8], strides = [1, 1]} : vector<8x32xf32> to vector<8x8xf32>
    %cst = arith.constant dense<0.000000e+00> : vector<8x8xf32>
    %9 = tpu.matmul %6, %7, %cst {dimension_numbers = #tpu.dot_dimension_numbers<[1], [1], [0], [0], [0, 0, 1, 0], [], []>} : vector<8x8xf32>, vector<8x8xf32>, vector<8x8xf32> -> vector<8x8xf32>
    %cst_8 = arith.constant 0.353553385 : f32
    %10 = vector.broadcast %cst_8 : f32 to vector<8x8xf32>
    %11 = arith.mulf %9, %10 : vector<8x8xf32>
    %cst_9 = arith.constant dense<0xFF800000> : vector<8xf32>
    %12 = vector.multi_reduction <maximumf>, %11, %cst_9 [1] : vector<8x8xf32> to vector<8xf32>
    %13 = vector.shape_cast %12 : vector<8xf32> to vector<8x1xf32>
    %14 = vector.broadcast %13 : vector<8x1xf32> to vector<8x8xf32>
    %15 = arith.subf %11, %14 : vector<8x8xf32>
    %16 = math.exp %15 : vector<8x8xf32>
    %cst_10 = arith.constant dense<0.000000e+00> : vector<8xf32>
    %17 = vector.multi_reduction <add>, %16, %cst_10 [1] : vector<8x8xf32> to vector<8xf32>
    %18 = vector.shape_cast %17 : vector<8xf32> to vector<8x1xf32>
    %19 = tpu.reciprocal %18 {approx = true} : vector<8x1xf32> -> vector<8x1xf32>
    %20 = vector.broadcast %19 : vector<8x1xf32> to vector<8x8xf32>
    %21 = arith.mulf %16, %20 : vector<8x8xf32>
    %cst_11 = arith.constant dense<0.000000e+00> : vector<8x8xf32>
    %22 = tpu.matmul %21, %8, %cst_11 {dimension_numbers = #tpu.dot_dimension_numbers<[1], [0], [0], [1], [0, 0, 1, 1], [], []>} : vector<8x8xf32>, vector<8x8xf32>, vector<8x8xf32> -> vector<8x8xf32>
    %23 = vector.extract_strided_slice %1 {offsets = [0, 8], sizes = [8, 8], strides = [1, 1]} : vector<8x32xf32> to vector<8x8xf32>
    %24 = vector.extract_strided_slice %3 {offsets = [0, 8], sizes = [8, 8], strides = [1, 1]} : vector<8x32xf32> to vector<8x8xf32>
    %25 = vector.extract_strided_slice %5 {offsets = [0, 8], sizes = [8, 8], strides = [1, 1]} : vector<8x32xf32> to vector<8x8xf32>
    %cst_12 = arith.constant dense<0.000000e+00> : vector<8x8xf32>
    %26 = tpu.matmul %23, %24, %cst_12 {dimension_numbers = #tpu.dot_dimension_numbers<[1], [1], [0], [0], [0, 0, 1, 0], [], []>} : vector<8x8xf32>, vector<8x8xf32>, vector<8x8xf32> -> vector<8x8xf32>
    %cst_13 = arith.constant 0.353553385 : f32
    %27 = vector.broadcast %cst_13 : f32 to vector<8x8xf32>
    %28 = arith.mulf %26, %27 : vector<8x8xf32>
    %cst_14 = arith.constant dense<0xFF800000> : vector<8xf32>
    %29 = vector.multi_reduction <maximumf>, %28, %cst_14 [1] : vector<8x8xf32> to vector<8xf32>
    %30 = vector.shape_cast %29 : vector<8xf32> to vector<8x1xf32>
    %31 = vector.broadcast %30 : vector<8x1xf32> to vector<8x8xf32>
    %32 = arith.subf %28, %31 : vector<8x8xf32>
    %33 = math.exp %32 : vector<8x8xf32>
    %cst_15 = arith.constant dense<0.000000e+00> : vector<8xf32>
    %34 = vector.multi_reduction <add>, %33, %cst_15 [1] : vector<8x8xf32> to vector<8xf32>
    %35 = vector.shape_cast %34 : vector<8xf32> to vector<8x1xf32>
    %36 = tpu.reciprocal %35 {approx = true} : vector<8x1xf32> -> vector<8x1xf32>
    %37 = vector.broadcast %36 : vector<8x1xf32> to vector<8x8xf32>
    %38 = arith.mulf %33, %37 : vector<8x8xf32>
    %cst_16 = arith.constant dense<0.000000e+00> : vector<8x8xf32>
    %39 = tpu.matmul %38, %25, %cst_16 {dimension_numbers = #tpu.dot_dimension_numbers<[1], [0], [0], [1], [0, 0, 1, 1], [], []>} : vector<8x8xf32>, vector<8x8xf32>, vector<8x8xf32> -> vector<8x8xf32>
    %40 = vector.extract_strided_slice %1 {offsets = [0, 16], sizes = [8, 8], strides = [1, 1]} : vector<8x32xf32> to vector<8x8xf32>
    %41 = vector.extract_strided_slice %3 {offsets = [0, 16], sizes = [8, 8], strides = [1, 1]} : vector<8x32xf32> to vector<8x8xf32>
    %42 = vector.extract_strided_slice %5 {offsets = [0, 16], sizes = [8, 8], strides = [1, 1]} : vector<8x32xf32> to vector<8x8xf32>
    %cst_17 = arith.constant dense<0.000000e+00> : vector<8x8xf32>
    %43 = tpu.matmul %40, %41, %cst_17 {dimension_numbers = #tpu.dot_dimension_numbers<[1], [1], [0], [0], [0, 0, 1, 0], [], []>} : vector<8x8xf32>, vector<8x8xf32>, vector<8x8xf32> -> vector<8x8xf32>
    %cst_18 = arith.constant 0.353553385 : f32
    %44 = vector.broadcast %cst_18 : f32 to vector<8x8xf32>
    %45 = arith.mulf %43, %44 : vector<8x8xf32>
    %cst_19 = arith.constant dense<0xFF800000> : vector<8xf32>
    %46 = vector.multi_reduction <maximumf>, %45, %cst_19 [1] : vector<8x8xf32> to vector<8xf32>
    %47 = vector.shape_cast %46 : vector<8xf32> to vector<8x1xf32>
    %48 = vector.broadcast %47 : vector<8x1xf32> to vector<8x8xf32>
    %49 = arith.subf %45, %48 : vector<8x8xf32>
    %50 = math.exp %49 : vector<8x8xf32>
    %cst_20 = arith.constant dense<0.000000e+00> : vector<8xf32>
    %51 = vector.multi_reduction <add>, %50, %cst_20 [1] : vector<8x8xf32> to vector<8xf32>
    %52 = vector.shape_cast %51 : vector<8xf32> to vector<8x1xf32>
    %53 = tpu.reciprocal %52 {approx = true} : vector<8x1xf32> -> vector<8x1xf32>
    %54 = vector.broadcast %53 : vector<8x1xf32> to vector<8x8xf32>
    %55 = arith.mulf %50, %54 : vector<8x8xf32>
    %cst_21 = arith.constant dense<0.000000e+00> : vector<8x8xf32>
    %56 = tpu.matmul %55, %42, %cst_21 {dimension_numbers = #tpu.dot_dimension_numbers<[1], [0], [0], [1], [0, 0, 1, 1], [], []>} : vector<8x8xf32>, vector<8x8xf32>, vector<8x8xf32> -> vector<8x8xf32>
    %57 = vector.extract_strided_slice %1 {offsets = [0, 24], sizes = [8, 8], strides = [1, 1]} : vector<8x32xf32> to vector<8x8xf32>
    %58 = vector.extract_strided_slice %3 {offsets = [0, 24], sizes = [8, 8], strides = [1, 1]} : vector<8x32xf32> to vector<8x8xf32>
    %59 = vector.extract_strided_slice %5 {offsets = [0, 24], sizes = [8, 8], strides = [1, 1]} : vector<8x32xf32> to vector<8x8xf32>
    %cst_22 = arith.constant dense<0.000000e+00> : vector<8x8xf32>
    %60 = tpu.matmul %57, %58, %cst_22 {dimension_numbers = #tpu.dot_dimension_numbers<[1], [1], [0], [0], [0, 0, 1, 0], [], []>} : vector<8x8xf32>, vector<8x8xf32>, vector<8x8xf32> -> vector<8x8xf32>
    %cst_23 = arith.constant 0.353553385 : f32
    %61 = vector.broadcast %cst_23 : f32 to vector<8x8xf32>
    %62 = arith.mulf %60, %61 : vector<8x8xf32>
    %cst_24 = arith.constant dense<0xFF800000> : vector<8xf32>
    %63 = vector.multi_reduction <maximumf>, %62, %cst_24 [1] : vector<8x8xf32> to vector<8xf32>
    %64 = vector.shape_cast %63 : vector<8xf32> to vector<8x1xf32>
    %65 = vector.broadcast %64 : vector<8x1xf32> to vector<8x8xf32>
    %66 = arith.subf %62, %65 : vector<8x8xf32>
    %67 = math.exp %66 : vector<8x8xf32>
    %cst_25 = arith.constant dense<0.000000e+00> : vector<8xf32>
    %68 = vector.multi_reduction <add>, %67, %cst_25 [1] : vector<8x8xf32> to vector<8xf32>
    %69 = vector.shape_cast %68 : vector<8xf32> to vector<8x1xf32>
    %70 = tpu.reciprocal %69 {approx = true} : vector<8x1xf32> -> vector<8x1xf32>
    %71 = vector.broadcast %70 : vector<8x1xf32> to vector<8x8xf32>
    %72 = arith.mulf %67, %71 : vector<8x8xf32>
    %cst_26 = arith.constant dense<0.000000e+00> : vector<8x8xf32>
    %73 = tpu.matmul %72, %59, %cst_26 {dimension_numbers = #tpu.dot_dimension_numbers<[1], [0], [0], [1], [0, 0, 1, 1], [], []>} : vector<8x8xf32>, vector<8x8xf32>, vector<8x8xf32> -> vector<8x8xf32>
    %74 = tpu.concatenate %22, %39, %56, %73 in 1 : vector<8x8xf32>, vector<8x8xf32>, vector<8x8xf32>, vector<8x8xf32> -> vector<8x32xf32>
    %c0_27 = arith.constant 0 : index
    %c0_28 = arith.constant 0 : index
    %c0_29 = arith.constant 0 : index
    %75 = vector.load %arg4[%c0_27, %c0_28, %c0_29] : memref<1x8x32xf32, #tpu.memory_space<vmem>>, vector<1x8x32xf32>
    %76 = vector.shape_cast %75 : vector<1x8x32xf32> to vector<8x32xf32>
    %77 = vector.shape_cast %74 : vector<8x32xf32> to vector<1x8x32xf32>
    tpu.vector_store %arg4[%c0_27, %c0_28, %c0_29], %77 {strides = array<i32>} : memref<1x8x32xf32, #tpu.memory_space<vmem>>, vector<1x8x32xf32>,
    return
  }
  func.func @transform_0(%arg0: i32) -> (i32, i32, i32) {
    %c0_i32 = arith.constant 0 : i32
    %c0_i32_0 = arith.constant 0 : i32
    %c0_i32_1 = arith.constant 0 : i32
    return %arg0, %c0_i32, %c0_i32_0 : i32, i32, i32
  }
  func.func @transform_1(%arg0: i32) -> (i32, i32, i32) {
    %c0_i32 = arith.constant 0 : i32
    %c0_i32_0 = arith.constant 0 : i32
    %c0_i32_1 = arith.constant 0 : i32
    return %arg0, %c0_i32, %c0_i32_0 : i32, i32, i32
  }
  func.func @transform_2(%arg0: i32) -> (i32, i32, i32) {
    %c0_i32 = arith.constant 0 : i32
    %c0_i32_0 = arith.constant 0 : i32
    %c0_i32_1 = arith.constant 0 : i32
    return %arg0, %c0_i32, %c0_i32_0 : i32, i32, i32
  }
  func.func @transform_3(%arg0: i32) -> (i32, i32, i32) {
    %c0_i32 = arith.constant 0 : i32
    %c0_i32_0 = arith.constant 0 : i32
    %c0_i32_1 = arith.constant 0 : i32
    return %arg0, %c0_i32, %c0_i32_0 : i32, i32, i32
  }
}

module attributes {stable_mosaic.version = 11 : i64} {
  func.func @_linear_add_ln_kernel(%arg0: i32, %arg1: memref<16x32xf32, #tpu.memory_space<vmem>>, %arg2: memref<32x32xf32, #tpu.memory_space<vmem>>, %arg3: memref<1x32xf32, #tpu.memory_space<vmem>>, %arg4: memref<16x32xf32, #tpu.memory_space<vmem>>, %arg5: memref<1x32xf32, #tpu.memory_space<vmem>>, %arg6: memref<1x32xf32, #tpu.memory_space<vmem>>, %arg7: memref<16x32xf32, #tpu.memory_space<vmem>>) attributes {dimension_semantics = [#tpu.dimension_semantics<parallel>], iteration_bounds = array<i64: 1>, scalar_prefetch = 0 : i64, scratch_operands = 0 : i64, tpu.core_type = #tpu.core_type<tc>, window_params = [{transform_indices = @transform_0, window_bounds = array<i64: 16, 32>}, {pipeline_mode = #tpu.pipeline_mode<synchronous>, transform_indices = @transform_1, window_bounds = array<i64: 32, 32>}, {pipeline_mode = #tpu.pipeline_mode<synchronous>, transform_indices = @transform_2, window_bounds = array<i64: 1, 32>}, {transform_indices = @transform_3, window_bounds = array<i64: 16, 32>}, {pipeline_mode = #tpu.pipeline_mode<synchronous>, transform_indices = @transform_4, window_bounds = array<i64: 1, 32>}, {pipeline_mode = #tpu.pipeline_mode<synchronous>, transform_indices = @transform_5, window_bounds = array<i64: 1, 32>}, {transform_indices = @transform_6, window_bounds = array<i64: 16, 32>}]} {
    %c0 = arith.constant 0 : index
    %c0_0 = arith.constant 0 : index
    %0 = vector.load %arg1[%c0, %c0_0] : memref<16x32xf32, #tpu.memory_space<vmem>>, vector<16x32xf32>
    %c0_1 = arith.constant 0 : index
    %c0_2 = arith.constant 0 : index
    %1 = vector.load %arg2[%c0_1, %c0_2] : memref<32x32xf32, #tpu.memory_space<vmem>>, vector<32x32xf32>
    %cst = arith.constant dense<0.000000e+00> : vector<16x32xf32>
    %2 = tpu.matmul %0, %1, %cst {dimension_numbers = #tpu.dot_dimension_numbers<[1], [0], [0], [1], [0, 0, 1, 1], [], []>} : vector<16x32xf32>, vector<32x32xf32>, vector<16x32xf32> -> vector<16x32xf32>
    %c0_3 = arith.constant 0 : index
    %c0_4 = arith.constant 0 : index
    %3 = vector.load %arg3[%c0_3, %c0_4] : memref<1x32xf32, #tpu.memory_space<vmem>>, vector<1x32xf32>
    %4 = vector.broadcast %3 : vector<1x32xf32> to vector<16x32xf32>
    %5 = arith.addf %2, %4 : vector<16x32xf32>
    %c0_5 = arith.constant 0 : index
    %c0_6 = arith.constant 0 : index
    %6 = vector.load %arg4[%c0_5, %c0_6] : memref<16x32xf32, #tpu.memory_space<vmem>>, vector<16x32xf32>
    %7 = arith.addf %5, %6 : vector<16x32xf32>
    %cst_7 = arith.constant dense<0.000000e+00> : vector<16xf32>
    %8 = vector.multi_reduction <add>, %7, %cst_7 [1] : vector<16x32xf32> to vector<16xf32>
    %9 = vector.shape_cast %8 : vector<16xf32> to vector<16x1xf32>
    %cst_8 = arith.constant 3.200000e+01 : f32
    %10 = vector.broadcast %cst_8 : f32 to vector<16x1xf32>
    %11 = arith.divf %9, %10 : vector<16x1xf32>
    %12 = vector.broadcast %11 : vector<16x1xf32> to vector<16x32xf32>
    %13 = arith.subf %7, %12 : vector<16x32xf32>
    %14 = arith.mulf %13, %13 : vector<16x32xf32>
    %cst_9 = arith.constant dense<0.000000e+00> : vector<16xf32>
    %15 = vector.multi_reduction <add>, %14, %cst_9 [1] : vector<16x32xf32> to vector<16xf32>
    %16 = vector.shape_cast %15 : vector<16xf32> to vector<16x1xf32>
    %cst_10 = arith.constant 3.200000e+01 : f32
    %17 = vector.broadcast %cst_10 : f32 to vector<16x1xf32>
    %18 = arith.divf %16, %17 : vector<16x1xf32>
    %19 = vector.broadcast %11 : vector<16x1xf32> to vector<16x32xf32>
    %20 = arith.subf %7, %19 : vector<16x32xf32>
    %cst_11 = arith.constant 9.99999974E-6 : f32
    %21 = vector.broadcast %cst_11 : f32 to vector<16x1xf32>
    %22 = arith.addf %18, %21 : vector<16x1xf32>
    %23 = math.rsqrt %22 : vector<16x1xf32>
    %24 = vector.broadcast %23 : vector<16x1xf32> to vector<16x32xf32>
    %25 = arith.mulf %20, %24 : vector<16x32xf32>
    %c0_12 = arith.constant 0 : index
    %c0_13 = arith.constant 0 : index
    %26 = vector.load %arg5[%c0_12, %c0_13] : memref<1x32xf32, #tpu.memory_space<vmem>>, vector<1x32xf32>
    %27 = vector.broadcast %26 : vector<1x32xf32> to vector<16x32xf32>
    %28 = arith.mulf %25, %27 : vector<16x32xf32>
    %c0_14 = arith.constant 0 : index
    %c0_15 = arith.constant 0 : index
    %29 = vector.load %arg6[%c0_14, %c0_15] : memref<1x32xf32, #tpu.memory_space<vmem>>, vector<1x32xf32>
    %30 = vector.broadcast %29 : vector<1x32xf32> to vector<16x32xf32>
    %31 = arith.addf %28, %30 : vector<16x32xf32>
    %c0_16 = arith.constant 0 : index
    %c0_17 = arith.constant 0 : index
    %32 = vector.load %arg7[%c0_16, %c0_17] : memref<16x32xf32, #tpu.memory_space<vmem>>, vector<16x32xf32>
    tpu.vector_store %arg7[%c0_16, %c0_17], %31 {strides = array<i32>} : memref<16x32xf32, #tpu.memory_space<vmem>>, vector<16x32xf32>,
    return
  }
  func.func @transform_0(%arg0: i32) -> (i32, i32) {
    %c0_i32 = arith.constant 0 : i32
    %c0_i32_0 = arith.constant 0 : i32
    return %arg0, %c0_i32 : i32, i32
  }
  func.func @transform_1(%arg0: i32) -> (i32, i32) {
    %c0_i32 = arith.constant 0 : i32
    %c0_i32_0 = arith.constant 0 : i32
    %c0_i32_1 = arith.constant 0 : i32
    return %c0_i32, %c0_i32_0 : i32, i32
  }
  func.func @transform_2(%arg0: i32) -> (i32, i32) {
    %c0_i32 = arith.constant 0 : i32
    %c0_i32_0 = arith.constant 0 : i32
    %c0_i32_1 = arith.constant 0 : i32
    return %c0_i32, %c0_i32_0 : i32, i32
  }
  func.func @transform_3(%arg0: i32) -> (i32, i32) {
    %c0_i32 = arith.constant 0 : i32
    %c0_i32_0 = arith.constant 0 : i32
    return %arg0, %c0_i32 : i32, i32
  }
  func.func @transform_4(%arg0: i32) -> (i32, i32) {
    %c0_i32 = arith.constant 0 : i32
    %c0_i32_0 = arith.constant 0 : i32
    %c0_i32_1 = arith.constant 0 : i32
    return %c0_i32, %c0_i32_0 : i32, i32
  }
  func.func @transform_5(%arg0: i32) -> (i32, i32) {
    %c0_i32 = arith.constant 0 : i32
    %c0_i32_0 = arith.constant 0 : i32
    %c0_i32_1 = arith.constant 0 : i32
    return %c0_i32, %c0_i32_0 : i32, i32
  }
  func.func @transform_6(%arg0: i32) -> (i32, i32) {
    %c0_i32 = arith.constant 0 : i32
    %c0_i32_0 = arith.constant 0 : i32
    return %arg0, %c0_i32 : i32, i32
  }
}

module attributes {stable_mosaic.version = 11 : i64} {
  func.func @_ffn_ln_kernel(%arg0: i32, %arg1: memref<16x32xf32, #tpu.memory_space<vmem>>, %arg2: memref<32x64xf32, #tpu.memory_space<vmem>>, %arg3: memref<1x64xf32, #tpu.memory_space<vmem>>, %arg4: memref<64x32xf32, #tpu.memory_space<vmem>>, %arg5: memref<1x32xf32, #tpu.memory_space<vmem>>, %arg6: memref<1x32xf32, #tpu.memory_space<vmem>>, %arg7: memref<1x32xf32, #tpu.memory_space<vmem>>, %arg8: memref<16x32xf32, #tpu.memory_space<vmem>>) attributes {dimension_semantics = [#tpu.dimension_semantics<parallel>], iteration_bounds = array<i64: 1>, scalar_prefetch = 0 : i64, scratch_operands = 0 : i64, tpu.core_type = #tpu.core_type<tc>, window_params = [{transform_indices = @transform_0, window_bounds = array<i64: 16, 32>}, {pipeline_mode = #tpu.pipeline_mode<synchronous>, transform_indices = @transform_1, window_bounds = array<i64: 32, 64>}, {pipeline_mode = #tpu.pipeline_mode<synchronous>, transform_indices = @transform_2, window_bounds = array<i64: 1, 64>}, {pipeline_mode = #tpu.pipeline_mode<synchronous>, transform_indices = @transform_3, window_bounds = array<i64: 64, 32>}, {pipeline_mode = #tpu.pipeline_mode<synchronous>, transform_indices = @transform_4, window_bounds = array<i64: 1, 32>}, {pipeline_mode = #tpu.pipeline_mode<synchronous>, transform_indices = @transform_5, window_bounds = array<i64: 1, 32>}, {pipeline_mode = #tpu.pipeline_mode<synchronous>, transform_indices = @transform_6, window_bounds = array<i64: 1, 32>}, {transform_indices = @transform_7, window_bounds = array<i64: 16, 32>}]} {
    %c0 = arith.constant 0 : index
    %c0_0 = arith.constant 0 : index
    %0 = vector.load %arg1[%c0, %c0_0] : memref<16x32xf32, #tpu.memory_space<vmem>>, vector<16x32xf32>
    %c0_1 = arith.constant 0 : index
    %c0_2 = arith.constant 0 : index
    %1 = vector.load %arg2[%c0_1, %c0_2] : memref<32x64xf32, #tpu.memory_space<vmem>>, vector<32x64xf32>
    %cst = arith.constant dense<0.000000e+00> : vector<16x64xf32>
    %2 = tpu.matmul %0, %1, %cst {dimension_numbers = #tpu.dot_dimension_numbers<[1], [0], [0], [1], [0, 0, 1, 1], [], []>} : vector<16x32xf32>, vector<32x64xf32>, vector<16x64xf32> -> vector<16x64xf32>
    %c0_3 = arith.constant 0 : index
    %c0_4 = arith.constant 0 : index
    %3 = vector.load %arg3[%c0_3, %c0_4] : memref<1x64xf32, #tpu.memory_space<vmem>>, vector<1x64xf32>
    %4 = vector.broadcast %3 : vector<1x64xf32> to vector<16x64xf32>
    %5 = arith.addf %2, %4 : vector<16x64xf32>
    %cst_5 = arith.constant 0.000000e+00 : f32
    %6 = vector.broadcast %cst_5 : f32 to vector<16x64xf32>
    %7 = arith.maximumf %5, %6 : vector<16x64xf32>
    %c0_6 = arith.constant 0 : index
    %c0_7 = arith.constant 0 : index
    %8 = vector.load %arg4[%c0_6, %c0_7] : memref<64x32xf32, #tpu.memory_space<vmem>>, vector<64x32xf32>
    %cst_8 = arith.constant dense<0.000000e+00> : vector<16x32xf32>
    %9 = tpu.matmul %7, %8, %cst_8 {dimension_numbers = #tpu.dot_dimension_numbers<[1], [0], [0], [1], [0, 0, 1, 1], [], []>} : vector<16x64xf32>, vector<64x32xf32>, vector<16x32xf32> -> vector<16x32xf32>
    %c0_9 = arith.constant 0 : index
    %c0_10 = arith.constant 0 : index
    %10 = vector.load %arg5[%c0_9, %c0_10] : memref<1x32xf32, #tpu.memory_space<vmem>>, vector<1x32xf32>
    %11 = vector.broadcast %10 : vector<1x32xf32> to vector<16x32xf32>
    %12 = arith.addf %9, %11 : vector<16x32xf32>
    %13 = arith.addf %12, %0 : vector<16x32xf32>
    %cst_11 = arith.constant dense<0.000000e+00> : vector<16xf32>
    %14 = vector.multi_reduction <add>, %13, %cst_11 [1] : vector<16x32xf32> to vector<16xf32>
    %15 = vector.shape_cast %14 : vector<16xf32> to vector<16x1xf32>
    %cst_12 = arith.constant 3.200000e+01 : f32
    %16 = vector.broadcast %cst_12 : f32 to vector<16x1xf32>
    %17 = arith.divf %15, %16 : vector<16x1xf32>
    %18 = vector.broadcast %17 : vector<16x1xf32> to vector<16x32xf32>
    %19 = arith.subf %13, %18 : vector<16x32xf32>
    %20 = arith.mulf %19, %19 : vector<16x32xf32>
    %cst_13 = arith.constant dense<0.000000e+00> : vector<16xf32>
    %21 = vector.multi_reduction <add>, %20, %cst_13 [1] : vector<16x32xf32> to vector<16xf32>
    %22 = vector.shape_cast %21 : vector<16xf32> to vector<16x1xf32>
    %cst_14 = arith.constant 3.200000e+01 : f32
    %23 = vector.broadcast %cst_14 : f32 to vector<16x1xf32>
    %24 = arith.divf %22, %23 : vector<16x1xf32>
    %25 = vector.broadcast %17 : vector<16x1xf32> to vector<16x32xf32>
    %26 = arith.subf %13, %25 : vector<16x32xf32>
    %cst_15 = arith.constant 9.99999974E-6 : f32
    %27 = vector.broadcast %cst_15 : f32 to vector<16x1xf32>
    %28 = arith.addf %24, %27 : vector<16x1xf32>
    %29 = math.rsqrt %28 : vector<16x1xf32>
    %30 = vector.broadcast %29 : vector<16x1xf32> to vector<16x32xf32>
    %31 = arith.mulf %26, %30 : vector<16x32xf32>
    %c0_16 = arith.constant 0 : index
    %c0_17 = arith.constant 0 : index
    %32 = vector.load %arg6[%c0_16, %c0_17] : memref<1x32xf32, #tpu.memory_space<vmem>>, vector<1x32xf32>
    %33 = vector.broadcast %32 : vector<1x32xf32> to vector<16x32xf32>
    %34 = arith.mulf %31, %33 : vector<16x32xf32>
    %c0_18 = arith.constant 0 : index
    %c0_19 = arith.constant 0 : index
    %35 = vector.load %arg7[%c0_18, %c0_19] : memref<1x32xf32, #tpu.memory_space<vmem>>, vector<1x32xf32>
    %36 = vector.broadcast %35 : vector<1x32xf32> to vector<16x32xf32>
    %37 = arith.addf %34, %36 : vector<16x32xf32>
    %c0_20 = arith.constant 0 : index
    %c0_21 = arith.constant 0 : index
    %38 = vector.load %arg8[%c0_20, %c0_21] : memref<16x32xf32, #tpu.memory_space<vmem>>, vector<16x32xf32>
    tpu.vector_store %arg8[%c0_20, %c0_21], %37 {strides = array<i32>} : memref<16x32xf32, #tpu.memory_space<vmem>>, vector<16x32xf32>,
    return
  }
  func.func @transform_0(%arg0: i32) -> (i32, i32) {
    %c0_i32 = arith.constant 0 : i32
    %c0_i32_0 = arith.constant 0 : i32
    return %arg0, %c0_i32 : i32, i32
  }
  func.func @transform_1(%arg0: i32) -> (i32, i32) {
    %c0_i32 = arith.constant 0 : i32
    %c0_i32_0 = arith.constant 0 : i32
    %c0_i32_1 = arith.constant 0 : i32
    return %c0_i32, %c0_i32_0 : i32, i32
  }
  func.func @transform_2(%arg0: i32) -> (i32, i32) {
    %c0_i32 = arith.constant 0 : i32
    %c0_i32_0 = arith.constant 0 : i32
    %c0_i32_1 = arith.constant 0 : i32
    return %c0_i32, %c0_i32_0 : i32, i32
  }
  func.func @transform_3(%arg0: i32) -> (i32, i32) {
    %c0_i32 = arith.constant 0 : i32
    %c0_i32_0 = arith.constant 0 : i32
    %c0_i32_1 = arith.constant 0 : i32
    return %c0_i32, %c0_i32_0 : i32, i32
  }
  func.func @transform_4(%arg0: i32) -> (i32, i32) {
    %c0_i32 = arith.constant 0 : i32
    %c0_i32_0 = arith.constant 0 : i32
    %c0_i32_1 = arith.constant 0 : i32
    return %c0_i32, %c0_i32_0 : i32, i32
  }
  func.func @transform_5(%arg0: i32) -> (i32, i32) {
    %c0_i32 = arith.constant 0 : i32
    %c0_i32_0 = arith.constant 0 : i32
    %c0_i32_1 = arith.constant 0 : i32
    return %c0_i32, %c0_i32_0 : i32, i32
  }
  func.func @transform_6(%arg0: i32) -> (i32, i32) {
    %c0_i32 = arith.constant 0 : i32
    %c0_i32_0 = arith.constant 0 : i32
    %c0_i32_1 = arith.constant 0 : i32
    return %c0_i32, %c0_i32_0 : i32, i32
  }
  func.func @transform_7(%arg0: i32) -> (i32, i32) {
    %c0_i32 = arith.constant 0 : i32
    %c0_i32_0 = arith.constant 0 : i32
    return %arg0, %c0_i32 : i32, i32
  }
}

module attributes {stable_mosaic.version = 11 : i64} {
  func.func @_ln_kernel(%arg0: i32, %arg1: memref<16x32xf32, #tpu.memory_space<vmem>>, %arg2: memref<1x32xf32, #tpu.memory_space<vmem>>, %arg3: memref<1x32xf32, #tpu.memory_space<vmem>>, %arg4: memref<16x32xf32, #tpu.memory_space<vmem>>) attributes {dimension_semantics = [#tpu.dimension_semantics<parallel>], iteration_bounds = array<i64: 1>, scalar_prefetch = 0 : i64, scratch_operands = 0 : i64, tpu.core_type = #tpu.core_type<tc>, window_params = [{transform_indices = @transform_0, window_bounds = array<i64: 16, 32>}, {pipeline_mode = #tpu.pipeline_mode<synchronous>, transform_indices = @transform_1, window_bounds = array<i64: 1, 32>}, {pipeline_mode = #tpu.pipeline_mode<synchronous>, transform_indices = @transform_2, window_bounds = array<i64: 1, 32>}, {transform_indices = @transform_3, window_bounds = array<i64: 16, 32>}]} {
    %c0 = arith.constant 0 : index
    %c0_0 = arith.constant 0 : index
    %0 = vector.load %arg1[%c0, %c0_0] : memref<16x32xf32, #tpu.memory_space<vmem>>, vector<16x32xf32>
    %cst = arith.constant dense<0.000000e+00> : vector<16xf32>
    %1 = vector.multi_reduction <add>, %0, %cst [1] : vector<16x32xf32> to vector<16xf32>
    %2 = vector.shape_cast %1 : vector<16xf32> to vector<16x1xf32>
    %cst_1 = arith.constant 3.200000e+01 : f32
    %3 = vector.broadcast %cst_1 : f32 to vector<16x1xf32>
    %4 = arith.divf %2, %3 : vector<16x1xf32>
    %5 = vector.broadcast %4 : vector<16x1xf32> to vector<16x32xf32>
    %6 = arith.subf %0, %5 : vector<16x32xf32>
    %7 = arith.mulf %6, %6 : vector<16x32xf32>
    %cst_2 = arith.constant dense<0.000000e+00> : vector<16xf32>
    %8 = vector.multi_reduction <add>, %7, %cst_2 [1] : vector<16x32xf32> to vector<16xf32>
    %9 = vector.shape_cast %8 : vector<16xf32> to vector<16x1xf32>
    %cst_3 = arith.constant 3.200000e+01 : f32
    %10 = vector.broadcast %cst_3 : f32 to vector<16x1xf32>
    %11 = arith.divf %9, %10 : vector<16x1xf32>
    %12 = vector.broadcast %4 : vector<16x1xf32> to vector<16x32xf32>
    %13 = arith.subf %0, %12 : vector<16x32xf32>
    %cst_4 = arith.constant 9.99999974E-6 : f32
    %14 = vector.broadcast %cst_4 : f32 to vector<16x1xf32>
    %15 = arith.addf %11, %14 : vector<16x1xf32>
    %16 = math.rsqrt %15 : vector<16x1xf32>
    %17 = vector.broadcast %16 : vector<16x1xf32> to vector<16x32xf32>
    %18 = arith.mulf %13, %17 : vector<16x32xf32>
    %c0_5 = arith.constant 0 : index
    %c0_6 = arith.constant 0 : index
    %19 = vector.load %arg2[%c0_5, %c0_6] : memref<1x32xf32, #tpu.memory_space<vmem>>, vector<1x32xf32>
    %20 = vector.broadcast %19 : vector<1x32xf32> to vector<16x32xf32>
    %21 = arith.mulf %18, %20 : vector<16x32xf32>
    %c0_7 = arith.constant 0 : index
    %c0_8 = arith.constant 0 : index
    %22 = vector.load %arg3[%c0_7, %c0_8] : memref<1x32xf32, #tpu.memory_space<vmem>>, vector<1x32xf32>
    %23 = vector.broadcast %22 : vector<1x32xf32> to vector<16x32xf32>
    %24 = arith.addf %21, %23 : vector<16x32xf32>
    %c0_9 = arith.constant 0 : index
    %c0_10 = arith.constant 0 : index
    %25 = vector.load %arg4[%c0_9, %c0_10] : memref<16x32xf32, #tpu.memory_space<vmem>>, vector<16x32xf32>
    tpu.vector_store %arg4[%c0_9, %c0_10], %24 {strides = array<i32>} : memref<16x32xf32, #tpu.memory_space<vmem>>, vector<16x32xf32>,
    return
  }
  func.func @transform_0(%arg0: i32) -> (i32, i32) {
    %c0_i32 = arith.constant 0 : i32
    %c0_i32_0 = arith.constant 0 : i32
    return %arg0, %c0_i32 : i32, i32
  }
  func.func @transform_1(%arg0: i32) -> (i32, i32) {
    %c0_i32 = arith.constant 0 : i32
    %c0_i32_0 = arith.constant 0 : i32
    %c0_i32_1 = arith.constant 0 : i32
    return %c0_i32, %c0_i32_0 : i32, i32
  }
  func.func @transform_2(%arg0: i32) -> (i32, i32) {
    %c0_i32 = arith.constant 0 : i32
    %c0_i32_0 = arith.constant 0 : i32
    %c0_i32_1 = arith.constant 0 : i32
    return %c0_i32, %c0_i32_0 : i32, i32
  }
  func.func @transform_3(%arg0: i32) -> (i32, i32) {
    %c0_i32 = arith.constant 0 : i32
    %c0_i32_0 = arith.constant 0 : i32
    return %arg0, %c0_i32 : i32, i32
  }
}

module attributes {stable_mosaic.version = 11 : i64} {
  func.func @_proj_split_kernel(%arg0: i32, %arg1: memref<16x32xf32, #tpu.memory_space<vmem>>, %arg2: memref<32x64xf32, #tpu.memory_space<vmem>>, %arg3: memref<1x64xf32, #tpu.memory_space<vmem>>, %arg4: memref<16x32xf32, #tpu.memory_space<vmem>>, %arg5: memref<16x32xf32, #tpu.memory_space<vmem>>) attributes {dimension_semantics = [#tpu.dimension_semantics<parallel>], iteration_bounds = array<i64: 1>, scalar_prefetch = 0 : i64, scratch_operands = 0 : i64, tpu.core_type = #tpu.core_type<tc>, window_params = [{transform_indices = @transform_0, window_bounds = array<i64: 16, 32>}, {pipeline_mode = #tpu.pipeline_mode<synchronous>, transform_indices = @transform_1, window_bounds = array<i64: 32, 64>}, {pipeline_mode = #tpu.pipeline_mode<synchronous>, transform_indices = @transform_2, window_bounds = array<i64: 1, 64>}, {transform_indices = @transform_3, window_bounds = array<i64: 16, 32>}, {transform_indices = @transform_4, window_bounds = array<i64: 16, 32>}]} {
    %c0 = arith.constant 0 : index
    %c0_0 = arith.constant 0 : index
    %0 = vector.load %arg1[%c0, %c0_0] : memref<16x32xf32, #tpu.memory_space<vmem>>, vector<16x32xf32>
    %c0_1 = arith.constant 0 : index
    %c0_2 = arith.constant 0 : index
    %1 = vector.load %arg2[%c0_1, %c0_2] : memref<32x64xf32, #tpu.memory_space<vmem>>, vector<32x64xf32>
    %cst = arith.constant dense<0.000000e+00> : vector<16x64xf32>
    %2 = tpu.matmul %0, %1, %cst {dimension_numbers = #tpu.dot_dimension_numbers<[1], [0], [0], [1], [0, 0, 1, 1], [], []>} : vector<16x32xf32>, vector<32x64xf32>, vector<16x64xf32> -> vector<16x64xf32>
    %c0_3 = arith.constant 0 : index
    %c0_4 = arith.constant 0 : index
    %3 = vector.load %arg3[%c0_3, %c0_4] : memref<1x64xf32, #tpu.memory_space<vmem>>, vector<1x64xf32>
    %4 = vector.broadcast %3 : vector<1x64xf32> to vector<16x64xf32>
    %5 = arith.addf %2, %4 : vector<16x64xf32>
    %6 = vector.extract_strided_slice %5 {offsets = [0, 0], sizes = [16, 32], strides = [1, 1]} : vector<16x64xf32> to vector<16x32xf32>
    %c0_5 = arith.constant 0 : index
    %c0_6 = arith.constant 0 : index
    %7 = vector.load %arg4[%c0_5, %c0_6] : memref<16x32xf32, #tpu.memory_space<vmem>>, vector<16x32xf32>
    tpu.vector_store %arg4[%c0_5, %c0_6], %6 {strides = array<i32>} : memref<16x32xf32, #tpu.memory_space<vmem>>, vector<16x32xf32>,
    %8 = vector.extract_strided_slice %5 {offsets = [0, 32], sizes = [16, 32], strides = [1, 1]} : vector<16x64xf32> to vector<16x32xf32>
    %c0_7 = arith.constant 0 : index
    %c0_8 = arith.constant 0 : index
    %9 = vector.load %arg5[%c0_7, %c0_8] : memref<16x32xf32, #tpu.memory_space<vmem>>, vector<16x32xf32>
    tpu.vector_store %arg5[%c0_7, %c0_8], %8 {strides = array<i32>} : memref<16x32xf32, #tpu.memory_space<vmem>>, vector<16x32xf32>,
    return
  }
  func.func @transform_0(%arg0: i32) -> (i32, i32) {
    %c0_i32 = arith.constant 0 : i32
    %c0_i32_0 = arith.constant 0 : i32
    return %arg0, %c0_i32 : i32, i32
  }
  func.func @transform_1(%arg0: i32) -> (i32, i32) {
    %c0_i32 = arith.constant 0 : i32
    %c0_i32_0 = arith.constant 0 : i32
    %c0_i32_1 = arith.constant 0 : i32
    return %c0_i32, %c0_i32_0 : i32, i32
  }
  func.func @transform_2(%arg0: i32) -> (i32, i32) {
    %c0_i32 = arith.constant 0 : i32
    %c0_i32_0 = arith.constant 0 : i32
    %c0_i32_1 = arith.constant 0 : i32
    return %c0_i32, %c0_i32_0 : i32, i32
  }
  func.func @transform_3(%arg0: i32) -> (i32, i32) {
    %c0_i32 = arith.constant 0 : i32
    %c0_i32_0 = arith.constant 0 : i32
    return %arg0, %c0_i32 : i32, i32
  }
  func.func @transform_4(%arg0: i32) -> (i32, i32) {
    %c0_i32 = arith.constant 0 : i32
    %c0_i32_0 = arith.constant 0 : i32
    return %arg0, %c0_i32 : i32, i32
  }
}

module attributes {stable_mosaic.version = 11 : i64} {
  func.func @_linear_kernel(%arg0: i32, %arg1: i32, %arg2: memref<16x32xf32, #tpu.memory_space<vmem>>, %arg3: memref<32x32xf32, #tpu.memory_space<vmem>>, %arg4: memref<1x32xf32, #tpu.memory_space<vmem>>, %arg5: memref<16x32xf32, #tpu.memory_space<vmem>>) attributes {dimension_semantics = [#tpu.dimension_semantics<parallel>, #tpu.dimension_semantics<parallel>], iteration_bounds = array<i64: 1, 1>, scalar_prefetch = 0 : i64, scratch_operands = 0 : i64, tpu.core_type = #tpu.core_type<tc>, window_params = [{transform_indices = @transform_0, window_bounds = array<i64: 16, 32>}, {transform_indices = @transform_1, window_bounds = array<i64: 32, 32>}, {transform_indices = @transform_2, window_bounds = array<i64: 1, 32>}, {transform_indices = @transform_3, window_bounds = array<i64: 16, 32>}]} {
    %c0 = arith.constant 0 : index
    %c0_0 = arith.constant 0 : index
    %0 = vector.load %arg2[%c0, %c0_0] : memref<16x32xf32, #tpu.memory_space<vmem>>, vector<16x32xf32>
    %c0_1 = arith.constant 0 : index
    %c0_2 = arith.constant 0 : index
    %1 = vector.load %arg3[%c0_1, %c0_2] : memref<32x32xf32, #tpu.memory_space<vmem>>, vector<32x32xf32>
    %cst = arith.constant dense<0.000000e+00> : vector<16x32xf32>
    %2 = tpu.matmul %0, %1, %cst {dimension_numbers = #tpu.dot_dimension_numbers<[1], [0], [0], [1], [0, 0, 1, 1], [], []>} : vector<16x32xf32>, vector<32x32xf32>, vector<16x32xf32> -> vector<16x32xf32>
    %c0_3 = arith.constant 0 : index
    %c0_4 = arith.constant 0 : index
    %3 = vector.load %arg4[%c0_3, %c0_4] : memref<1x32xf32, #tpu.memory_space<vmem>>, vector<1x32xf32>
    %4 = vector.broadcast %3 : vector<1x32xf32> to vector<16x32xf32>
    %5 = arith.addf %2, %4 : vector<16x32xf32>
    %c0_5 = arith.constant 0 : index
    %c0_6 = arith.constant 0 : index
    %6 = vector.load %arg5[%c0_5, %c0_6] : memref<16x32xf32, #tpu.memory_space<vmem>>, vector<16x32xf32>
    tpu.vector_store %arg5[%c0_5, %c0_6], %5 {strides = array<i32>} : memref<16x32xf32, #tpu.memory_space<vmem>>, vector<16x32xf32>,
    return
  }
  func.func @transform_0(%arg0: i32, %arg1: i32) -> (i32, i32) {
    %c0_i32 = arith.constant 0 : i32
    %c0_i32_0 = arith.constant 0 : i32
    return %arg0, %c0_i32 : i32, i32
  }
  func.func @transform_1(%arg0: i32, %arg1: i32) -> (i32, i32) {
    %c0_i32 = arith.constant 0 : i32
    %c0_i32_0 = arith.constant 0 : i32
    return %c0_i32, %arg1 : i32, i32
  }
  func.func @transform_2(%arg0: i32, %arg1: i32) -> (i32, i32) {
    %c0_i32 = arith.constant 0 : i32
    %c0_i32_0 = arith.constant 0 : i32
    return %c0_i32, %arg1 : i32, i32
  }
  func.func @transform_3(%arg0: i32, %arg1: i32) -> (i32, i32) {
    %c0_i32 = arith.constant 0 : i32
    return %arg0, %arg1 : i32, i32
  }
}

module attributes {stable_mosaic.version = 11 : i64} {
  func.func @_linear_kernel(%arg0: i32, %arg1: i32, %arg2: memref<16x32xf32, #tpu.memory_space<vmem>>, %arg3: memref<32x50xf32, #tpu.memory_space<vmem>>, %arg4: memref<1x50xf32, #tpu.memory_space<vmem>>, %arg5: memref<16x50xf32, #tpu.memory_space<vmem>>) attributes {dimension_semantics = [#tpu.dimension_semantics<parallel>, #tpu.dimension_semantics<parallel>], iteration_bounds = array<i64: 1, 1>, scalar_prefetch = 0 : i64, scratch_operands = 0 : i64, tpu.core_type = #tpu.core_type<tc>, window_params = [{transform_indices = @transform_0, window_bounds = array<i64: 16, 32>}, {transform_indices = @transform_1, window_bounds = array<i64: 32, 50>}, {transform_indices = @transform_2, window_bounds = array<i64: 1, 50>}, {transform_indices = @transform_3, window_bounds = array<i64: 16, 50>}]} {
    %c0 = arith.constant 0 : index
    %c0_0 = arith.constant 0 : index
    %0 = vector.load %arg2[%c0, %c0_0] : memref<16x32xf32, #tpu.memory_space<vmem>>, vector<16x32xf32>
    %c0_1 = arith.constant 0 : index
    %c0_2 = arith.constant 0 : index
    %1 = vector.load %arg3[%c0_1, %c0_2] : memref<32x50xf32, #tpu.memory_space<vmem>>, vector<32x50xf32>
    %cst = arith.constant dense<0.000000e+00> : vector<16x50xf32>
    %2 = tpu.matmul %0, %1, %cst {dimension_numbers = #tpu.dot_dimension_numbers<[1], [0], [0], [1], [0, 0, 1, 1], [], []>} : vector<16x32xf32>, vector<32x50xf32>, vector<16x50xf32> -> vector<16x50xf32>
    %c0_3 = arith.constant 0 : index
    %c0_4 = arith.constant 0 : index
    %3 = vector.load %arg4[%c0_3, %c0_4] : memref<1x50xf32, #tpu.memory_space<vmem>>, vector<1x50xf32>
    %4 = vector.broadcast %3 : vector<1x50xf32> to vector<16x50xf32>
    %5 = arith.addf %2, %4 : vector<16x50xf32>
    %c0_5 = arith.constant 0 : index
    %c0_6 = arith.constant 0 : index
    %6 = vector.load %arg5[%c0_5, %c0_6] : memref<16x50xf32, #tpu.memory_space<vmem>>, vector<16x50xf32>
    tpu.vector_store %arg5[%c0_5, %c0_6], %5 {strides = array<i32>} : memref<16x50xf32, #tpu.memory_space<vmem>>, vector<16x50xf32>,
    return
  }
  func.func @transform_0(%arg0: i32, %arg1: i32) -> (i32, i32) {
    %c0_i32 = arith.constant 0 : i32
    %c0_i32_0 = arith.constant 0 : i32
    return %arg0, %c0_i32 : i32, i32
  }
  func.func @transform_1(%arg0: i32, %arg1: i32) -> (i32, i32) {
    %c0_i32 = arith.constant 0 : i32
    %c0_i32_0 = arith.constant 0 : i32
    return %c0_i32, %arg1 : i32, i32
  }
  func.func @transform_2(%arg0: i32, %arg1: i32) -> (i32, i32) {
    %c0_i32 = arith.constant 0 : i32
    %c0_i32_0 = arith.constant 0 : i32
    return %c0_i32, %arg1 : i32, i32
  }
  func.func @transform_3(%arg0: i32, %arg1: i32) -> (i32, i32) {
    %c0_i32 = arith.constant 0 : i32
    return %arg0, %arg1 : i32, i32
  }
}

</mosaic_0001>

<llo_original>
// kernel: transformer_encoder_decoder.27
$region0: #{transformer_encoder_decoder.27}
  #allocation0 [shape = 'u32[]', space=smem, size = 0x4, offset = 0x4, fixed_abs, tag = 'smem constant byte address 0x4 - core index']
  #allocation1 [shape = 'u32[144,128]{1,0:T(1,128)}', space=vmem, size = 0x12000, scoped, tag = 'internal scratch']
  %s0 = inlined_call_operand.vmem [shape: f32[16,32], index: 0, kind: input, shape index: {}]
  %s1 = inlined_call_operand.vmem [shape: f32[32,96], index: 1, kind: input, shape index: {}]
  %s2 = inlined_call_operand.vmem [shape: f32[1,96], index: 2, kind: input, shape index: {}]
  %s3 = inlined_call_operand.vmem [shape: f32[16,32], index: 3, kind: output, shape index: {0}]
  %s4 = inlined_call_operand.vmem [shape: f32[16,32], index: 4, kind: output, shape index: {1}]
  %s5 = inlined_call_operand.vmem [shape: f32[16,32], index: 5, kind: output, shape index: {2}]
  %6 = xla_tuple %s3, %s4, %s5
  %s7 = sld [smem:[#allocation0]]
  $region38: #{transformer_encoder_decoder.27} parent=0
    _
  %s9 = ssub.s32 1, %s7
  %s10 = scalar_select 0, %s9, %s7
  // Predicated region
  $region2: #{transformer_encoder_decoder.27} parent=0 // pred_check
    _
  $region3: #{transformer_encoder_decoder.27} parent=0 // pred_check_branch
    %12 = sbr.rel (0) target = $region5
  $region4: #{transformer_encoder_decoder.27} parent=0 // pred_region
    _
  $region5: #{transformer_encoder_decoder.27} parent=0 // pred_fallthru
    _
  // Predicated region
  $region6: #{transformer_encoder_decoder.27} parent=0 // pred_check
    _
  $region7: #{transformer_encoder_decoder.27} parent=0 // pred_check_branch
    %14 = sbr.rel (0) target = $region9
  $region8: #{transformer_encoder_decoder.27} parent=0 // pred_region
    _
  $region9: #{transformer_encoder_decoder.27} parent=0 // pred_fallthru
    _
  // Predicated region
  $region10: #{transformer_encoder_decoder.27} parent=0 // pred_check
    _
  $region11: #{transformer_encoder_decoder.27} parent=0 // pred_check_branch
    %16 = sbr.rel (0) target = $region13
  $region12: #{transformer_encoder_decoder.27} parent=0 // pred_region
    _
  $region13: #{transformer_encoder_decoder.27} parent=0 // pred_fallthru
    _
  %v17 = vld [vmem:[%s0] sm:$0xff]
  %v18 = vld [vmem:[%s0 + $0x8] sm:$0xff]
  %v19 = vld [vmem:[%s1] sm:$0xff]
  %v20 = vld [vmem:[%s1 + $0x8] sm:$0xff]
  %v21 = vld [vmem:[%s1 + $0x10] sm:$0xff]
  %v22 = vld [vmem:[%s1 + $0x18] sm:$0xff]
  %v23 = vld [vmem:[%s2] sm:$0x1]
  %v25 = vlaneseq
  %v26 = vshrl.u32 %v25, 7
  %v27 = vsub.s32 0, %v26
  %v28 = vrot.slane %v23, %v27
  %vm30 = vcmask 261120
  %v32 = vsel %vm30, %v17, 0
  %v35 = vsel %vm30, %v18, 0
  %37 = vmatprep.subr.mxu0 0.0
  %38 = vmatpush1.msra.mxu0 0.0
  %39 = vmatprep.subr.mxu0 0.0
  %40 = vmatpush1.msra.mxu0 0.0
  %41 = vmatprep.subr.mxu0 0.0
  %42 = vmatpush1.msra.mxu0 0.0
  %43 = vmatprep.subr.mxu0 0.0
  %44 = vmatpush1.msra.mxu0 0.0
  %45 = vmatprep.subr.mxu0 0.0
  %46 = vmatpush1.msra.mxu0 0.0
  %47 = vmatprep.subr.mxu0 0.0
  %48 = vmatpush1.msra.mxu0 0.0
  %49 = vmatprep.subr.mxu0 0.0
  %50 = vmatpush1.msra.mxu0 0.0
  %51 = vmatprep.subr.mxu0 0.0
  %52 = vmatpush1.msra.mxu0 0.0
  %53 = vmatprep.subr.mxu0 0.0
  %54 = vmatpush1.msra.mxu0 0.0
  %55 = vmatprep.subr.mxu0 0.0
  %56 = vmatpush1.msra.mxu0 0.0
  %57 = vmatprep.subr.mxu0 0.0
  %58 = vmatpush1.msra.mxu0 0.0
  %59 = vmatprep.subr.mxu0 0.0
  %60 = vmatpush1.msra.mxu0 0.0
  %61 = vmatprep.subr.mxu0 0.0
  %62 = vmatpush1.msra.mxu0 %v22
  %63 = vmatprep.subr.mxu0 0.0
  %64 = vmatpush1.msra.mxu0 %v21
  %65 = vmatprep.subr.mxu0 0.0
  %66 = vmatpush1.msra.mxu0 %v20
  %67 = vmatprep.subr.mxu0 0.0
  %68 = vmatpush1.msra.mxu0 %v19
  %69 = vmatprep.subr.mxu0 0.0
  %70 = vmatpush2.msra.mxu0 0.0
  %71 = vmatprep.subr.mxu0 0.0
  %72 = vmatpush2.msra.mxu0 0.0
  %73 = vmatprep.subr.mxu0 0.0
  %74 = vmatpush2.msra.mxu0 0.0
  %75 = vmatprep.subr.mxu0 0.0
  %76 = vmatpush2.msra.mxu0 0.0
  %77 = vmatprep.subr.mxu0 0.0
  %78 = vmatpush2.msra.mxu0 0.0
  %79 = vmatprep.subr.mxu0 0.0
  %80 = vmatpush2.msra.mxu0 0.0
  %81 = vmatprep.subr.mxu0 0.0
  %82 = vmatpush2.msra.mxu0 0.0
  %83 = vmatprep.subr.mxu0 0.0
  %84 = vmatpush2.msra.mxu0 0.0
  %85 = vmatprep.subr.mxu0 0.0
  %86 = vmatpush2.msra.mxu0 0.0
  %87 = vmatprep.subr.mxu0 0.0
  %88 = vmatpush2.msra.mxu0 0.0
  %89 = vmatprep.subr.mxu0 0.0
  %90 = vmatpush2.msra.mxu0 0.0
  %91 = vmatprep.subr.mxu0 0.0
  %92 = vmatpush2.msra.mxu0 0.0
  %93 = vmatprep.subr.mxu0 0.0
  %94 = vmatpush2.msra.mxu0 0.0
  %95 = vmatprep.subr.mxu0 0.0
  %96 = vmatpush2.msra.mxu0 0.0
  %97 = vmatprep.subr.mxu0 0.0
  %98 = vmatpush2.msra.mxu0 0.0
  %99 = vmatprep.subr.mxu0 0.0
  %100 = vmatpush2.msra.mxu0 0.0
  %101 = vmatprep.mubr.f32.mxu0 0.0
  %102 = vmatmul.mubr.f32.gmra.mxu0 %v32
  %v103 = vpop.f32.mrf.mxu0
  %v104 = vadd.f32 %v28, %v103
  %v105 = vpop.f32.mrf.mxu0
  %106 = vmatprep.mubr.f32.mxu0 0.0
  %107 = vmatmul.mubr.f32.gmra.mxu0 %v35
  %v108 = vpop.f32.mrf.mxu0
  %v109 = vadd.f32 %v28, %v108
  %v110 = vpop.f32.mrf.mxu0
  %111 = vdwg.mxu0
  %112 = vst.msk [vmem:[%s3] sm:$0xff] %vm30, %v104
  %113 = vst.msk [vmem:[%s3 + $0x8] sm:$0xff] %vm30, %v109
  %116 = vrot.lane.b32.xlu0 %v104, 96
  %v117 = vpop.permute.xlu0 %116
  %118 = vrot.lane.b32.xlu0 %v109, 96
  %v119 = vpop.permute.xlu0 %118
  %122 = vst.msk [vmem:[%s4] sm:$0xff] %vm30, %v117
  %123 = vst.msk [vmem:[%s4 + $0x8] sm:$0xff] %vm30, %v119
  %124 = vrot.lane.b32.xlu0 %v104, 64
  %v125 = vpop.permute.xlu0 %124
  %126 = vrot.lane.b32.xlu0 %v109, 64
  %v127 = vpop.permute.xlu0 %126
  %130 = vst.msk [vmem:[%s5] sm:$0xff] %vm30, %v125
  %131 = vst.msk [vmem:[%s5 + $0x8] sm:$0xff] %vm30, %v127
  // Predicated region
  $region14: #{transformer_encoder_decoder.27} parent=0 // pred_check
    _
  $region15: #{transformer_encoder_decoder.27} parent=0 // pred_check_branch
    %133 = sbr.rel (0) target = $region17
  $region16: #{transformer_encoder_decoder.27} parent=0 // pred_region
    _
  $region17: #{transformer_encoder_decoder.27} parent=0 // pred_fallthru
    _
  // Predicated region
  $region18: #{transformer_encoder_decoder.27} parent=0 // pred_check
    _
  $region19: #{transformer_encoder_decoder.27} parent=0 // pred_check_branch
    %135 = sbr.rel (0) target = $region21
  $region20: #{transformer_encoder_decoder.27} parent=0 // pred_region
    _
  $region21: #{transformer_encoder_decoder.27} parent=0 // pred_fallthru
    _
  // Predicated region
  $region22: #{transformer_encoder_decoder.27} parent=0 // pred_check
    _
  $region23: #{transformer_encoder_decoder.27} parent=0 // pred_check_branch
    %137 = sbr.rel (0) target = $region25
  $region24: #{transformer_encoder_decoder.27} parent=0 // pred_region
    _
  $region25: #{transformer_encoder_decoder.27} parent=0 // pred_fallthru
    _
  // Predicated region
  $region26: #{transformer_encoder_decoder.27} parent=0 // pred_check
    _
  $region27: #{transformer_encoder_decoder.27} parent=0 // pred_check_branch
    %139 = sbr.rel (0) target = $region29
  $region28: #{transformer_encoder_decoder.27} parent=0 // pred_region
    _
  $region29: #{transformer_encoder_decoder.27} parent=0 // pred_fallthru
    _
  // Predicated region
  $region30: #{transformer_encoder_decoder.27} parent=0 // pred_check
    _
  $region31: #{transformer_encoder_decoder.27} parent=0 // pred_check_branch
    %141 = sbr.rel (0) target = $region33
  $region32: #{transformer_encoder_decoder.27} parent=0 // pred_region
    _
  $region33: #{transformer_encoder_decoder.27} parent=0 // pred_fallthru
    _
  // Predicated region
  $region34: #{transformer_encoder_decoder.27} parent=0 // pred_check
    _
  $region35: #{transformer_encoder_decoder.27} parent=0 // pred_check_branch
    %143 = sbr.rel (0) target = $region37
  $region36: #{transformer_encoder_decoder.27} parent=0 // pred_region
    _
  $region37: #{transformer_encoder_decoder.27} parent=0 // pred_fallthru
    _

// kernel: transformer_encoder_decoder.29
$region0: #{transformer_encoder_decoder.29}
  #allocation0 [shape = 'u32[]', space=smem, size = 0x4, offset = 0x4, fixed_abs, tag = 'smem constant byte address 0x4 - core index']
  #allocation1 [shape = 'u32[144,128]{1,0:T(1,128)}', space=vmem, size = 0x12000, scoped, tag = 'internal scratch']
  %s0 = inlined_call_operand.vmem [shape: f32[16,32], index: 0, kind: input, shape index: {}]
  %s1 = inlined_call_operand.vmem [shape: f32[32,32], index: 1, kind: input, shape index: {}]
  %s2 = inlined_call_operand.vmem [shape: f32[1,32], index: 2, kind: input, shape index: {}]
  %s3 = inlined_call_operand.vmem [shape: f32[16,32], index: 3, kind: input, shape index: {}]
  %s4 = inlined_call_operand.vmem [shape: f32[1,32], index: 4, kind: input, shape index: {}]
  %s5 = inlined_call_operand.vmem [shape: f32[1,32], index: 5, kind: input, shape index: {}]
  %s6 = inlined_call_operand.vmem [shape: f32[16,32], index: 6, kind: output, shape index: {}]
  %s7 = sld [smem:[#allocation0]]
  $region34: #{transformer_encoder_decoder.29} parent=0
    _
  %s9 = ssub.s32 1, %s7
  %s10 = scalar_select 0, %s9, %s7
  // Predicated region
  $region2: #{transformer_encoder_decoder.29} parent=0 // pred_check
    _
  $region3: #{transformer_encoder_decoder.29} parent=0 // pred_check_branch
    %12 = sbr.rel (0) target = $region5
  $region4: #{transformer_encoder_decoder.29} parent=0 // pred_region
    _
  $region5: #{transformer_encoder_decoder.29} parent=0 // pred_fallthru
    _
  // Predicated region
  $region6: #{transformer_encoder_decoder.29} parent=0 // pred_check
    _
  $region7: #{transformer_encoder_decoder.29} parent=0 // pred_check_branch
    %14 = sbr.rel (0) target = $region9
  $region8: #{transformer_encoder_decoder.29} parent=0 // pred_region
    _
  $region9: #{transformer_encoder_decoder.29} parent=0 // pred_fallthru
    _
  // Predicated region
  $region10: #{transformer_encoder_decoder.29} parent=0 // pred_check
    _
  $region11: #{transformer_encoder_decoder.29} parent=0 // pred_check_branch
    %16 = sbr.rel (0) target = $region13
  $region12: #{transformer_encoder_decoder.29} parent=0 // pred_region
    _
  $region13: #{transformer_encoder_decoder.29} parent=0 // pred_fallthru
    _
  // Predicated region
  $region14: #{transformer_encoder_decoder.29} parent=0 // pred_check
    _
  $region15: #{transformer_encoder_decoder.29} parent=0 // pred_check_branch
    %18 = sbr.rel (0) target = $region17
  $region16: #{transformer_encoder_decoder.29} parent=0 // pred_region
    _
  $region17: #{transformer_encoder_decoder.29} parent=0 // pred_fallthru
    _
  // Predicated region
  $region18: #{transformer_encoder_decoder.29} parent=0 // pred_check
    _
  $region19: #{transformer_encoder_decoder.29} parent=0 // pred_check_branch
    %20 = sbr.rel (0) target = $region21
  $region20: #{transformer_encoder_decoder.29} parent=0 // pred_region
    _
  $region21: #{transformer_encoder_decoder.29} parent=0 // pred_fallthru
    _
  // Predicated region
  $region22: #{transformer_encoder_decoder.29} parent=0 // pred_check
    _
  $region23: #{transformer_encoder_decoder.29} parent=0 // pred_check_branch
    %22 = sbr.rel (0) target = $region25
  $region24: #{transformer_encoder_decoder.29} parent=0 // pred_region
    _
  $region25: #{transformer_encoder_decoder.29} parent=0 // pred_fallthru
    _
  %v23 = vld [vmem:[%s0] sm:$0xff]
  %v24 = vld [vmem:[%s0 + $0x8] sm:$0xff]
  %v25 = vld [vmem:[%s1] sm:$0xff]
  %v26 = vld [vmem:[%s1 + $0x8] sm:$0xff]
  %v27 = vld [vmem:[%s1 + $0x10] sm:$0xff]
  %v28 = vld [vmem:[%s1 + $0x18] sm:$0xff]
  %v29 = vld [vmem:[%s2] sm:$0x1]
  %v31 = vlaneseq
  %v32 = vshrl.u32 %v31, 7
  %v33 = vsub.s32 0, %v32
  %v34 = vrot.slane %v29, %v33
  %vm36 = vcmask 261120
  %v38 = vsel %vm36, %v23, 0
  %v41 = vsel %vm36, %v24, 0
  %43 = vmatprep.subr.mxu0 0.0
  %44 = vmatpush1.msra.mxu0 0.0
  %45 = vmatprep.subr.mxu0 0.0
  %46 = vmatpush1.msra.mxu0 0.0
  %47 = vmatprep.subr.mxu0 0.0
  %48 = vmatpush1.msra.mxu0 0.0
  %49 = vmatprep.subr.mxu0 0.0
  %50 = vmatpush1.msra.mxu0 0.0
  %51 = vmatprep.subr.mxu0 0.0
  %52 = vmatpush1.msra.mxu0 0.0
  %53 = vmatprep.subr.mxu0 0.0
  %54 = vmatpush1.msra.mxu0 0.0
  %55 = vmatprep.subr.mxu0 0.0
  %56 = vmatpush1.msra.mxu0 0.0
  %57 = vmatprep.subr.mxu0 0.0
  %58 = vmatpush1.msra.mxu0 0.0
  %59 = vmatprep.subr.mxu0 0.0
  %60 = vmatpush1.msra.mxu0 0.0
  %61 = vmatprep.subr.mxu0 0.0
  %62 = vmatpush1.msra.mxu0 0.0
  %63 = vmatprep.subr.mxu0 0.0
  %64 = vmatpush1.msra.mxu0 0.0
  %65 = vmatprep.subr.mxu0 0.0
  %66 = vmatpush1.msra.mxu0 0.0
  %67 = vmatprep.subr.mxu0 0.0
  %68 = vmatpush1.msra.mxu0 %v28
  %69 = vmatprep.subr.mxu0 0.0
  %70 = vmatpush1.msra.mxu0 %v27
  %71 = vmatprep.subr.mxu0 0.0
  %72 = vmatpush1.msra.mxu0 %v26
  %73 = vmatprep.subr.mxu0 0.0
  %74 = vmatpush1.msra.mxu0 %v25
  %75 = vmatprep.subr.mxu0 0.0
  %76 = vmatpush2.msra.mxu0 0.0
  %77 = vmatprep.subr.mxu0 0.0
  %78 = vmatpush2.msra.mxu0 0.0
  %79 = vmatprep.subr.mxu0 0.0
  %80 = vmatpush2.msra.mxu0 0.0
  %81 = vmatprep.subr.mxu0 0.0
  %82 = vmatpush2.msra.mxu0 0.0
  %83 = vmatprep.subr.mxu0 0.0
  %84 = vmatpush2.msra.mxu0 0.0
  %85 = vmatprep.subr.mxu0 0.0
  %86 = vmatpush2.msra.mxu0 0.0
  %87 = vmatprep.subr.mxu0 0.0
  %88 = vmatpush2.msra.mxu0 0.0
  %89 = vmatprep.subr.mxu0 0.0
  %90 = vmatpush2.msra.mxu0 0.0
  %91 = vmatprep.subr.mxu0 0.0
  %92 = vmatpush2.msra.mxu0 0.0
  %93 = vmatprep.subr.mxu0 0.0
  %94 = vmatpush2.msra.mxu0 0.0
  %95 = vmatprep.subr.mxu0 0.0
  %96 = vmatpush2.msra.mxu0 0.0
  %97 = vmatprep.subr.mxu0 0.0
  %98 = vmatpush2.msra.mxu0 0.0
  %99 = vmatprep.subr.mxu0 0.0
  %100 = vmatpush2.msra.mxu0 0.0
  %101 = vmatprep.subr.mxu0 0.0
  %102 = vmatpush2.msra.mxu0 0.0
  %103 = vmatprep.subr.mxu0 0.0
  %104 = vmatpush2.msra.mxu0 0.0
  %105 = vmatprep.subr.mxu0 0.0
  %106 = vmatpush2.msra.mxu0 0.0
  %107 = vmatprep.mubr.f32.mxu0 0.0
  %108 = vmatmul.mubr.f32.gmra.mxu0 %v38
  %v109 = vpop.f32.mrf.mxu0
  %v110 = vadd.f32 %v34, %v109
  %v111 = vpop.f32.mrf.mxu0
  %112 = vmatprep.mubr.f32.mxu0 0.0
  %113 = vmatmul.mubr.f32.gmra.mxu0 %v41
  %v114 = vpop.f32.mrf.mxu0
  %v115 = vadd.f32 %v34, %v114
  %v116 = vpop.f32.mrf.mxu0
  %117 = vdwg.mxu0
  %v118 = vld [vmem:[%s3] sm:$0xff]
  %v119 = vld [vmem:[%s3 + $0x8] sm:$0xff]
  %v120 = vadd.f32 %v110, %v118
  %v121 = vadd.f32 %v115, %v119
  %v122 = vsel %vm36, %v120, 0.0
  %123 = vadd.xlane.f32.xlu0 %v122
  %v124 = vpop.xlane.xlu0 %123
  %v125 = vsel %vm36, %v121, 0.0
  %126 = vadd.xlane.f32.xlu0 %v125
  %v127 = vpop.xlane.xlu0 %126
  %v128 = vrcp.pop 32.0
  %v129 = vmul.f32 %v124, %v128
  %v130 = vmul.f32 %v127, %v128
  %v131 = vsub.f32 %v120, %v129
  %v132 = vsub.f32 %v121, %v130
  %v133 = vmul.f32 %v131, %v131
  %v134 = vmul.f32 %v132, %v132
  %v135 = vsel %vm36, %v133, 0.0
  %136 = vadd.xlane.f32.xlu0 %v135
  %v137 = vpop.xlane.xlu0 %136
  %v138 = vsel %vm36, %v134, 0.0
  %139 = vadd.xlane.f32.xlu0 %v138
  %v140 = vpop.xlane.xlu0 %139
  %v141 = vmul.f32 %v137, %v128
  %v142 = vmul.f32 %v140, %v128
  %v143 = vadd.f32 %v141, 1e-05
  %v144 = vadd.f32 %v142, 1e-05
  %v145 = vrsqrt.pop %v143
  %v146 = vrsqrt.pop %v144
  %v147 = vmul.f32 %v131, %v145
  %v148 = vmul.f32 %v132, %v146
  %v149 = vld [vmem:[%s4] sm:$0x1]
  %v151 = vlaneseq
  %v152 = vshrl.u32 %v151, 7
  %v153 = vsub.s32 0, %v152
  %v154 = vrot.slane %v149, %v153
  %v156 = vmul.f32 %v147, %v154
  %v157 = vmul.f32 %v148, %v154
  %v158 = vld [vmem:[%s5] sm:$0x1]
  %v160 = vlaneseq
  %v161 = vshrl.u32 %v160, 7
  %v162 = vsub.s32 0, %v161
  %v163 = vrot.slane %v158, %v162
  %v165 = vadd.f32 %v156, %v163
  %v166 = vadd.f32 %v157, %v163
  %167 = vst.msk [vmem:[%s6] sm:$0xff] %vm36, %v165
  %168 = vst.msk [vmem:[%s6 + $0x8] sm:$0xff] %vm36, %v166
  // Predicated region
  $region26: #{transformer_encoder_decoder.29} parent=0 // pred_check
    _
  $region27: #{transformer_encoder_decoder.29} parent=0 // pred_check_branch
    %170 = sbr.rel (0) target = $region29
  $region28: #{transformer_encoder_decoder.29} parent=0 // pred_region
    _
  $region29: #{transformer_encoder_decoder.29} parent=0 // pred_fallthru
    _
  // Predicated region
  $region30: #{transformer_encoder_decoder.29} parent=0 // pred_check
    _
  $region31: #{transformer_encoder_decoder.29} parent=0 // pred_check_branch
    %172 = sbr.rel (0) target = $region33
  $region32: #{transformer_encoder_decoder.29} parent=0 // pred_region
    _
  $region33: #{transformer_encoder_decoder.29} parent=0 // pred_fallthru
    _

// kernel: transformer_encoder_decoder.30
$region0: #{transformer_encoder_decoder.30}
  #allocation0 [shape = 'u32[]', space=smem, size = 0x4, offset = 0x4, fixed_abs, tag = 'smem constant byte address 0x4 - core index']
  #allocation1 [shape = 'u32[144,128]{1,0:T(1,128)}', space=vmem, size = 0x12000, scoped, tag = 'internal scratch']
  %s0 = inlined_call_operand.vmem [shape: f32[16,32], index: 0, kind: input, shape index: {}]
  %s1 = inlined_call_operand.vmem [shape: f32[32,64], index: 1, kind: input, shape index: {}]
  %s2 = inlined_call_operand.vmem [shape: f32[1,64], index: 2, kind: input, shape index: {}]
  %s3 = inlined_call_operand.vmem [shape: f32[64,32], index: 3, kind: input, shape index: {}]
  %s4 = inlined_call_operand.vmem [shape: f32[1,32], index: 4, kind: input, shape index: {}]
  %s5 = inlined_call_operand.vmem [shape: f32[1,32], index: 5, kind: input, shape index: {}]
  %s6 = inlined_call_operand.vmem [shape: f32[1,32], index: 6, kind: input, shape index: {}]
  %s7 = inlined_call_operand.vmem [shape: f32[16,32], index: 7, kind: output, shape index: {}]
  %s8 = sld [smem:[#allocation0]]
  $region38: #{transformer_encoder_decoder.30} parent=0
    _
  %s10 = ssub.s32 1, %s8
  %s11 = scalar_select 0, %s10, %s8
  // Predicated region
  $region2: #{transformer_encoder_decoder.30} parent=0 // pred_check
    _
  $region3: #{transformer_encoder_decoder.30} parent=0 // pred_check_branch
    %13 = sbr.rel (0) target = $region5
  $region4: #{transformer_encoder_decoder.30} parent=0 // pred_region
    _
  $region5: #{transformer_encoder_decoder.30} parent=0 // pred_fallthru
    _
  // Predicated region
  $region6: #{transformer_encoder_decoder.30} parent=0 // pred_check
    _
  $region7: #{transformer_encoder_decoder.30} parent=0 // pred_check_branch
    %15 = sbr.rel (0) target = $region9
  $region8: #{transformer_encoder_decoder.30} parent=0 // pred_region
    _
  $region9: #{transformer_encoder_decoder.30} parent=0 // pred_fallthru
    _
  // Predicated region
  $region10: #{transformer_encoder_decoder.30} parent=0 // pred_check
    _
  $region11: #{transformer_encoder_decoder.30} parent=0 // pred_check_branch
    %17 = sbr.rel (0) target = $region13
  $region12: #{transformer_encoder_decoder.30} parent=0 // pred_region
    _
  $region13: #{transformer_encoder_decoder.30} parent=0 // pred_fallthru
    _
  // Predicated region
  $region14: #{transformer_encoder_decoder.30} parent=0 // pred_check
    _
  $region15: #{transformer_encoder_decoder.30} parent=0 // pred_check_branch
    %19 = sbr.rel (0) target = $region17
  $region16: #{transformer_encoder_decoder.30} parent=0 // pred_region
    _
  $region17: #{transformer_encoder_decoder.30} parent=0 // pred_fallthru
    _
  // Predicated region
  $region18: #{transformer_encoder_decoder.30} parent=0 // pred_check
    _
  $region19: #{transformer_encoder_decoder.30} parent=0 // pred_check_branch
    %21 = sbr.rel (0) target = $region21
  $region20: #{transformer_encoder_decoder.30} parent=0 // pred_region
    _
  $region21: #{transformer_encoder_decoder.30} parent=0 // pred_fallthru
    _
  // Predicated region
  $region22: #{transformer_encoder_decoder.30} parent=0 // pred_check
    _
  $region23: #{transformer_encoder_decoder.30} parent=0 // pred_check_branch
    %23 = sbr.rel (0) target = $region25
  $region24: #{transformer_encoder_decoder.30} parent=0 // pred_region
    _
  $region25: #{transformer_encoder_decoder.30} parent=0 // pred_fallthru
    _
  // Predicated region
  $region26: #{transformer_encoder_decoder.30} parent=0 // pred_check
    _
  $region27: #{transformer_encoder_decoder.30} parent=0 // pred_check_branch
    %25 = sbr.rel (0) target = $region29
  $region28: #{transformer_encoder_decoder.30} parent=0 // pred_region
    _
  $region29: #{transformer_encoder_decoder.30} parent=0 // pred_fallthru
    _
  %v26 = vld [vmem:[%s0] sm:$0xff]
  %v27 = vld [vmem:[%s0 + $0x8] sm:$0xff]
  %v28 = vld [vmem:[%s1] sm:$0xff]
  %v29 = vld [vmem:[%s1 + $0x8] sm:$0xff]
  %v30 = vld [vmem:[%s1 + $0x10] sm:$0xff]
  %v31 = vld [vmem:[%s1 + $0x18] sm:$0xff]
  %v32 = vld [vmem:[%s2] sm:$0x1]
  %v34 = vlaneseq
  %v35 = vshrl.u32 %v34, 7
  %v36 = vsub.s32 0, %v35
  %v37 = vrot.slane %v32, %v36
  %vm39 = vcmask 261120
  %v41 = vsel %vm39, %v26, 0
  %v44 = vsel %vm39, %v27, 0
  %46 = vmatprep.subr.mxu0 0.0
  %47 = vmatpush1.msra.mxu0 0.0
  %48 = vmatprep.subr.mxu0 0.0
  %49 = vmatpush1.msra.mxu0 0.0
  %50 = vmatprep.subr.mxu0 0.0
  %51 = vmatpush1.msra.mxu0 0.0
  %52 = vmatprep.subr.mxu0 0.0
  %53 = vmatpush1.msra.mxu0 0.0
  %54 = vmatprep.subr.mxu0 0.0
  %55 = vmatpush1.msra.mxu0 0.0
  %56 = vmatprep.subr.mxu0 0.0
  %57 = vmatpush1.msra.mxu0 0.0
  %58 = vmatprep.subr.mxu0 0.0
  %59 = vmatpush1.msra.mxu0 0.0
  %60 = vmatprep.subr.mxu0 0.0
  %61 = vmatpush1.msra.mxu0 0.0
  %62 = vmatprep.subr.mxu0 0.0
  %63 = vmatpush1.msra.mxu0 0.0
  %64 = vmatprep.subr.mxu0 0.0
  %65 = vmatpush1.msra.mxu0 0.0
  %66 = vmatprep.subr.mxu0 0.0
  %67 = vmatpush1.msra.mxu0 0.0
  %68 = vmatprep.subr.mxu0 0.0
  %69 = vmatpush1.msra.mxu0 0.0
  %70 = vmatprep.subr.mxu0 0.0
  %71 = vmatpush1.msra.mxu0 %v31
  %72 = vmatprep.subr.mxu0 0.0
  %73 = vmatpush1.msra.mxu0 %v30
  %74 = vmatprep.subr.mxu0 0.0
  %75 = vmatpush1.msra.mxu0 %v29
  %76 = vmatprep.subr.mxu0 0.0
  %77 = vmatpush1.msra.mxu0 %v28
  %78 = vmatprep.subr.mxu0 0.0
  %79 = vmatpush2.msra.mxu0 0.0
  %80 = vmatprep.subr.mxu0 0.0
  %81 = vmatpush2.msra.mxu0 0.0
  %82 = vmatprep.subr.mxu0 0.0
  %83 = vmatpush2.msra.mxu0 0.0
  %84 = vmatprep.subr.mxu0 0.0
  %85 = vmatpush2.msra.mxu0 0.0
  %86 = vmatprep.subr.mxu0 0.0
  %87 = vmatpush2.msra.mxu0 0.0
  %88 = vmatprep.subr.mxu0 0.0
  %89 = vmatpush2.msra.mxu0 0.0
  %90 = vmatprep.subr.mxu0 0.0
  %91 = vmatpush2.msra.mxu0 0.0
  %92 = vmatprep.subr.mxu0 0.0
  %93 = vmatpush2.msra.mxu0 0.0
  %94 = vmatprep.subr.mxu0 0.0
  %95 = vmatpush2.msra.mxu0 0.0
  %96 = vmatprep.subr.mxu0 0.0
  %97 = vmatpush2.msra.mxu0 0.0
  %98 = vmatprep.subr.mxu0 0.0
  %99 = vmatpush2.msra.mxu0 0.0
  %100 = vmatprep.subr.mxu0 0.0
  %101 = vmatpush2.msra.mxu0 0.0
  %102 = vmatprep.subr.mxu0 0.0
  %103 = vmatpush2.msra.mxu0 0.0
  %104 = vmatprep.subr.mxu0 0.0
  %105 = vmatpush2.msra.mxu0 0.0
  %106 = vmatprep.subr.mxu0 0.0
  %107 = vmatpush2.msra.mxu0 0.0
  %108 = vmatprep.subr.mxu0 0.0
  %109 = vmatpush2.msra.mxu0 0.0
  %110 = vmatprep.mubr.f32.mxu0 0.0
  %111 = vmatmul.mubr.f32.gmra.mxu0 %v41
  %v112 = vpop.f32.mrf.mxu0
  %v113 = vadd.f32 %v37, %v112
  %v114 = vpop.f32.mrf.mxu0
  %115 = vmatprep.mubr.f32.mxu0 0.0
  %116 = vmatmul.mubr.f32.gmra.mxu0 %v44
  %v117 = vpop.f32.mrf.mxu0
  %v118 = vadd.f32 %v37, %v117
  %v119 = vpop.f32.mrf.mxu0
  %120 = vdwg.mxu0
  %v121 = vmax.f32 %v113, 0.0
  %v122 = vmax.f32 %v118, 0.0
  %v123 = vld [vmem:[%s3] sm:$0xff]
  %v124 = vld [vmem:[%s3 + $0x8] sm:$0xff]
  %v125 = vld [vmem:[%s3 + $0x10] sm:$0xff]
  %v126 = vld [vmem:[%s3 + $0x18] sm:$0xff]
  %v127 = vld [vmem:[%s3 + $0x20] sm:$0xff]
  %v128 = vld [vmem:[%s3 + $0x28] sm:$0xff]
  %v129 = vld [vmem:[%s3 + $0x30] sm:$0xff]
  %v130 = vld [vmem:[%s3 + $0x38] sm:$0xff]
  %v131 = vld [vmem:[%s4] sm:$0x1]
  %v133 = vlaneseq
  %v134 = vshrl.u32 %v133, 7
  %v135 = vsub.s32 0, %v134
  %v136 = vrot.slane %v131, %v135
  %vm138 = vcmask 523264
  %v140 = vsel %vm138, %v121, 0
  %v143 = vsel %vm138, %v122, 0
  %145 = vmatprep.subr.mxu0 0.0
  %146 = vmatpush1.msra.mxu0 0.0
  %147 = vmatprep.subr.mxu0 0.0
  %148 = vmatpush1.msra.mxu0 0.0
  %149 = vmatprep.subr.mxu0 0.0
  %150 = vmatpush1.msra.mxu0 0.0
  %151 = vmatprep.subr.mxu0 0.0
  %152 = vmatpush1.msra.mxu0 0.0
  %153 = vmatprep.subr.mxu0 0.0
  %154 = vmatpush1.msra.mxu0 0.0
  %155 = vmatprep.subr.mxu0 0.0
  %156 = vmatpush1.msra.mxu0 0.0
  %157 = vmatprep.subr.mxu0 0.0
  %158 = vmatpush1.msra.mxu0 0.0
  %159 = vmatprep.subr.mxu0 0.0
  %160 = vmatpush1.msra.mxu0 0.0
  %161 = vmatprep.subr.mxu0 0.0
  %162 = vmatpush1.msra.mxu0 %v130
  %163 = vmatprep.subr.mxu0 0.0
  %164 = vmatpush1.msra.mxu0 %v129
  %165 = vmatprep.subr.mxu0 0.0
  %166 = vmatpush1.msra.mxu0 %v128
  %167 = vmatprep.subr.mxu0 0.0
  %168 = vmatpush1.msra.mxu0 %v127
  %169 = vmatprep.subr.mxu0 0.0
  %170 = vmatpush1.msra.mxu0 %v126
  %171 = vmatprep.subr.mxu0 0.0
  %172 = vmatpush1.msra.mxu0 %v125
  %173 = vmatprep.subr.mxu0 0.0
  %174 = vmatpush1.msra.mxu0 %v124
  %175 = vmatprep.subr.mxu0 0.0
  %176 = vmatpush1.msra.mxu0 %v123
  %177 = vmatprep.subr.mxu0 0.0
  %178 = vmatpush2.msra.mxu0 0.0
  %179 = vmatprep.subr.mxu0 0.0
  %180 = vmatpush2.msra.mxu0 0.0
  %181 = vmatprep.subr.mxu0 0.0
  %182 = vmatpush2.msra.mxu0 0.0
  %183 = vmatprep.subr.mxu0 0.0
  %184 = vmatpush2.msra.mxu0 0.0
  %185 = vmatprep.subr.mxu0 0.0
  %186 = vmatpush2.msra.mxu0 0.0
  %187 = vmatprep.subr.mxu0 0.0
  %188 = vmatpush2.msra.mxu0 0.0
  %189 = vmatprep.subr.mxu0 0.0
  %190 = vmatpush2.msra.mxu0 0.0
  %191 = vmatprep.subr.mxu0 0.0
  %192 = vmatpush2.msra.mxu0 0.0
  %193 = vmatprep.subr.mxu0 0.0
  %194 = vmatpush2.msra.mxu0 0.0
  %195 = vmatprep.subr.mxu0 0.0
  %196 = vmatpush2.msra.mxu0 0.0
  %197 = vmatprep.subr.mxu0 0.0
  %198 = vmatpush2.msra.mxu0 0.0
  %199 = vmatprep.subr.mxu0 0.0
  %200 = vmatpush2.msra.mxu0 0.0
  %201 = vmatprep.subr.mxu0 0.0
  %202 = vmatpush2.msra.mxu0 0.0
  %203 = vmatprep.subr.mxu0 0.0
  %204 = vmatpush2.msra.mxu0 0.0
  %205 = vmatprep.subr.mxu0 0.0
  %206 = vmatpush2.msra.mxu0 0.0
  %207 = vmatprep.subr.mxu0 0.0
  %208 = vmatpush2.msra.mxu0 0.0
  %209 = vmatprep.mubr.f32.mxu0 0.0
  %210 = vmatmul.mubr.f32.gmra.mxu0 %v140
  %v211 = vpop.f32.mrf.mxu0
  %v212 = vadd.f32 %v136, %v211
  %v213 = vpop.f32.mrf.mxu0
  %214 = vmatprep.mubr.f32.mxu0 0.0
  %215 = vmatmul.mubr.f32.gmra.mxu0 %v143
  %v216 = vpop.f32.mrf.mxu0
  %v217 = vadd.f32 %v136, %v216
  %v218 = vpop.f32.mrf.mxu0
  %219 = vdwg.mxu0
  %v220 = vadd.f32 %v212, %v26
  %v221 = vadd.f32 %v217, %v27
  %v222 = vsel %vm39, %v220, 0.0
  %223 = vadd.xlane.f32.xlu0 %v222
  %v224 = vpop.xlane.xlu0 %223
  %v225 = vsel %vm39, %v221, 0.0
  %226 = vadd.xlane.f32.xlu0 %v225
  %v227 = vpop.xlane.xlu0 %226
  %v228 = vrcp.pop 32.0
  %v229 = vmul.f32 %v224, %v228
  %v230 = vmul.f32 %v227, %v228
  %v231 = vsub.f32 %v220, %v229
  %v232 = vsub.f32 %v221, %v230
  %v233 = vmul.f32 %v231, %v231
  %v234 = vmul.f32 %v232, %v232
  %v235 = vsel %vm39, %v233, 0.0
  %236 = vadd.xlane.f32.xlu0 %v235
  %v237 = vpop.xlane.xlu0 %236
  %v238 = vsel %vm39, %v234, 0.0
  %239 = vadd.xlane.f32.xlu0 %v238
  %v240 = vpop.xlane.xlu0 %239
  %v241 = vmul.f32 %v237, %v228
  %v242 = vmul.f32 %v240, %v228
  %v243 = vadd.f32 %v241, 1e-05
  %v244 = vadd.f32 %v242, 1e-05
  %v245 = vrsqrt.pop %v243
  %v246 = vrsqrt.pop %v244
  %v247 = vmul.f32 %v231, %v245
  %v248 = vmul.f32 %v232, %v246
  %v249 = vld [vmem:[%s5] sm:$0x1]
  %v251 = vlaneseq
  %v252 = vshrl.u32 %v251, 7
  %v253 = vsub.s32 0, %v252
  %v254 = vrot.slane %v249, %v253
  %v256 = vmul.f32 %v247, %v254
  %v257 = vmul.f32 %v248, %v254
  %v258 = vld [vmem:[%s6] sm:$0x1]
  %v260 = vlaneseq
  %v261 = vshrl.u32 %v260, 7
  %v262 = vsub.s32 0, %v261
  %v263 = vrot.slane %v258, %v262
  %v265 = vadd.f32 %v256, %v263
  %v266 = vadd.f32 %v257, %v263
  %267 = vst.msk [vmem:[%s7] sm:$0xff] %vm39, %v265
  %268 = vst.msk [vmem:[%s7 + $0x8] sm:$0xff] %vm39, %v266
  // Predicated region
  $region30: #{transformer_encoder_decoder.30} parent=0 // pred_check
    _
  $region31: #{transformer_encoder_decoder.30} parent=0 // pred_check_branch
    %270 = sbr.rel (0) target = $region33
  $region32: #{transformer_encoder_decoder.30} parent=0 // pred_region
    _
  $region33: #{transformer_encoder_decoder.30} parent=0 // pred_fallthru
    _
  // Predicated region
  $region34: #{transformer_encoder_decoder.30} parent=0 // pred_check
    _
  $region35: #{transformer_encoder_decoder.30} parent=0 // pred_check_branch
    %272 = sbr.rel (0) target = $region37
  $region36: #{transformer_encoder_decoder.30} parent=0 // pred_region
    _
  $region37: #{transformer_encoder_decoder.30} parent=0 // pred_fallthru
    _

// kernel: transformer_encoder_decoder.28
$region0: #{transformer_encoder_decoder.28}
  #allocation0 [shape = 'u32[]', space=smem, size = 0x4, offset = 0x4, fixed_abs, tag = 'smem constant byte address 0x4 - core index']
  #allocation1 [shape = 'u32[144,128]{1,0:T(1,128)}', space=vmem, size = 0x12000, scoped, tag = 'internal scratch']
  %s0 = inlined_call_operand.vmem [shape: f32[2,8,32], index: 0, kind: input, shape index: {}]
  %s1 = inlined_call_operand.vmem [shape: f32[2,8,32], index: 1, kind: input, shape index: {}]
  %s2 = inlined_call_operand.vmem [shape: f32[2,8,32], index: 2, kind: input, shape index: {}]
  %s3 = inlined_call_operand.vmem [shape: f32[2,8,32], index: 3, kind: output, shape index: {}]
  %s4 = sld [smem:[#allocation0]]
  $region45: #{transformer_encoder_decoder.28} parent=0
    _
  %s6 = ssub.s32 1, %s4
  %s7 = scalar_select 0, %s6, %s4
  loop: start=0, step=1, limit=4
  $region2: #{transformer_encoder_decoder.28} parent=0 // loop_pre_header
    _
  $region3: #{transformer_encoder_decoder.28} parent=0 // loop_header
    %s9 = sphi 0, %s13
    %p10 = scmp.ge.s32.totalorder %s9, 4
    %s19 = sphi 0, %s21
    %s22 = sphi 0, %s19
    %s23 = sphi 0, %s22
    %s39 = sphi 0, %s23
    %s45 = sphi 0, %s47
    %s48 = sphi 0, %s45
    %s49 = sphi 0, %s48
    %s65 = sphi 0, %s49
    %s71 = sphi 0, %s73
    %s74 = sphi 0, %s71
    %s75 = sphi 0, %s74
    %s91 = sphi 0, %s75
    %s97 = sphi 0, %s99
    %s100 = sphi 0, %s97
    %s101 = sphi 0, %s100
    %s117 = sphi 0, %s101
  $region4: #{transformer_encoder_decoder.28} parent=0 // loop_header_branch
    %12 = sbr.rel (%p10) target = $region8
  $region5: #{transformer_encoder_decoder.28} parent=0 // loop_body
    %s14 = ssub.s32 %s9, 1
    %s15 = ssub.s32 %s9, 2
    %s16 = sadd.s32 %s9, 1
    %s17 = ssub.s32 %s9, %s16
    %p18 = scmp.eq.s32.totalorder %s17, 0
    %s20 = sadd.s32 %s19, 1
    %s21 = scalar_select %p18, %s19, %s20
    %p24 = pneg %p18
    %p25 = scmp.eq.s32.totalorder %s9, 1
    %p26 = por %p24, %p25
    %p27 = scmp.ne.s32.totalorder %s19, %s22
    %p28 = scmp.eq.s32.totalorder %s9, 0
    %p29 = por %p27, %p28
    %p30 = scmp.ne.s32.totalorder %s19, %s22
    %p31 = scmp.eq.s32.totalorder %s14, 1
    %p32 = por %p30, %p31
    %p33 = scmp.ne.s32.totalorder %s22, %s23
    %p34 = scmp.eq.s32.totalorder %s14, 0
    %p35 = por %p33, %p34
    %p36 = scmp.ne.s32.totalorder %s22, %s23
    %p37 = scmp.eq.s32.totalorder %s15, 1
    %p38 = por %p36, %p37
    %p40 = scmp.ne.s32.totalorder %s23, %s39
    %p41 = scmp.eq.s32.totalorder %s15, 0
    %p42 = por %p40, %p41
    %s43 = ssub.s32 %s9, %s16
    %p44 = scmp.eq.s32.totalorder %s43, 0
    %s46 = sadd.s32 %s45, 1
    %s47 = scalar_select %p44, %s45, %s46
    %p50 = pneg %p44
    %p51 = scmp.eq.s32.totalorder %s9, 1
    %p52 = por %p50, %p51
    %p53 = scmp.ne.s32.totalorder %s45, %s48
    %p54 = scmp.eq.s32.totalorder %s9, 0
    %p55 = por %p53, %p54
    %p56 = scmp.ne.s32.totalorder %s45, %s48
    %p57 = scmp.eq.s32.totalorder %s14, 1
    %p58 = por %p56, %p57
    %p59 = scmp.ne.s32.totalorder %s48, %s49
    %p60 = scmp.eq.s32.totalorder %s14, 0
    %p61 = por %p59, %p60
    %p62 = scmp.ne.s32.totalorder %s48, %s49
    %p63 = scmp.eq.s32.totalorder %s15, 1
    %p64 = por %p62, %p63
    %p66 = scmp.ne.s32.totalorder %s49, %s65
    %p67 = scmp.eq.s32.totalorder %s15, 0
    %p68 = por %p66, %p67
    %s69 = ssub.s32 %s9, %s16
    %p70 = scmp.eq.s32.totalorder %s69, 0
    %s72 = sadd.s32 %s71, 1
    %s73 = scalar_select %p70, %s71, %s72
    %p76 = pneg %p70
    %p77 = scmp.eq.s32.totalorder %s9, 1
    %p78 = por %p76, %p77
    %p79 = scmp.ne.s32.totalorder %s71, %s74
    %p80 = scmp.eq.s32.totalorder %s9, 0
    %p81 = por %p79, %p80
    %p82 = scmp.ne.s32.totalorder %s71, %s74
    %p83 = scmp.eq.s32.totalorder %s14, 1
    %p84 = por %p82, %p83
    %p85 = scmp.ne.s32.totalorder %s74, %s75
    %p86 = scmp.eq.s32.totalorder %s14, 0
    %p87 = por %p85, %p86
    %p88 = scmp.ne.s32.totalorder %s74, %s75
    %p89 = scmp.eq.s32.totalorder %s15, 1
    %p90 = por %p88, %p89
    %p92 = scmp.ne.s32.totalorder %s75, %s91
    %p93 = scmp.eq.s32.totalorder %s15, 0
    %p94 = por %p92, %p93
    %s95 = ssub.s32 %s9, %s16
    %p96 = scmp.eq.s32.totalorder %s95, 0
    %s98 = sadd.s32 %s97, 1
    %s99 = scalar_select %p96, %s97, %s98
    %p102 = pneg %p96
    %p103 = scmp.eq.s32.totalorder %s9, 1
    %p104 = por %p102, %p103
    %p105 = scmp.ne.s32.totalorder %s97, %s100
    %p106 = scmp.eq.s32.totalorder %s9, 0
    %p107 = por %p105, %p106
    %p108 = scmp.ne.s32.totalorder %s97, %s100
    %p109 = scmp.eq.s32.totalorder %s14, 1
    %p110 = por %p108, %p109
    %p111 = scmp.ne.s32.totalorder %s100, %s101
    %p112 = scmp.eq.s32.totalorder %s14, 0
    %p113 = por %p111, %p112
    %p114 = scmp.ne.s32.totalorder %s100, %s101
    %p115 = scmp.eq.s32.totalorder %s15, 1
    %p116 = por %p114, %p115
    %p118 = scmp.ne.s32.totalorder %s101, %s117
    %p119 = scmp.eq.s32.totalorder %s15, 0
    %p120 = por %p118, %p119
    %p121 = scmp.le.s32.totalorder 1, %s9
    %p122 = scmp.lt.s32.totalorder %s9, 3
    %p123 = pnand %p121, %p122
    %p124 = pneg %p123
    // Predicated region
    $region9: #{transformer_encoder_decoder.28} parent=5 // pred_check
      _
    $region10: #{transformer_encoder_decoder.28} parent=5 // pred_check_branch
      %126 = sbr.rel (%p123) target = $region12
    $region11: #{transformer_encoder_decoder.28} parent=5 // pred_region
      %s127 = ssub.s32 %s9, 1
    $region12: #{transformer_encoder_decoder.28} parent=5 // pred_fallthru
      _
    %p128 = scmp.lt.s32.totalorder %s9, 2
    // Predicated region
    $region13: #{transformer_encoder_decoder.28} parent=5 // pred_check
      %p129 = pneg %p128
    $region14: #{transformer_encoder_decoder.28} parent=5 // pred_check_branch
      %131 = sbr.rel (%p129) target = $region16
    $region15: #{transformer_encoder_decoder.28} parent=5 // pred_region
      // Predicated region
      $region17: #{transformer_encoder_decoder.28} parent=15 // pred_check
        %p132 = pneg %p29
      $region18: #{transformer_encoder_decoder.28} parent=15 // pred_check_branch
        %134 = sbr.rel (%p132) target = $region20
      $region19: #{transformer_encoder_decoder.28} parent=15 // pred_region
        %p135 = scmp.lt.s32.totalorder %s9, 1
        %s136 = scalar_select %p135, %s9, 1
        %s137 = smul.addr %s136, 8
        %s138 = scalar_lea.vmem %s0, %s137
      $region20: #{transformer_encoder_decoder.28} parent=15 // pred_fallthru
        _
      // Predicated region
      $region21: #{transformer_encoder_decoder.28} parent=15 // pred_check
        %p139 = pneg %p55
      $region22: #{transformer_encoder_decoder.28} parent=15 // pred_check_branch
        %141 = sbr.rel (%p139) target = $region24
      $region23: #{transformer_encoder_decoder.28} parent=15 // pred_region
        %p142 = scmp.lt.s32.totalorder %s9, 1
        %s143 = scalar_select %p142, %s9, 1
        %s144 = smul.addr %s143, 8
        %s145 = scalar_lea.vmem %s1, %s144
      $region24: #{transformer_encoder_decoder.28} parent=15 // pred_fallthru
        _
      // Predicated region
      $region25: #{transformer_encoder_decoder.28} parent=15 // pred_check
        %p146 = pneg %p81
      $region26: #{transformer_encoder_decoder.28} parent=15 // pred_check_branch
        %148 = sbr.rel (%p146) target = $region28
      $region27: #{transformer_encoder_decoder.28} parent=15 // pred_region
        %p149 = scmp.lt.s32.totalorder %s9, 1
        %s150 = scalar_select %p149, %s9, 1
        %s151 = smul.addr %s150, 8
        %s152 = scalar_lea.vmem %s2, %s151
      $region28: #{transformer_encoder_decoder.28} parent=15 // pred_fallthru
        _
    $region16: #{transformer_encoder_decoder.28} parent=5 // pred_fallthru
      _
    %p153 = scmp.le.s32.totalorder 1, %s9
    %p154 = scmp.lt.s32.totalorder %s9, 3
    %p155 = pnand %p153, %p154
    %p156 = pneg %p155
    // Predicated region
    $region29: #{transformer_encoder_decoder.28} parent=5 // pred_check
      _
    $region30: #{transformer_encoder_decoder.28} parent=5 // pred_check_branch
      %158 = sbr.rel (%p155) target = $region32
    $region31: #{transformer_encoder_decoder.28} parent=5 // pred_region
      %s159 = ssub.s32 %s9, 1
      %p160 = scmp.lt.s32.totalorder %s14, 1
      %s161 = scalar_select %p160, %s14, 1
      %s162 = smul.addr %s161, 8
      %s163 = scalar_lea.vmem %s0, %s162
      %p164 = pneg %p35
      %p165 = pneg %p32
      %p166 = scmp.lt.s32.totalorder %s14, 1
      %s167 = scalar_select %p166, %s14, 1
      %s168 = smul.addr %s167, 8
      %s169 = scalar_lea.vmem %s1, %s168
      %p170 = pneg %p61
      %p171 = pneg %p58
      %p172 = scmp.lt.s32.totalorder %s14, 1
      %s173 = scalar_select %p172, %s14, 1
      %s174 = smul.addr %s173, 8
      %s175 = scalar_lea.vmem %s2, %s174
      %p176 = pneg %p87
      %p177 = pneg %p84
      %p178 = pneg %p113
      %p179 = pneg %p110
      %p180 = scmp.lt.s32.totalorder %s14, 1
      %s181 = scalar_select %p180, %s14, 1
      %s182 = smul.addr %s181, 8
      %s183 = scalar_lea.vmem %s3, %s182
      %p184 = scmp.lt.s32.totalorder %s14, 1
      %s185 = scalar_select %p184, %s14, 1
      %s186 = smul.addr %s185, 8
      %s187 = scalar_lea.vmem %s0, %s186
      %p188 = scmp.lt.s32.totalorder %s14, 1
      %s189 = scalar_select %p188, %s14, 1
      %s190 = smul.addr %s189, 8
      %s191 = scalar_lea.vmem %s1, %s190
      %p192 = scmp.lt.s32.totalorder %s14, 1
      %s193 = scalar_select %p192, %s14, 1
      %s194 = smul.addr %s193, 8
      %s195 = scalar_lea.vmem %s2, %s194
      %p196 = scmp.lt.s32.totalorder %s14, 1
      %s197 = scalar_select %p196, %s14, 1
      %s198 = smul.addr %s197, 8
      %s199 = scalar_lea.vmem %s3, %s198
      %v200 = vld [vmem:[%s187] sm:$0xff]
      %v201 = vld [vmem:[%s191] sm:$0xff]
      %v202 = vld [vmem:[%s195] sm:$0xff]
      %vm203 = vcmask 64512
      %v205 = vsel %vm203, %v200, 0
      %v208 = vsel %vm203, %v201, 0
      %210 = vmatprep.subr.mxu0 0.0
      %211 = vmatpush1.xpose.msra.mxu0 0.0
      %212 = vmatprep.subr.mxu0 0.0
      %213 = vmatpush1.xpose.msra.mxu0 0.0
      %214 = vmatprep.subr.mxu0 0.0
      %215 = vmatpush1.xpose.msra.mxu0 0.0
      %216 = vmatprep.subr.mxu0 0.0
      %217 = vmatpush1.xpose.msra.mxu0 0.0
      %218 = vmatprep.subr.mxu0 0.0
      %219 = vmatpush1.xpose.msra.mxu0 0.0
      %220 = vmatprep.subr.mxu0 0.0
      %221 = vmatpush1.xpose.msra.mxu0 0.0
      %222 = vmatprep.subr.mxu0 0.0
      %223 = vmatpush1.xpose.msra.mxu0 0.0
      %224 = vmatprep.subr.mxu0 0.0
      %225 = vmatpush1.xpose.msra.mxu0 0.0
      %226 = vmatprep.subr.mxu0 0.0
      %227 = vmatpush1.xpose.msra.mxu0 0.0
      %228 = vmatprep.subr.mxu0 0.0
      %229 = vmatpush1.xpose.msra.mxu0 0.0
      %230 = vmatprep.subr.mxu0 0.0
      %231 = vmatpush1.xpose.msra.mxu0 0.0
      %232 = vmatprep.subr.mxu0 0.0
      %233 = vmatpush1.xpose.msra.mxu0 0.0
      %234 = vmatprep.subr.mxu0 0.0
      %235 = vmatpush1.xpose.msra.mxu0 0.0
      %236 = vmatprep.subr.mxu0 0.0
      %237 = vmatpush1.xpose.msra.mxu0 0.0
      %238 = vmatprep.subr.mxu0 0.0
      %239 = vmatpush1.xpose.msra.mxu0 0.0
      %240 = vmatprep.subr.mxu0 0.0
      %241 = vmatpush1.xpose.msra.mxu0 %v208
      %242 = vmatprep.subr.mxu0 0.0
      %243 = vmatpush2.xpose.msra.mxu0 0.0
      %244 = vmatprep.subr.mxu0 0.0
      %245 = vmatpush2.xpose.msra.mxu0 0.0
      %246 = vmatprep.subr.mxu0 0.0
      %247 = vmatpush2.xpose.msra.mxu0 0.0
      %248 = vmatprep.subr.mxu0 0.0
      %249 = vmatpush2.xpose.msra.mxu0 0.0
      %250 = vmatprep.subr.mxu0 0.0
      %251 = vmatpush2.xpose.msra.mxu0 0.0
      %252 = vmatprep.subr.mxu0 0.0
      %253 = vmatpush2.xpose.msra.mxu0 0.0
      %254 = vmatprep.subr.mxu0 0.0
      %255 = vmatpush2.xpose.msra.mxu0 0.0
      %256 = vmatprep.subr.mxu0 0.0
      %257 = vmatpush2.xpose.msra.mxu0 0.0
      %258 = vmatprep.subr.mxu0 0.0
      %259 = vmatpush2.xpose.msra.mxu0 0.0
      %260 = vmatprep.subr.mxu0 0.0
      %261 = vmatpush2.xpose.msra.mxu0 0.0
      %262 = vmatprep.subr.mxu0 0.0
      %263 = vmatpush2.xpose.msra.mxu0 0.0
      %264 = vmatprep.subr.mxu0 0.0
      %265 = vmatpush2.xpose.msra.mxu0 0.0
      %266 = vmatprep.subr.mxu0 0.0
      %267 = vmatpush2.xpose.msra.mxu0 0.0
      %268 = vmatprep.subr.mxu0 0.0
      %269 = vmatpush2.xpose.msra.mxu0 0.0
      %270 = vmatprep.subr.mxu0 0.0
      %271 = vmatpush2.xpose.msra.mxu0 0.0
      %272 = vmatprep.subr.mxu0 0.0
      %273 = vmatpush2.xpose.msra.mxu0 0.0
      %274 = vmatprep.mubr.f32.mxu0 0.0
      %275 = vmatmul.mubr.f32.gmra.mxu0 %v205
      %v276 = vpop.f32.mrf.mxu0
      %v277 = vadd.f32 0.0, %v276
      %v278 = vpop.f32.mrf.mxu0
      %279 = vdwg.mxu0
      %v280 = vmul.f32 %v277, 0.35355338
      %v281 = vsel %vm203, %v280, -inf
      %282 = vmax.xlane.f32.xlu0 %v281
      %v283 = vpop.xlane.xlu0 %282
      %v284 = vsub.f32 %v280, %v283
      %v285 = vmul.f32 %v284, 1.442695
      %v286 = vpow.pop %v285
      %v287 = vsel %vm203, %v286, 0.0
      %288 = vadd.xlane.f32.xlu0 %v287
      %v289 = vpop.xlane.xlu0 %288
      %v290 = vrcp.pop %v289
      %v291 = vmul.f32 %v286, %v290
      %v293 = vsel %vm203, %v291, 0
      %295 = vmatprep.subr.mxu0 0.0
      %296 = vmatpush1.msra.mxu0 0.0
      %297 = vmatprep.subr.mxu0 0.0
      %298 = vmatpush1.msra.mxu0 0.0
      %299 = vmatprep.subr.mxu0 0.0
      %300 = vmatpush1.msra.mxu0 0.0
      %301 = vmatprep.subr.mxu0 0.0
      %302 = vmatpush1.msra.mxu0 0.0
      %303 = vmatprep.subr.mxu0 0.0
      %304 = vmatpush1.msra.mxu0 0.0
      %305 = vmatprep.subr.mxu0 0.0
      %306 = vmatpush1.msra.mxu0 0.0
      %307 = vmatprep.subr.mxu0 0.0
      %308 = vmatpush1.msra.mxu0 0.0
      %309 = vmatprep.subr.mxu0 0.0
      %310 = vmatpush1.msra.mxu0 0.0
      %311 = vmatprep.subr.mxu0 0.0
      %312 = vmatpush1.msra.mxu0 0.0
      %313 = vmatprep.subr.mxu0 0.0
      %314 = vmatpush1.msra.mxu0 0.0
      %315 = vmatprep.subr.mxu0 0.0
      %316 = vmatpush1.msra.mxu0 0.0
      %317 = vmatprep.subr.mxu0 0.0
      %318 = vmatpush1.msra.mxu0 0.0
      %319 = vmatprep.subr.mxu0 0.0
      %320 = vmatpush1.msra.mxu0 0.0
      %321 = vmatprep.subr.mxu0 0.0
      %322 = vmatpush1.msra.mxu0 0.0
      %323 = vmatprep.subr.mxu0 0.0
      %324 = vmatpush1.msra.mxu0 0.0
      %325 = vmatprep.subr.mxu0 0.0
      %326 = vmatpush1.msra.mxu0 %v202
      %327 = vmatprep.subr.mxu0 0.0
      %328 = vmatpush2.msra.mxu0 0.0
      %329 = vmatprep.subr.mxu0 0.0
      %330 = vmatpush2.msra.mxu0 0.0
      %331 = vmatprep.subr.mxu0 0.0
      %332 = vmatpush2.msra.mxu0 0.0
      %333 = vmatprep.subr.mxu0 0.0
      %334 = vmatpush2.msra.mxu0 0.0
      %335 = vmatprep.subr.mxu0 0.0
      %336 = vmatpush2.msra.mxu0 0.0
      %337 = vmatprep.subr.mxu0 0.0
      %338 = vmatpush2.msra.mxu0 0.0
      %339 = vmatprep.subr.mxu0 0.0
      %340 = vmatpush2.msra.mxu0 0.0
      %341 = vmatprep.subr.mxu0 0.0
      %342 = vmatpush2.msra.mxu0 0.0
      %343 = vmatprep.subr.mxu0 0.0
      %344 = vmatpush2.msra.mxu0 0.0
      %345 = vmatprep.subr.mxu0 0.0
      %346 = vmatpush2.msra.mxu0 0.0
      %347 = vmatprep.subr.mxu0 0.0
      %348 = vmatpush2.msra.mxu0 0.0
      %349 = vmatprep.subr.mxu0 0.0
      %350 = vmatpush2.msra.mxu0 0.0
      %351 = vmatprep.subr.mxu0 0.0
      %352 = vmatpush2.msra.mxu0 0.0
      %353 = vmatprep.subr.mxu0 0.0
      %354 = vmatpush2.msra.mxu0 0.0
      %355 = vmatprep.subr.mxu0 0.0
      %356 = vmatpush2.msra.mxu0 0.0
      %357 = vmatprep.subr.mxu0 0.0
      %358 = vmatpush2.msra.mxu0 0.0
      %359 = vmatprep.mubr.f32.mxu0 0.0
      %360 = vmatmul.mubr.f32.gmra.mxu0 %v293
      %v361 = vpop.f32.mrf.mxu0
      %v362 = vadd.f32 0.0, %v361
      %v363 = vpop.f32.mrf.mxu0
      %364 = vdwg.mxu0
      %365 = vrot.lane.b32.xlu0 %v200, 120
      %v366 = vpop.permute.xlu0 %365
      %367 = vrot.lane.b32.xlu0 %v201, 120
      %v368 = vpop.permute.xlu0 %367
      %v369 = vsel %vm203, %v366, 0
      %v371 = vsel %vm203, %v368, 0
      %373 = vmatprep.subr.mxu0 0.0
      %374 = vmatpush1.xpose.msra.mxu0 0.0
      %375 = vmatprep.subr.mxu0 0.0
      %376 = vmatpush1.xpose.msra.mxu0 0.0
      %377 = vmatprep.subr.mxu0 0.0
      %378 = vmatpush1.xpose.msra.mxu0 0.0
      %379 = vmatprep.subr.mxu0 0.0
      %380 = vmatpush1.xpose.msra.mxu0 0.0
      %381 = vmatprep.subr.mxu0 0.0
      %382 = vmatpush1.xpose.msra.mxu0 0.0
      %383 = vmatprep.subr.mxu0 0.0
      %384 = vmatpush1.xpose.msra.mxu0 0.0
      %385 = vmatprep.subr.mxu0 0.0
      %386 = vmatpush1.xpose.msra.mxu0 0.0
      %387 = vmatprep.subr.mxu0 0.0
      %388 = vmatpush1.xpose.msra.mxu0 0.0
      %389 = vmatprep.subr.mxu0 0.0
      %390 = vmatpush1.xpose.msra.mxu0 0.0
      %391 = vmatprep.subr.mxu0 0.0
      %392 = vmatpush1.xpose.msra.mxu0 0.0
      %393 = vmatprep.subr.mxu0 0.0
      %394 = vmatpush1.xpose.msra.mxu0 0.0
      %395 = vmatprep.subr.mxu0 0.0
      %396 = vmatpush1.xpose.msra.mxu0 0.0
      %397 = vmatprep.subr.mxu0 0.0
      %398 = vmatpush1.xpose.msra.mxu0 0.0
      %399 = vmatprep.subr.mxu0 0.0
      %400 = vmatpush1.xpose.msra.mxu0 0.0
      %401 = vmatprep.subr.mxu0 0.0
      %402 = vmatpush1.xpose.msra.mxu0 0.0
      %403 = vmatprep.subr.mxu0 0.0
      %404 = vmatpush1.xpose.msra.mxu0 %v371
      %405 = vmatprep.subr.mxu0 0.0
      %406 = vmatpush2.xpose.msra.mxu0 0.0
      %407 = vmatprep.subr.mxu0 0.0
      %408 = vmatpush2.xpose.msra.mxu0 0.0
      %409 = vmatprep.subr.mxu0 0.0
      %410 = vmatpush2.xpose.msra.mxu0 0.0
      %411 = vmatprep.subr.mxu0 0.0
      %412 = vmatpush2.xpose.msra.mxu0 0.0
      %413 = vmatprep.subr.mxu0 0.0
      %414 = vmatpush2.xpose.msra.mxu0 0.0
      %415 = vmatprep.subr.mxu0 0.0
      %416 = vmatpush2.xpose.msra.mxu0 0.0
      %417 = vmatprep.subr.mxu0 0.0
      %418 = vmatpush2.xpose.msra.mxu0 0.0
      %419 = vmatprep.subr.mxu0 0.0
      %420 = vmatpush2.xpose.msra.mxu0 0.0
      %421 = vmatprep.subr.mxu0 0.0
      %422 = vmatpush2.xpose.msra.mxu0 0.0
      %423 = vmatprep.subr.mxu0 0.0
      %424 = vmatpush2.xpose.msra.mxu0 0.0
      %425 = vmatprep.subr.mxu0 0.0
      %426 = vmatpush2.xpose.msra.mxu0 0.0
      %427 = vmatprep.subr.mxu0 0.0
      %428 = vmatpush2.xpose.msra.mxu0 0.0
      %429 = vmatprep.subr.mxu0 0.0
      %430 = vmatpush2.xpose.msra.mxu0 0.0
      %431 = vmatprep.subr.mxu0 0.0
      %432 = vmatpush2.xpose.msra.mxu0 0.0
      %433 = vmatprep.subr.mxu0 0.0
      %434 = vmatpush2.xpose.msra.mxu0 0.0
      %435 = vmatprep.subr.mxu0 0.0
      %436 = vmatpush2.xpose.msra.mxu0 0.0
      %437 = vmatprep.mubr.f32.mxu0 0.0
      %438 = vmatmul.mubr.f32.gmra.mxu0 %v369
      %v439 = vpop.f32.mrf.mxu0
      %v440 = vadd.f32 0.0, %v439
      %v441 = vpop.f32.mrf.mxu0
      %442 = vdwg.mxu0
      %v443 = vmul.f32 %v440, 0.35355338
      %v444 = vsel %vm203, %v443, -inf
      %445 = vmax.xlane.f32.xlu0 %v444
      %v446 = vpop.xlane.xlu0 %445
      %v447 = vsub.f32 %v443, %v446
      %v448 = vmul.f32 %v447, 1.442695
      %v449 = vpow.pop %v448
      %v450 = vsel %vm203, %v449, 0.0
      %451 = vadd.xlane.f32.xlu0 %v450
      %v452 = vpop.xlane.xlu0 %451
      %v453 = vrcp.pop %v452
      %v454 = vmul.f32 %v449, %v453
      %456 = vrot.lane.b32.xlu0 %v202, 120
      %v457 = vpop.permute.xlu0 %456
      %v460 = vsel %vm203, %v454, 0
      %462 = vmatprep.subr.mxu0 0.0
      %463 = vmatpush1.msra.mxu0 0.0
      %464 = vmatprep.subr.mxu0 0.0
      %465 = vmatpush1.msra.mxu0 0.0
      %466 = vmatprep.subr.mxu0 0.0
      %467 = vmatpush1.msra.mxu0 0.0
      %468 = vmatprep.subr.mxu0 0.0
      %469 = vmatpush1.msra.mxu0 0.0
      %470 = vmatprep.subr.mxu0 0.0
      %471 = vmatpush1.msra.mxu0 0.0
      %472 = vmatprep.subr.mxu0 0.0
      %473 = vmatpush1.msra.mxu0 0.0
      %474 = vmatprep.subr.mxu0 0.0
      %475 = vmatpush1.msra.mxu0 0.0
      %476 = vmatprep.subr.mxu0 0.0
      %477 = vmatpush1.msra.mxu0 0.0
      %478 = vmatprep.subr.mxu0 0.0
      %479 = vmatpush1.msra.mxu0 0.0
      %480 = vmatprep.subr.mxu0 0.0
      %481 = vmatpush1.msra.mxu0 0.0
      %482 = vmatprep.subr.mxu0 0.0
      %483 = vmatpush1.msra.mxu0 0.0
      %484 = vmatprep.subr.mxu0 0.0
      %485 = vmatpush1.msra.mxu0 0.0
      %486 = vmatprep.subr.mxu0 0.0
      %487 = vmatpush1.msra.mxu0 0.0
      %488 = vmatprep.subr.mxu0 0.0
      %489 = vmatpush1.msra.mxu0 0.0
      %490 = vmatprep.subr.mxu0 0.0
      %491 = vmatpush1.msra.mxu0 0.0
      %492 = vmatprep.subr.mxu0 0.0
      %493 = vmatpush1.msra.mxu0 %v457
      %494 = vmatprep.subr.mxu0 0.0
      %495 = vmatpush2.msra.mxu0 0.0
      %496 = vmatprep.subr.mxu0 0.0
      %497 = vmatpush2.msra.mxu0 0.0
      %498 = vmatprep.subr.mxu0 0.0
      %499 = vmatpush2.msra.mxu0 0.0
      %500 = vmatprep.subr.mxu0 0.0
      %501 = vmatpush2.msra.mxu0 0.0
      %502 = vmatprep.subr.mxu0 0.0
      %503 = vmatpush2.msra.mxu0 0.0
      %504 = vmatprep.subr.mxu0 0.0
      %505 = vmatpush2.msra.mxu0 0.0
      %506 = vmatprep.subr.mxu0 0.0
      %507 = vmatpush2.msra.mxu0 0.0
      %508 = vmatprep.subr.mxu0 0.0
      %509 = vmatpush2.msra.mxu0 0.0
      %510 = vmatprep.subr.mxu0 0.0
      %511 = vmatpush2.msra.mxu0 0.0
      %512 = vmatprep.subr.mxu0 0.0
      %513 = vmatpush2.msra.mxu0 0.0
      %514 = vmatprep.subr.mxu0 0.0
      %515 = vmatpush2.msra.mxu0 0.0
      %516 = vmatprep.subr.mxu0 0.0
      %517 = vmatpush2.msra.mxu0 0.0
      %518 = vmatprep.subr.mxu0 0.0
      %519 = vmatpush2.msra.mxu0 0.0
      %520 = vmatprep.subr.mxu0 0.0
      %521 = vmatpush2.msra.mxu0 0.0
      %522 = vmatprep.subr.mxu0 0.0
      %523 = vmatpush2.msra.mxu0 0.0
      %524 = vmatprep.subr.mxu0 0.0
      %525 = vmatpush2.msra.mxu0 0.0
      %526 = vmatprep.mubr.f32.mxu0 0.0
      %527 = vmatmul.mubr.f32.gmra.mxu0 %v460
      %v528 = vpop.f32.mrf.mxu0
      %v529 = vadd.f32 0.0, %v528
      %v530 = vpop.f32.mrf.mxu0
      %531 = vdwg.mxu0
      %532 = vrot.lane.b32.xlu0 %v200, 112
      %v533 = vpop.permute.xlu0 %532
      %534 = vrot.lane.b32.xlu0 %v201, 112
      %v535 = vpop.permute.xlu0 %534
      %v536 = vsel %vm203, %v533, 0
      %v538 = vsel %vm203, %v535, 0
      %540 = vmatprep.subr.mxu0 0.0
      %541 = vmatpush1.xpose.msra.mxu0 0.0
      %542 = vmatprep.subr.mxu0 0.0
      %543 = vmatpush1.xpose.msra.mxu0 0.0
      %544 = vmatprep.subr.mxu0 0.0
      %545 = vmatpush1.xpose.msra.mxu0 0.0
      %546 = vmatprep.subr.mxu0 0.0
      %547 = vmatpush1.xpose.msra.mxu0 0.0
      %548 = vmatprep.subr.mxu0 0.0
      %549 = vmatpush1.xpose.msra.mxu0 0.0
      %550 = vmatprep.subr.mxu0 0.0
      %551 = vmatpush1.xpose.msra.mxu0 0.0
      %552 = vmatprep.subr.mxu0 0.0
      %553 = vmatpush1.xpose.msra.mxu0 0.0
      %554 = vmatprep.subr.mxu0 0.0
      %555 = vmatpush1.xpose.msra.mxu0 0.0
      %556 = vmatprep.subr.mxu0 0.0
      %557 = vmatpush1.xpose.msra.mxu0 0.0
      %558 = vmatprep.subr.mxu0 0.0
      %559 = vmatpush1.xpose.msra.mxu0 0.0
      %560 = vmatprep.subr.mxu0 0.0
      %561 = vmatpush1.xpose.msra.mxu0 0.0
      %562 = vmatprep.subr.mxu0 0.0
      %563 = vmatpush1.xpose.msra.mxu0 0.0
      %564 = vmatprep.subr.mxu0 0.0
      %565 = vmatpush1.xpose.msra.mxu0 0.0
      %566 = vmatprep.subr.mxu0 0.0
      %567 = vmatpush1.xpose.msra.mxu0 0.0
      %568 = vmatprep.subr.mxu0 0.0
      %569 = vmatpush1.xpose.msra.mxu0 0.0
      %570 = vmatprep.subr.mxu0 0.0
      %571 = vmatpush1.xpose.msra.mxu0 %v538
      %572 = vmatprep.subr.mxu0 0.0
      %573 = vmatpush2.xpose.msra.mxu0 0.0
      %574 = vmatprep.subr.mxu0 0.0
      %575 = vmatpush2.xpose.msra.mxu0 0.0
      %576 = vmatprep.subr.mxu0 0.0
      %577 = vmatpush2.xpose.msra.mxu0 0.0
      %578 = vmatprep.subr.mxu0 0.0
      %579 = vmatpush2.xpose.msra.mxu0 0.0
      %580 = vmatprep.subr.mxu0 0.0
      %581 = vmatpush2.xpose.msra.mxu0 0.0
      %582 = vmatprep.subr.mxu0 0.0
      %583 = vmatpush2.xpose.msra.mxu0 0.0
      %584 = vmatprep.subr.mxu0 0.0
      %585 = vmatpush2.xpose.msra.mxu0 0.0
      %586 = vmatprep.subr.mxu0 0.0
      %587 = vmatpush2.xpose.msra.mxu0 0.0
      %588 = vmatprep.subr.mxu0 0.0
      %589 = vmatpush2.xpose.msra.mxu0 0.0
      %590 = vmatprep.subr.mxu0 0.0
      %591 = vmatpush2.xpose.msra.mxu0 0.0
      %592 = vmatprep.subr.mxu0 0.0
      %593 = vmatpush2.xpose.msra.mxu0 0.0
      %594 = vmatprep.subr.mxu0 0.0
      %595 = vmatpush2.xpose.msra.mxu0 0.0
      %596 = vmatprep.subr.mxu0 0.0
      %597 = vmatpush2.xpose.msra.mxu0 0.0
      %598 = vmatprep.subr.mxu0 0.0
      %599 = vmatpush2.xpose.msra.mxu0 0.0
      %600 = vmatprep.subr.mxu0 0.0
      %601 = vmatpush2.xpose.msra.mxu0 0.0
      %602 = vmatprep.subr.mxu0 0.0
      %603 = vmatpush2.xpose.msra.mxu0 0.0
      %604 = vmatprep.mubr.f32.mxu0 0.0
      %605 = vmatmul.mubr.f32.gmra.mxu0 %v536
      %v606 = vpop.f32.mrf.mxu0
      %v607 = vadd.f32 0.0, %v606
      %v608 = vpop.f32.mrf.mxu0
      %609 = vdwg.mxu0
      %v610 = vmul.f32 %v607, 0.35355338
      %v611 = vsel %vm203, %v610, -inf
      %612 = vmax.xlane.f32.xlu0 %v611
      %v613 = vpop.xlane.xlu0 %612
      %v614 = vsub.f32 %v610, %v613
      %v615 = vmul.f32 %v614, 1.442695
      %v616 = vpow.pop %v615
      %v617 = vsel %vm203, %v616, 0.0
      %618 = vadd.xlane.f32.xlu0 %v617
      %v619 = vpop.xlane.xlu0 %618
      %v620 = vrcp.pop %v619
      %v621 = vmul.f32 %v616, %v620
      %622 = vrot.lane.b32.xlu0 %v202, 112
      %v623 = vpop.permute.xlu0 %622
      %v626 = vsel %vm203, %v621, 0
      %628 = vmatprep.subr.mxu0 0.0
      %629 = vmatpush1.msra.mxu0 0.0
      %630 = vmatprep.subr.mxu0 0.0
      %631 = vmatpush1.msra.mxu0 0.0
      %632 = vmatprep.subr.mxu0 0.0
      %633 = vmatpush1.msra.mxu0 0.0
      %634 = vmatprep.subr.mxu0 0.0
      %635 = vmatpush1.msra.mxu0 0.0
      %636 = vmatprep.subr.mxu0 0.0
      %637 = vmatpush1.msra.mxu0 0.0
      %638 = vmatprep.subr.mxu0 0.0
      %639 = vmatpush1.msra.mxu0 0.0
      %640 = vmatprep.subr.mxu0 0.0
      %641 = vmatpush1.msra.mxu0 0.0
      %642 = vmatprep.subr.mxu0 0.0
      %643 = vmatpush1.msra.mxu0 0.0
      %644 = vmatprep.subr.mxu0 0.0
      %645 = vmatpush1.msra.mxu0 0.0
      %646 = vmatprep.subr.mxu0 0.0
      %647 = vmatpush1.msra.mxu0 0.0
      %648 = vmatprep.subr.mxu0 0.0
      %649 = vmatpush1.msra.mxu0 0.0
      %650 = vmatprep.subr.mxu0 0.0
      %651 = vmatpush1.msra.mxu0 0.0
      %652 = vmatprep.subr.mxu0 0.0
      %653 = vmatpush1.msra.mxu0 0.0
      %654 = vmatprep.subr.mxu0 0.0
      %655 = vmatpush1.msra.mxu0 0.0
      %656 = vmatprep.subr.mxu0 0.0
      %657 = vmatpush1.msra.mxu0 0.0
      %658 = vmatprep.subr.mxu0 0.0
      %659 = vmatpush1.msra.mxu0 %v623
      %660 = vmatprep.subr.mxu0 0.0
      %661 = vmatpush2.msra.mxu0 0.0
      %662 = vmatprep.subr.mxu0 0.0
      %663 = vmatpush2.msra.mxu0 0.0
      %664 = vmatprep.subr.mxu0 0.0
      %665 = vmatpush2.msra.mxu0 0.0
      %666 = vmatprep.subr.mxu0 0.0
      %667 = vmatpush2.msra.mxu0 0.0
      %668 = vmatprep.subr.mxu0 0.0
      %669 = vmatpush2.msra.mxu0 0.0
      %670 = vmatprep.subr.mxu0 0.0
      %671 = vmatpush2.msra.mxu0 0.0
      %672 = vmatprep.subr.mxu0 0.0
      %673 = vmatpush2.msra.mxu0 0.0
      %674 = vmatprep.subr.mxu0 0.0
      %675 = vmatpush2.msra.mxu0 0.0
      %676 = vmatprep.subr.mxu0 0.0
      %677 = vmatpush2.msra.mxu0 0.0
      %678 = vmatprep.subr.mxu0 0.0
      %679 = vmatpush2.msra.mxu0 0.0
      %680 = vmatprep.subr.mxu0 0.0
      %681 = vmatpush2.msra.mxu0 0.0
      %682 = vmatprep.subr.mxu0 0.0
      %683 = vmatpush2.msra.mxu0 0.0
      %684 = vmatprep.subr.mxu0 0.0
      %685 = vmatpush2.msra.mxu0 0.0
      %686 = vmatprep.subr.mxu0 0.0
      %687 = vmatpush2.msra.mxu0 0.0
      %688 = vmatprep.subr.mxu0 0.0
      %689 = vmatpush2.msra.mxu0 0.0
      %690 = vmatprep.subr.mxu0 0.0
      %691 = vmatpush2.msra.mxu0 0.0
      %692 = vmatprep.mubr.f32.mxu0 0.0
      %693 = vmatmul.mubr.f32.gmra.mxu0 %v626
      %v694 = vpop.f32.mrf.mxu0
      %v695 = vadd.f32 0.0, %v694
      %v696 = vpop.f32.mrf.mxu0
      %697 = vdwg.mxu0
      %698 = vrot.lane.b32.xlu0 %v200, 104
      %v699 = vpop.permute.xlu0 %698
      %700 = vrot.lane.b32.xlu0 %v201, 104
      %v701 = vpop.permute.xlu0 %700
      %v702 = vsel %vm203, %v699, 0
      %v704 = vsel %vm203, %v701, 0
      %706 = vmatprep.subr.mxu0 0.0
      %707 = vmatpush1.xpose.msra.mxu0 0.0
      %708 = vmatprep.subr.mxu0 0.0
      %709 = vmatpush1.xpose.msra.mxu0 0.0
      %710 = vmatprep.subr.mxu0 0.0
      %711 = vmatpush1.xpose.msra.mxu0 0.0
      %712 = vmatprep.subr.mxu0 0.0
      %713 = vmatpush1.xpose.msra.mxu0 0.0
      %714 = vmatprep.subr.mxu0 0.0
      %715 = vmatpush1.xpose.msra.mxu0 0.0
      %716 = vmatprep.subr.mxu0 0.0
      %717 = vmatpush1.xpose.msra.mxu0 0.0
      %718 = vmatprep.subr.mxu0 0.0
      %719 = vmatpush1.xpose.msra.mxu0 0.0
      %720 = vmatprep.subr.mxu0 0.0
      %721 = vmatpush1.xpose.msra.mxu0 0.0
      %722 = vmatprep.subr.mxu0 0.0
      %723 = vmatpush1.xpose.msra.mxu0 0.0
      %724 = vmatprep.subr.mxu0 0.0
      %725 = vmatpush1.xpose.msra.mxu0 0.0
      %726 = vmatprep.subr.mxu0 0.0
      %727 = vmatpush1.xpose.msra.mxu0 0.0
      %728 = vmatprep.subr.mxu0 0.0
      %729 = vmatpush1.xpose.msra.mxu0 0.0
      %730 = vmatprep.subr.mxu0 0.0
      %731 = vmatpush1.xpose.msra.mxu0 0.0
      %732 = vmatprep.subr.mxu0 0.0
      %733 = vmatpush1.xpose.msra.mxu0 0.0
      %734 = vmatprep.subr.mxu0 0.0
      %735 = vmatpush1.xpose.msra.mxu0 0.0
      %736 = vmatprep.subr.mxu0 0.0
      %737 = vmatpush1.xpose.msra.mxu0 %v704
      %738 = vmatprep.subr.mxu0 0.0
      %739 = vmatpush2.xpose.msra.mxu0 0.0
      %740 = vmatprep.subr.mxu0 0.0
      %741 = vmatpush2.xpose.msra.mxu0 0.0
      %742 = vmatprep.subr.mxu0 0.0
      %743 = vmatpush2.xpose.msra.mxu0 0.0
      %744 = vmatprep.subr.mxu0 0.0
      %745 = vmatpush2.xpose.msra.mxu0 0.0
      %746 = vmatprep.subr.mxu0 0.0
      %747 = vmatpush2.xpose.msra.mxu0 0.0
      %748 = vmatprep.subr.mxu0 0.0
      %749 = vmatpush2.xpose.msra.mxu0 0.0
      %750 = vmatprep.subr.mxu0 0.0
      %751 = vmatpush2.xpose.msra.mxu0 0.0
      %752 = vmatprep.subr.mxu0 0.0
      %753 = vmatpush2.xpose.msra.mxu0 0.0
      %754 = vmatprep.subr.mxu0 0.0
      %755 = vmatpush2.xpose.msra.mxu0 0.0
      %756 = vmatprep.subr.mxu0 0.0
      %757 = vmatpush2.xpose.msra.mxu0 0.0
      %758 = vmatprep.subr.mxu0 0.0
      %759 = vmatpush2.xpose.msra.mxu0 0.0
      %760 = vmatprep.subr.mxu0 0.0
      %761 = vmatpush2.xpose.msra.mxu0 0.0
      %762 = vmatprep.subr.mxu0 0.0
      %763 = vmatpush2.xpose.msra.mxu0 0.0
      %764 = vmatprep.subr.mxu0 0.0
      %765 = vmatpush2.xpose.msra.mxu0 0.0
      %766 = vmatprep.subr.mxu0 0.0
      %767 = vmatpush2.xpose.msra.mxu0 0.0
      %768 = vmatprep.subr.mxu0 0.0
      %769 = vmatpush2.xpose.msra.mxu0 0.0
      %770 = vmatprep.mubr.f32.mxu0 0.0
      %771 = vmatmul.mubr.f32.gmra.mxu0 %v702
      %v772 = vpop.f32.mrf.mxu0
      %v773 = vadd.f32 0.0, %v772
      %v774 = vpop.f32.mrf.mxu0
      %775 = vdwg.mxu0
      %v776 = vmul.f32 %v773, 0.35355338
      %v777 = vsel %vm203, %v776, -inf
      %778 = vmax.xlane.f32.xlu0 %v777
      %v779 = vpop.xlane.xlu0 %778
      %v780 = vsub.f32 %v776, %v779
      %v781 = vmul.f32 %v780, 1.442695
      %v782 = vpow.pop %v781
      %v783 = vsel %vm203, %v782, 0.0
      %784 = vadd.xlane.f32.xlu0 %v783
      %v785 = vpop.xlane.xlu0 %784
      %v786 = vrcp.pop %v785
      %v787 = vmul.f32 %v782, %v786
      %788 = vrot.lane.b32.xlu0 %v202, 104
      %v789 = vpop.permute.xlu0 %788
      %v792 = vsel %vm203, %v787, 0
      %794 = vmatprep.subr.mxu0 0.0
      %795 = vmatpush1.msra.mxu0 0.0
      %796 = vmatprep.subr.mxu0 0.0
      %797 = vmatpush1.msra.mxu0 0.0
      %798 = vmatprep.subr.mxu0 0.0
      %799 = vmatpush1.msra.mxu0 0.0
      %800 = vmatprep.subr.mxu0 0.0
      %801 = vmatpush1.msra.mxu0 0.0
      %802 = vmatprep.subr.mxu0 0.0
      %803 = vmatpush1.msra.mxu0 0.0
      %804 = vmatprep.subr.mxu0 0.0
      %805 = vmatpush1.msra.mxu0 0.0
      %806 = vmatprep.subr.mxu0 0.0
      %807 = vmatpush1.msra.mxu0 0.0
      %808 = vmatprep.subr.mxu0 0.0
      %809 = vmatpush1.msra.mxu0 0.0
      %810 = vmatprep.subr.mxu0 0.0
      %811 = vmatpush1.msra.mxu0 0.0
      %812 = vmatprep.subr.mxu0 0.0
      %813 = vmatpush1.msra.mxu0 0.0
      %814 = vmatprep.subr.mxu0 0.0
      %815 = vmatpush1.msra.mxu0 0.0
      %816 = vmatprep.subr.mxu0 0.0
      %817 = vmatpush1.msra.mxu0 0.0
      %818 = vmatprep.subr.mxu0 0.0
      %819 = vmatpush1.msra.mxu0 0.0
      %820 = vmatprep.subr.mxu0 0.0
      %821 = vmatpush1.msra.mxu0 0.0
      %822 = vmatprep.subr.mxu0 0.0
      %823 = vmatpush1.msra.mxu0 0.0
      %824 = vmatprep.subr.mxu0 0.0
      %825 = vmatpush1.msra.mxu0 %v789
      %826 = vmatprep.subr.mxu0 0.0
      %827 = vmatpush2.msra.mxu0 0.0
      %828 = vmatprep.subr.mxu0 0.0
      %829 = vmatpush2.msra.mxu0 0.0
      %830 = vmatprep.subr.mxu0 0.0
      %831 = vmatpush2.msra.mxu0 0.0
      %832 = vmatprep.subr.mxu0 0.0
      %833 = vmatpush2.msra.mxu0 0.0
      %834 = vmatprep.subr.mxu0 0.0
      %835 = vmatpush2.msra.mxu0 0.0
      %836 = vmatprep.subr.mxu0 0.0
      %837 = vmatpush2.msra.mxu0 0.0
      %838 = vmatprep.subr.mxu0 0.0
      %839 = vmatpush2.msra.mxu0 0.0
      %840 = vmatprep.subr.mxu0 0.0
      %841 = vmatpush2.msra.mxu0 0.0
      %842 = vmatprep.subr.mxu0 0.0
      %843 = vmatpush2.msra.mxu0 0.0
      %844 = vmatprep.subr.mxu0 0.0
      %845 = vmatpush2.msra.mxu0 0.0
      %846 = vmatprep.subr.mxu0 0.0
      %847 = vmatpush2.msra.mxu0 0.0
      %848 = vmatprep.subr.mxu0 0.0
      %849 = vmatpush2.msra.mxu0 0.0
      %850 = vmatprep.subr.mxu0 0.0
      %851 = vmatpush2.msra.mxu0 0.0
      %852 = vmatprep.subr.mxu0 0.0
      %853 = vmatpush2.msra.mxu0 0.0
      %854 = vmatprep.subr.mxu0 0.0
      %855 = vmatpush2.msra.mxu0 0.0
      %856 = vmatprep.subr.mxu0 0.0
      %857 = vmatpush2.msra.mxu0 0.0
      %858 = vmatprep.mubr.f32.mxu0 0.0
      %859 = vmatmul.mubr.f32.gmra.mxu0 %v792
      %v860 = vpop.f32.mrf.mxu0
      %v861 = vadd.f32 0.0, %v860
      %v862 = vpop.f32.mrf.mxu0
      %863 = vdwg.mxu0
      %865 = vrot.lane.b32.xlu0 %v529, 8
      %v866 = vpop.permute.xlu0 %865
      %869 = vrot.lane.b32.xlu0 %v695, 16
      %v870 = vpop.permute.xlu0 %869
      %873 = vrot.lane.b32.xlu0 %v861, 24
      %v874 = vpop.permute.xlu0 %873
      %v876 = vsel %vm203, %v362, %v866
      %vm877 = vcmask 130048
      %v878 = vsel %vm877, %v876, %v870
      %vm879 = vcmask 195584
      %v880 = vsel %vm879, %v878, %v874
      %vm881 = vcmask 261120
      %882 = vst.msk [vmem:[%s199] sm:$0xff] %vm881, %v880
      %p883 = scmp.lt.s32.totalorder %s14, 1
      %s884 = scalar_select %p883, %s14, 1
      %s885 = smul.addr %s884, 8
      %s886 = scalar_lea.vmem %s3, %s885
      // Predicated region
      $region33: #{transformer_encoder_decoder.28} parent=31 // pred_check
        %p887 = pneg %p110
      $region34: #{transformer_encoder_decoder.28} parent=31 // pred_check_branch
        %889 = sbr.rel (%p887) target = $region36
      $region35: #{transformer_encoder_decoder.28} parent=31 // pred_region
        _
      $region36: #{transformer_encoder_decoder.28} parent=31 // pred_fallthru
        _
    $region32: #{transformer_encoder_decoder.28} parent=5 // pred_fallthru
      _
    %p890 = scmp.le.s32.totalorder 2, %s9
    // Predicated region
    $region37: #{transformer_encoder_decoder.28} parent=5 // pred_check
      %p891 = pneg %p890
    $region38: #{transformer_encoder_decoder.28} parent=5 // pred_check_branch
      %893 = sbr.rel (%p891) target = $region40
    $region39: #{transformer_encoder_decoder.28} parent=5 // pred_region
      %s894 = ssub.s32 %s9, 2
      // Predicated region
      $region41: #{transformer_encoder_decoder.28} parent=39 // pred_check
        %p895 = pneg %p116
      $region42: #{transformer_encoder_decoder.28} parent=39 // pred_check_branch
        %897 = sbr.rel (%p895) target = $region44
      $region43: #{transformer_encoder_decoder.28} parent=39 // pred_region
        %p898 = scmp.lt.s32.totalorder %s15, 1
        %s899 = scalar_select %p898, %s15, 1
        %s900 = smul.addr %s899, 8
        %s901 = scalar_lea.vmem %s3, %s900
      $region44: #{transformer_encoder_decoder.28} parent=39 // pred_fallthru
        _
    $region40: #{transformer_encoder_decoder.28} parent=5 // pred_fallthru
      _
  $region6: #{transformer_encoder_decoder.28} parent=0 // loop_footer
    %s13 = sadd.s32 1, %s9
  $region7: #{transformer_encoder_decoder.28} parent=0 // loop_footer_branch
    %8 = sbr.rel target = $region3
  $region8: #{transformer_encoder_decoder.28} parent=0 // loop_exit
    _

// kernel: transformer_encoder_decoder.35
$region0: #{transformer_encoder_decoder.35}
  #allocation0 [shape = 'u32[]', space=smem, size = 0x4, offset = 0x4, fixed_abs, tag = 'smem constant byte address 0x4 - core index']
  #allocation1 [shape = 'u32[144,128]{1,0:T(1,128)}', space=vmem, size = 0x12000, scoped, tag = 'internal scratch']
  %s0 = inlined_call_operand.vmem [shape: f32[16,32], index: 0, kind: input, shape index: {}]
  %s1 = inlined_call_operand.vmem [shape: f32[1,32], index: 1, kind: input, shape index: {}]
  %s2 = inlined_call_operand.vmem [shape: f32[1,32], index: 2, kind: input, shape index: {}]
  %s3 = inlined_call_operand.vmem [shape: f32[16,32], index: 3, kind: output, shape index: {}]
  %s4 = sld [smem:[#allocation0]]
  $region22: #{transformer_encoder_decoder.35} parent=0
    _
  %s6 = ssub.s32 1, %s4
  %s7 = scalar_select 0, %s6, %s4
  // Predicated region
  $region2: #{transformer_encoder_decoder.35} parent=0 // pred_check
    _
  $region3: #{transformer_encoder_decoder.35} parent=0 // pred_check_branch
    %9 = sbr.rel (0) target = $region5
  $region4: #{transformer_encoder_decoder.35} parent=0 // pred_region
    _
  $region5: #{transformer_encoder_decoder.35} parent=0 // pred_fallthru
    _
  // Predicated region
  $region6: #{transformer_encoder_decoder.35} parent=0 // pred_check
    _
  $region7: #{transformer_encoder_decoder.35} parent=0 // pred_check_branch
    %11 = sbr.rel (0) target = $region9
  $region8: #{transformer_encoder_decoder.35} parent=0 // pred_region
    _
  $region9: #{transformer_encoder_decoder.35} parent=0 // pred_fallthru
    _
  // Predicated region
  $region10: #{transformer_encoder_decoder.35} parent=0 // pred_check
    _
  $region11: #{transformer_encoder_decoder.35} parent=0 // pred_check_branch
    %13 = sbr.rel (0) target = $region13
  $region12: #{transformer_encoder_decoder.35} parent=0 // pred_region
    _
  $region13: #{transformer_encoder_decoder.35} parent=0 // pred_fallthru
    _
  %v14 = vld [vmem:[%s0] sm:$0xff]
  %v15 = vld [vmem:[%s0 + $0x8] sm:$0xff]
  %vm16 = vcmask 261120
  %v17 = vsel %vm16, %v14, 0.0
  %18 = vadd.xlane.f32.xlu0 %v17
  %v19 = vpop.xlane.xlu0 %18
  %v20 = vsel %vm16, %v15, 0.0
  %21 = vadd.xlane.f32.xlu0 %v20
  %v22 = vpop.xlane.xlu0 %21
  %v23 = vrcp.pop 32.0
  %v24 = vmul.f32 %v19, %v23
  %v25 = vmul.f32 %v22, %v23
  %v26 = vsub.f32 %v14, %v24
  %v27 = vsub.f32 %v15, %v25
  %v28 = vmul.f32 %v26, %v26
  %v29 = vmul.f32 %v27, %v27
  %v30 = vsel %vm16, %v28, 0.0
  %31 = vadd.xlane.f32.xlu0 %v30
  %v32 = vpop.xlane.xlu0 %31
  %v33 = vsel %vm16, %v29, 0.0
  %34 = vadd.xlane.f32.xlu0 %v33
  %v35 = vpop.xlane.xlu0 %34
  %v36 = vmul.f32 %v32, %v23
  %v37 = vmul.f32 %v35, %v23
  %v38 = vadd.f32 %v36, 1e-05
  %v39 = vadd.f32 %v37, 1e-05
  %v40 = vrsqrt.pop %v38
  %v41 = vrsqrt.pop %v39
  %v42 = vmul.f32 %v26, %v40
  %v43 = vmul.f32 %v27, %v41
  %v44 = vld [vmem:[%s1] sm:$0x1]
  %v46 = vlaneseq
  %v47 = vshrl.u32 %v46, 7
  %v48 = vsub.s32 0, %v47
  %v49 = vrot.slane %v44, %v48
  %v51 = vmul.f32 %v42, %v49
  %v52 = vmul.f32 %v43, %v49
  %v53 = vld [vmem:[%s2] sm:$0x1]
  %v55 = vlaneseq
  %v56 = vshrl.u32 %v55, 7
  %v57 = vsub.s32 0, %v56
  %v58 = vrot.slane %v53, %v57
  %v60 = vadd.f32 %v51, %v58
  %v61 = vadd.f32 %v52, %v58
  %62 = vst.msk [vmem:[%s3] sm:$0xff] %vm16, %v60
  %63 = vst.msk [vmem:[%s3 + $0x8] sm:$0xff] %vm16, %v61
  // Predicated region
  $region14: #{transformer_encoder_decoder.35} parent=0 // pred_check
    _
  $region15: #{transformer_encoder_decoder.35} parent=0 // pred_check_branch
    %65 = sbr.rel (0) target = $region17
  $region16: #{transformer_encoder_decoder.35} parent=0 // pred_region
    _
  $region17: #{transformer_encoder_decoder.35} parent=0 // pred_fallthru
    _
  // Predicated region
  $region18: #{transformer_encoder_decoder.35} parent=0 // pred_check
    _
  $region19: #{transformer_encoder_decoder.35} parent=0 // pred_check_branch
    %67 = sbr.rel (0) target = $region21
  $region20: #{transformer_encoder_decoder.35} parent=0 // pred_region
    _
  $region21: #{transformer_encoder_decoder.35} parent=0 // pred_fallthru
    _

// kernel: transformer_encoder_decoder.40
$region0: #{transformer_encoder_decoder.40}
  #allocation0 [shape = 'u32[]', space=smem, size = 0x4, offset = 0x4, fixed_abs, tag = 'smem constant byte address 0x4 - core index']
  #allocation1 [shape = 'u32[144,128]{1,0:T(1,128)}', space=vmem, size = 0x12000, scoped, tag = 'internal scratch']
  %s0 = inlined_call_operand.vmem [shape: f32[16,32], index: 0, kind: input, shape index: {}]
  %s1 = inlined_call_operand.vmem [shape: f32[32,64], index: 1, kind: input, shape index: {}]
  %s2 = inlined_call_operand.vmem [shape: f32[1,64], index: 2, kind: input, shape index: {}]
  %s3 = inlined_call_operand.vmem [shape: f32[16,32], index: 3, kind: output, shape index: {0}]
  %s4 = inlined_call_operand.vmem [shape: f32[16,32], index: 4, kind: output, shape index: {1}]
  %5 = xla_tuple %s3, %s4
  %s6 = sld [smem:[#allocation0]]
  $region30: #{transformer_encoder_decoder.40} parent=0
    _
  %s8 = ssub.s32 1, %s6
  %s9 = scalar_select 0, %s8, %s6
  // Predicated region
  $region2: #{transformer_encoder_decoder.40} parent=0 // pred_check
    _
  $region3: #{transformer_encoder_decoder.40} parent=0 // pred_check_branch
    %11 = sbr.rel (0) target = $region5
  $region4: #{transformer_encoder_decoder.40} parent=0 // pred_region
    _
  $region5: #{transformer_encoder_decoder.40} parent=0 // pred_fallthru
    _
  // Predicated region
  $region6: #{transformer_encoder_decoder.40} parent=0 // pred_check
    _
  $region7: #{transformer_encoder_decoder.40} parent=0 // pred_check_branch
    %13 = sbr.rel (0) target = $region9
  $region8: #{transformer_encoder_decoder.40} parent=0 // pred_region
    _
  $region9: #{transformer_encoder_decoder.40} parent=0 // pred_fallthru
    _
  // Predicated region
  $region10: #{transformer_encoder_decoder.40} parent=0 // pred_check
    _
  $region11: #{transformer_encoder_decoder.40} parent=0 // pred_check_branch
    %15 = sbr.rel (0) target = $region13
  $region12: #{transformer_encoder_decoder.40} parent=0 // pred_region
    _
  $region13: #{transformer_encoder_decoder.40} parent=0 // pred_fallthru
    _
  %v16 = vld [vmem:[%s0] sm:$0xff]
  %v17 = vld [vmem:[%s0 + $0x8] sm:$0xff]
  %v18 = vld [vmem:[%s1] sm:$0xff]
  %v19 = vld [vmem:[%s1 + $0x8] sm:$0xff]
  %v20 = vld [vmem:[%s1 + $0x10] sm:$0xff]
  %v21 = vld [vmem:[%s1 + $0x18] sm:$0xff]
  %v22 = vld [vmem:[%s2] sm:$0x1]
  %v24 = vlaneseq
  %v25 = vshrl.u32 %v24, 7
  %v26 = vsub.s32 0, %v25
  %v27 = vrot.slane %v22, %v26
  %vm29 = vcmask 261120
  %v31 = vsel %vm29, %v16, 0
  %v34 = vsel %vm29, %v17, 0
  %36 = vmatprep.subr.mxu0 0.0
  %37 = vmatpush1.msra.mxu0 0.0
  %38 = vmatprep.subr.mxu0 0.0
  %39 = vmatpush1.msra.mxu0 0.0
  %40 = vmatprep.subr.mxu0 0.0
  %41 = vmatpush1.msra.mxu0 0.0
  %42 = vmatprep.subr.mxu0 0.0
  %43 = vmatpush1.msra.mxu0 0.0
  %44 = vmatprep.subr.mxu0 0.0
  %45 = vmatpush1.msra.mxu0 0.0
  %46 = vmatprep.subr.mxu0 0.0
  %47 = vmatpush1.msra.mxu0 0.0
  %48 = vmatprep.subr.mxu0 0.0
  %49 = vmatpush1.msra.mxu0 0.0
  %50 = vmatprep.subr.mxu0 0.0
  %51 = vmatpush1.msra.mxu0 0.0
  %52 = vmatprep.subr.mxu0 0.0
  %53 = vmatpush1.msra.mxu0 0.0
  %54 = vmatprep.subr.mxu0 0.0
  %55 = vmatpush1.msra.mxu0 0.0
  %56 = vmatprep.subr.mxu0 0.0
  %57 = vmatpush1.msra.mxu0 0.0
  %58 = vmatprep.subr.mxu0 0.0
  %59 = vmatpush1.msra.mxu0 0.0
  %60 = vmatprep.subr.mxu0 0.0
  %61 = vmatpush1.msra.mxu0 %v21
  %62 = vmatprep.subr.mxu0 0.0
  %63 = vmatpush1.msra.mxu0 %v20
  %64 = vmatprep.subr.mxu0 0.0
  %65 = vmatpush1.msra.mxu0 %v19
  %66 = vmatprep.subr.mxu0 0.0
  %67 = vmatpush1.msra.mxu0 %v18
  %68 = vmatprep.subr.mxu0 0.0
  %69 = vmatpush2.msra.mxu0 0.0
  %70 = vmatprep.subr.mxu0 0.0
  %71 = vmatpush2.msra.mxu0 0.0
  %72 = vmatprep.subr.mxu0 0.0
  %73 = vmatpush2.msra.mxu0 0.0
  %74 = vmatprep.subr.mxu0 0.0
  %75 = vmatpush2.msra.mxu0 0.0
  %76 = vmatprep.subr.mxu0 0.0
  %77 = vmatpush2.msra.mxu0 0.0
  %78 = vmatprep.subr.mxu0 0.0
  %79 = vmatpush2.msra.mxu0 0.0
  %80 = vmatprep.subr.mxu0 0.0
  %81 = vmatpush2.msra.mxu0 0.0
  %82 = vmatprep.subr.mxu0 0.0
  %83 = vmatpush2.msra.mxu0 0.0
  %84 = vmatprep.subr.mxu0 0.0
  %85 = vmatpush2.msra.mxu0 0.0
  %86 = vmatprep.subr.mxu0 0.0
  %87 = vmatpush2.msra.mxu0 0.0
  %88 = vmatprep.subr.mxu0 0.0
  %89 = vmatpush2.msra.mxu0 0.0
  %90 = vmatprep.subr.mxu0 0.0
  %91 = vmatpush2.msra.mxu0 0.0
  %92 = vmatprep.subr.mxu0 0.0
  %93 = vmatpush2.msra.mxu0 0.0
  %94 = vmatprep.subr.mxu0 0.0
  %95 = vmatpush2.msra.mxu0 0.0
  %96 = vmatprep.subr.mxu0 0.0
  %97 = vmatpush2.msra.mxu0 0.0
  %98 = vmatprep.subr.mxu0 0.0
  %99 = vmatpush2.msra.mxu0 0.0
  %100 = vmatprep.mubr.f32.mxu0 0.0
  %101 = vmatmul.mubr.f32.gmra.mxu0 %v31
  %v102 = vpop.f32.mrf.mxu0
  %v103 = vadd.f32 %v27, %v102
  %v104 = vpop.f32.mrf.mxu0
  %105 = vmatprep.mubr.f32.mxu0 0.0
  %106 = vmatmul.mubr.f32.gmra.mxu0 %v34
  %v107 = vpop.f32.mrf.mxu0
  %v108 = vadd.f32 %v27, %v107
  %v109 = vpop.f32.mrf.mxu0
  %110 = vdwg.mxu0
  %111 = vst.msk [vmem:[%s3] sm:$0xff] %vm29, %v103
  %112 = vst.msk [vmem:[%s3 + $0x8] sm:$0xff] %vm29, %v108
  %115 = vrot.lane.b32.xlu0 %v103, 96
  %v116 = vpop.permute.xlu0 %115
  %117 = vrot.lane.b32.xlu0 %v108, 96
  %v118 = vpop.permute.xlu0 %117
  %121 = vst.msk [vmem:[%s4] sm:$0xff] %vm29, %v116
  %122 = vst.msk [vmem:[%s4 + $0x8] sm:$0xff] %vm29, %v118
  // Predicated region
  $region14: #{transformer_encoder_decoder.40} parent=0 // pred_check
    _
  $region15: #{transformer_encoder_decoder.40} parent=0 // pred_check_branch
    %124 = sbr.rel (0) target = $region17
  $region16: #{transformer_encoder_decoder.40} parent=0 // pred_region
    _
  $region17: #{transformer_encoder_decoder.40} parent=0 // pred_fallthru
    _
  // Predicated region
  $region18: #{transformer_encoder_decoder.40} parent=0 // pred_check
    _
  $region19: #{transformer_encoder_decoder.40} parent=0 // pred_check_branch
    %126 = sbr.rel (0) target = $region21
  $region20: #{transformer_encoder_decoder.40} parent=0 // pred_region
    _
  $region21: #{transformer_encoder_decoder.40} parent=0 // pred_fallthru
    _
  // Predicated region
  $region22: #{transformer_encoder_decoder.40} parent=0 // pred_check
    _
  $region23: #{transformer_encoder_decoder.40} parent=0 // pred_check_branch
    %128 = sbr.rel (0) target = $region25
  $region24: #{transformer_encoder_decoder.40} parent=0 // pred_region
    _
  $region25: #{transformer_encoder_decoder.40} parent=0 // pred_fallthru
    _
  // Predicated region
  $region26: #{transformer_encoder_decoder.40} parent=0 // pred_check
    _
  $region27: #{transformer_encoder_decoder.40} parent=0 // pred_check_branch
    %130 = sbr.rel (0) target = $region29
  $region28: #{transformer_encoder_decoder.40} parent=0 // pred_region
    _
  $region29: #{transformer_encoder_decoder.40} parent=0 // pred_fallthru
    _

// kernel: transformer_encoder_decoder.39
$region0: #{transformer_encoder_decoder.39}
  #allocation0 [shape = 'u32[]', space=smem, size = 0x4, offset = 0x4, fixed_abs, tag = 'smem constant byte address 0x4 - core index']
  #allocation1 [shape = 'u32[144,128]{1,0:T(1,128)}', space=vmem, size = 0x12000, scoped, tag = 'internal scratch']
  %s0 = inlined_call_operand.vmem [shape: f32[16,32], index: 0, kind: input, shape index: {}]
  %s1 = inlined_call_operand.vmem [shape: f32[32,32], index: 1, kind: input, shape index: {}]
  %s2 = inlined_call_operand.vmem [shape: f32[1,32], index: 2, kind: input, shape index: {}]
  %s3 = inlined_call_operand.vmem [shape: f32[16,32], index: 3, kind: output, shape index: {}]
  %s4 = sld [smem:[#allocation0]]
  $region22: #{transformer_encoder_decoder.39} parent=0
    _
  %s6 = ssub.s32 1, %s4
  %s7 = scalar_select 0, %s6, %s4
  // Predicated region
  $region2: #{transformer_encoder_decoder.39} parent=0 // pred_check
    _
  $region3: #{transformer_encoder_decoder.39} parent=0 // pred_check_branch
    %9 = sbr.rel (0) target = $region5
  $region4: #{transformer_encoder_decoder.39} parent=0 // pred_region
    _
  $region5: #{transformer_encoder_decoder.39} parent=0 // pred_fallthru
    _
  // Predicated region
  $region6: #{transformer_encoder_decoder.39} parent=0 // pred_check
    _
  $region7: #{transformer_encoder_decoder.39} parent=0 // pred_check_branch
    %11 = sbr.rel (0) target = $region9
  $region8: #{transformer_encoder_decoder.39} parent=0 // pred_region
    _
  $region9: #{transformer_encoder_decoder.39} parent=0 // pred_fallthru
    _
  // Predicated region
  $region10: #{transformer_encoder_decoder.39} parent=0 // pred_check
    _
  $region11: #{transformer_encoder_decoder.39} parent=0 // pred_check_branch
    %13 = sbr.rel (0) target = $region13
  $region12: #{transformer_encoder_decoder.39} parent=0 // pred_region
    _
  $region13: #{transformer_encoder_decoder.39} parent=0 // pred_fallthru
    _
  %v14 = vld [vmem:[%s0] sm:$0xff]
  %v15 = vld [vmem:[%s0 + $0x8] sm:$0xff]
  %v16 = vld [vmem:[%s1] sm:$0xff]
  %v17 = vld [vmem:[%s1 + $0x8] sm:$0xff]
  %v18 = vld [vmem:[%s1 + $0x10] sm:$0xff]
  %v19 = vld [vmem:[%s1 + $0x18] sm:$0xff]
  %v20 = vld [vmem:[%s2] sm:$0x1]
  %v22 = vlaneseq
  %v23 = vshrl.u32 %v22, 7
  %v24 = vsub.s32 0, %v23
  %v25 = vrot.slane %v20, %v24
  %vm27 = vcmask 261120
  %v29 = vsel %vm27, %v14, 0
  %v32 = vsel %vm27, %v15, 0
  %34 = vmatprep.subr.mxu0 0.0
  %35 = vmatpush1.msra.mxu0 0.0
  %36 = vmatprep.subr.mxu0 0.0
  %37 = vmatpush1.msra.mxu0 0.0
  %38 = vmatprep.subr.mxu0 0.0
  %39 = vmatpush1.msra.mxu0 0.0
  %40 = vmatprep.subr.mxu0 0.0
  %41 = vmatpush1.msra.mxu0 0.0
  %42 = vmatprep.subr.mxu0 0.0
  %43 = vmatpush1.msra.mxu0 0.0
  %44 = vmatprep.subr.mxu0 0.0
  %45 = vmatpush1.msra.mxu0 0.0
  %46 = vmatprep.subr.mxu0 0.0
  %47 = vmatpush1.msra.mxu0 0.0
  %48 = vmatprep.subr.mxu0 0.0
  %49 = vmatpush1.msra.mxu0 0.0
  %50 = vmatprep.subr.mxu0 0.0
  %51 = vmatpush1.msra.mxu0 0.0
  %52 = vmatprep.subr.mxu0 0.0
  %53 = vmatpush1.msra.mxu0 0.0
  %54 = vmatprep.subr.mxu0 0.0
  %55 = vmatpush1.msra.mxu0 0.0
  %56 = vmatprep.subr.mxu0 0.0
  %57 = vmatpush1.msra.mxu0 0.0
  %58 = vmatprep.subr.mxu0 0.0
  %59 = vmatpush1.msra.mxu0 %v19
  %60 = vmatprep.subr.mxu0 0.0
  %61 = vmatpush1.msra.mxu0 %v18
  %62 = vmatprep.subr.mxu0 0.0
  %63 = vmatpush1.msra.mxu0 %v17
  %64 = vmatprep.subr.mxu0 0.0
  %65 = vmatpush1.msra.mxu0 %v16
  %66 = vmatprep.subr.mxu0 0.0
  %67 = vmatpush2.msra.mxu0 0.0
  %68 = vmatprep.subr.mxu0 0.0
  %69 = vmatpush2.msra.mxu0 0.0
  %70 = vmatprep.subr.mxu0 0.0
  %71 = vmatpush2.msra.mxu0 0.0
  %72 = vmatprep.subr.mxu0 0.0
  %73 = vmatpush2.msra.mxu0 0.0
  %74 = vmatprep.subr.mxu0 0.0
  %75 = vmatpush2.msra.mxu0 0.0
  %76 = vmatprep.subr.mxu0 0.0
  %77 = vmatpush2.msra.mxu0 0.0
  %78 = vmatprep.subr.mxu0 0.0
  %79 = vmatpush2.msra.mxu0 0.0
  %80 = vmatprep.subr.mxu0 0.0
  %81 = vmatpush2.msra.mxu0 0.0
  %82 = vmatprep.subr.mxu0 0.0
  %83 = vmatpush2.msra.mxu0 0.0
  %84 = vmatprep.subr.mxu0 0.0
  %85 = vmatpush2.msra.mxu0 0.0
  %86 = vmatprep.subr.mxu0 0.0
  %87 = vmatpush2.msra.mxu0 0.0
  %88 = vmatprep.subr.mxu0 0.0
  %89 = vmatpush2.msra.mxu0 0.0
  %90 = vmatprep.subr.mxu0 0.0
  %91 = vmatpush2.msra.mxu0 0.0
  %92 = vmatprep.subr.mxu0 0.0
  %93 = vmatpush2.msra.mxu0 0.0
  %94 = vmatprep.subr.mxu0 0.0
  %95 = vmatpush2.msra.mxu0 0.0
  %96 = vmatprep.subr.mxu0 0.0
  %97 = vmatpush2.msra.mxu0 0.0
  %98 = vmatprep.mubr.f32.mxu0 0.0
  %99 = vmatmul.mubr.f32.gmra.mxu0 %v29
  %v100 = vpop.f32.mrf.mxu0
  %v101 = vadd.f32 %v25, %v100
  %v102 = vpop.f32.mrf.mxu0
  %103 = vmatprep.mubr.f32.mxu0 0.0
  %104 = vmatmul.mubr.f32.gmra.mxu0 %v32
  %v105 = vpop.f32.mrf.mxu0
  %v106 = vadd.f32 %v25, %v105
  %v107 = vpop.f32.mrf.mxu0
  %108 = vdwg.mxu0
  %109 = vst.msk [vmem:[%s3] sm:$0xff] %vm27, %v101
  %110 = vst.msk [vmem:[%s3 + $0x8] sm:$0xff] %vm27, %v106
  // Predicated region
  $region14: #{transformer_encoder_decoder.39} parent=0 // pred_check
    _
  $region15: #{transformer_encoder_decoder.39} parent=0 // pred_check_branch
    %112 = sbr.rel (0) target = $region17
  $region16: #{transformer_encoder_decoder.39} parent=0 // pred_region
    _
  $region17: #{transformer_encoder_decoder.39} parent=0 // pred_fallthru
    _
  // Predicated region
  $region18: #{transformer_encoder_decoder.39} parent=0 // pred_check
    _
  $region19: #{transformer_encoder_decoder.39} parent=0 // pred_check_branch
    %114 = sbr.rel (0) target = $region21
  $region20: #{transformer_encoder_decoder.39} parent=0 // pred_region
    _
  $region21: #{transformer_encoder_decoder.39} parent=0 // pred_fallthru
    _

// kernel: transformer_encoder_decoder.53
$region0: #{transformer_encoder_decoder.53}
  #allocation0 [shape = 'u32[]', space=smem, size = 0x4, offset = 0x4, fixed_abs, tag = 'smem constant byte address 0x4 - core index']
  #allocation1 [shape = 'u32[144,128]{1,0:T(1,128)}', space=vmem, size = 0x12000, scoped, tag = 'internal scratch']
  %s0 = inlined_call_operand.vmem [shape: f32[16,32], index: 0, kind: input, shape index: {}]
  %s1 = inlined_call_operand.vmem [shape: f32[32,50], index: 1, kind: input, shape index: {}]
  %s2 = inlined_call_operand.vmem [shape: f32[1,50], index: 2, kind: input, shape index: {}]
  %s3 = inlined_call_operand.hbm [shape: f32[16,50], index: 3, kind: output, shape index: {}]
  %s4 = sld [smem:[#allocation0]]
  $region22: #{transformer_encoder_decoder.53} parent=0
    _
  %s6 = ssub.s32 1, %s4
  %s7 = scalar_select 0, %s6, %s4
  $region1: #{transformer_encoder_decoder.53} parent=0
    #allocation2 [shape = 'u8[8192]{0}', space=vmem, size = 0x2000, scoped, tag = 'output window, operand 0, single buffered']
    #allocation3 [shape = 's32[1]{0}', space=sflag, size = 0x4, scoped, tag = 'scoped memory for transformer_encoder_decoder.53']
    %8 = vsyncpa [#allocation3], 0
    // Predicated region
    $region2: #{transformer_encoder_decoder.53} parent=1 // pred_check
      _
    $region3: #{transformer_encoder_decoder.53} parent=1 // pred_check_branch
      %10 = sbr.rel (0) target = $region5
    $region4: #{transformer_encoder_decoder.53} parent=1 // pred_region
      _
    $region5: #{transformer_encoder_decoder.53} parent=1 // pred_fallthru
      _
    // Predicated region
    $region6: #{transformer_encoder_decoder.53} parent=1 // pred_check
      _
    $region7: #{transformer_encoder_decoder.53} parent=1 // pred_check_branch
      %12 = sbr.rel (0) target = $region9
    $region8: #{transformer_encoder_decoder.53} parent=1 // pred_region
      _
    $region9: #{transformer_encoder_decoder.53} parent=1 // pred_fallthru
      _
    // Predicated region
    $region10: #{transformer_encoder_decoder.53} parent=1 // pred_check
      _
    $region11: #{transformer_encoder_decoder.53} parent=1 // pred_check_branch
      %14 = sbr.rel (0) target = $region13
    $region12: #{transformer_encoder_decoder.53} parent=1 // pred_region
      _
    $region13: #{transformer_encoder_decoder.53} parent=1 // pred_fallthru
      _
    %v15 = vld [vmem:[%s0] sm:$0xff]
    %v16 = vld [vmem:[%s0 + $0x8] sm:$0xff]
    %v17 = vld [vmem:[%s1] sm:$0xff]
    %v18 = vld [vmem:[%s1 + $0x8] sm:$0xff]
    %v19 = vld [vmem:[%s1 + $0x10] sm:$0xff]
    %v20 = vld [vmem:[%s1 + $0x18] sm:$0xff]
    %v21 = vld [vmem:[%s2] sm:$0x1]
    %v23 = vlaneseq
    %v24 = vshrl.u32 %v23, 7
    %v25 = vsub.s32 0, %v24
    %v26 = vrot.slane %v21, %v25
    %vm28 = vcmask 261120
    %v30 = vsel %vm28, %v15, 0
    %v33 = vsel %vm28, %v16, 0
    %35 = vmatprep.subr.mxu0 0.0
    %36 = vmatpush1.msra.mxu0 0.0
    %37 = vmatprep.subr.mxu0 0.0
    %38 = vmatpush1.msra.mxu0 0.0
    %39 = vmatprep.subr.mxu0 0.0
    %40 = vmatpush1.msra.mxu0 0.0
    %41 = vmatprep.subr.mxu0 0.0
    %42 = vmatpush1.msra.mxu0 0.0
    %43 = vmatprep.subr.mxu0 0.0
    %44 = vmatpush1.msra.mxu0 0.0
    %45 = vmatprep.subr.mxu0 0.0
    %46 = vmatpush1.msra.mxu0 0.0
    %47 = vmatprep.subr.mxu0 0.0
    %48 = vmatpush1.msra.mxu0 0.0
    %49 = vmatprep.subr.mxu0 0.0
    %50 = vmatpush1.msra.mxu0 0.0
    %51 = vmatprep.subr.mxu0 0.0
    %52 = vmatpush1.msra.mxu0 0.0
    %53 = vmatprep.subr.mxu0 0.0
    %54 = vmatpush1.msra.mxu0 0.0
    %55 = vmatprep.subr.mxu0 0.0
    %56 = vmatpush1.msra.mxu0 0.0
    %57 = vmatprep.subr.mxu0 0.0
    %58 = vmatpush1.msra.mxu0 0.0
    %59 = vmatprep.subr.mxu0 0.0
    %60 = vmatpush1.msra.mxu0 %v20
    %61 = vmatprep.subr.mxu0 0.0
    %62 = vmatpush1.msra.mxu0 %v19
    %63 = vmatprep.subr.mxu0 0.0
    %64 = vmatpush1.msra.mxu0 %v18
    %65 = vmatprep.subr.mxu0 0.0
    %66 = vmatpush1.msra.mxu0 %v17
    %67 = vmatprep.subr.mxu0 0.0
    %68 = vmatpush2.msra.mxu0 0.0
    %69 = vmatprep.subr.mxu0 0.0
    %70 = vmatpush2.msra.mxu0 0.0
    %71 = vmatprep.subr.mxu0 0.0
    %72 = vmatpush2.msra.mxu0 0.0
    %73 = vmatprep.subr.mxu0 0.0
    %74 = vmatpush2.msra.mxu0 0.0
    %75 = vmatprep.subr.mxu0 0.0
    %76 = vmatpush2.msra.mxu0 0.0
    %77 = vmatprep.subr.mxu0 0.0
    %78 = vmatpush2.msra.mxu0 0.0
    %79 = vmatprep.subr.mxu0 0.0
    %80 = vmatpush2.msra.mxu0 0.0
    %81 = vmatprep.subr.mxu0 0.0
    %82 = vmatpush2.msra.mxu0 0.0
    %83 = vmatprep.subr.mxu0 0.0
    %84 = vmatpush2.msra.mxu0 0.0
    %85 = vmatprep.subr.mxu0 0.0
    %86 = vmatpush2.msra.mxu0 0.0
    %87 = vmatprep.subr.mxu0 0.0
    %88 = vmatpush2.msra.mxu0 0.0
    %89 = vmatprep.subr.mxu0 0.0
    %90 = vmatpush2.msra.mxu0 0.0
    %91 = vmatprep.subr.mxu0 0.0
    %92 = vmatpush2.msra.mxu0 0.0
    %93 = vmatprep.subr.mxu0 0.0
    %94 = vmatpush2.msra.mxu0 0.0
    %95 = vmatprep.subr.mxu0 0.0
    %96 = vmatpush2.msra.mxu0 0.0
    %97 = vmatprep.subr.mxu0 0.0
    %98 = vmatpush2.msra.mxu0 0.0
    %99 = vmatprep.mubr.f32.mxu0 0.0
    %100 = vmatmul.mubr.f32.gmra.mxu0 %v30
    %v101 = vpop.f32.mrf.mxu0
    %v102 = vadd.f32 %v26, %v101
    %v103 = vpop.f32.mrf.mxu0
    %104 = vmatprep.mubr.f32.mxu0 0.0
    %105 = vmatmul.mubr.f32.gmra.mxu0 %v33
    %v106 = vpop.f32.mrf.mxu0
    %v107 = vadd.f32 %v26, %v106
    %v108 = vpop.f32.mrf.mxu0
    %109 = vdwg.mxu0
    %vm110 = vcmask 408576
    %111 = vst.msk [vmem:[#allocation2] sm:$0xff] %vm110, %v102
    %112 = vst.msk [vmem:[#allocation2 + $0x8] sm:$0xff] %vm110, %v107
    // Predicated region
    $region14: #{transformer_encoder_decoder.53} parent=1 // pred_check
      _
    $region15: #{transformer_encoder_decoder.53} parent=1 // pred_check_branch
      %114 = sbr.rel (0) target = $region17
    $region16: #{transformer_encoder_decoder.53} parent=1 // pred_region
      %s116 = ssub.s32 256, 256
      %117 = vsyncadd [#allocation3], %s116
      %s118 = sshll.u32 [#allocation2], 4
      %s119 = int_to_ptr.vmem [resolvable:$true] %s118
      %124 = dma.vmem_to_hbm [thread:$0]  %s119, 256, %s3, [#allocation3], 128, 128, 8
    $region17: #{transformer_encoder_decoder.53} parent=1 // pred_fallthru
      _
    // Predicated region
    $region18: #{transformer_encoder_decoder.53} parent=1 // pred_check
      _
    $region19: #{transformer_encoder_decoder.53} parent=1 // pred_check_branch
      %126 = sbr.rel (0) target = $region21
    $region20: #{transformer_encoder_decoder.53} parent=1 // pred_region
      %127 = dma.done [#allocation3], 256
    $region21: #{transformer_encoder_decoder.53} parent=1 // pred_fallthru
      _
    %128 = vsyncpa [#allocation3], 1

</llo_original>
